<compile_context>
chip_gen: v7x
topology: tpu7x:2x2x1
jax: 0.10.0
libtpu: 0.0.40
codegen_flags: <defaults>
</compile_context>

<pallas_src>
import functools

import jax
import jax.numpy as jnp
from jax import lax
from jax.experimental import pallas as pl
from jax.experimental.pallas import tpu as pltpu


# ----------------------------- Pallas kernel -------------------------------

def _bilstm_kernel(x_ref,
                   w_ih0f_ref, w_hh0f_ref, b0f_ref,
                   w_ih0b_ref, w_hh0b_ref, b0b_ref,
                   w_ih1f_ref, w_hh1f_ref, b1f_ref,
                   w_ih1b_ref, b1b_ref,
                   w_fc_ref, b_fc_ref,
                   out_ref,
                   pref_ref, preb_ref, h0f_ref, h0b_ref, pre1_ref,
                   *, seq_len, hidden):
    T, H = seq_len, hidden
    f32 = jnp.float32

    x = x_ref[...].astype(f32)                      # (T, Bm, D)  time-major block
    Bm, D = x.shape[1], x.shape[2]
    x2 = x.reshape(T * Bm, D)                       # rows ordered (t, b); Bm % 8 == 0

    def gates_to_hc(gates, c):
        i = jax.nn.sigmoid(gates[:, 0 * H:1 * H])
        f = jax.nn.sigmoid(gates[:, 1 * H:2 * H])
        g = jnp.tanh(gates[:, 2 * H:3 * H])
        o = jax.nn.sigmoid(gates[:, 3 * H:4 * H])
        c_new = f * c + i * g
        return o * jnp.tanh(c_new), c_new

    # ---- hoisted layer-0 input projections: one big MXU matmul per direction --
    pref = jnp.dot(x2, w_ih0f_ref[...], preferred_element_type=f32) + b0f_ref[...]
    preb = jnp.dot(x2, w_ih0b_ref[...], preferred_element_type=f32) + b0b_ref[...]
    pref_ref[...] = pref.reshape(T, Bm, 4 * H)
    preb_ref[...] = preb.reshape(T, Bm, 4 * H)

    zeros = jnp.zeros((Bm, H), f32)
    w_hh0f = w_hh0f_ref[...]
    w_hh0b = w_hh0b_ref[...]
    unroll = min(T, 8)

    # ---- layer 0: both directions advance in the same step (T serial steps) ---
    def step0(s, carry):
        h_f, c_f, h_b, c_b = carry
        sb = T - 1 - s
        g_f = jnp.dot(h_f, w_hh0f, preferred_element_type=f32) + pref_ref[s]
        g_b = jnp.dot(h_b, w_hh0b, preferred_element_type=f32) + preb_ref[sb]
        h_f, c_f = gates_to_hc(g_f, c_f)
        h_b, c_b = gates_to_hc(g_b, c_b)
        h0f_ref[s] = h_f                            # forward hidden at time s
        h0b_ref[sb] = h_b                           # backward hidden at time T-1-s
        return h_f, c_f, h_b, c_b

    last0 = lax.fori_loop(0, T, step0, (zeros, zeros, zeros, zeros), unroll=unroll)
    h0f_last = last0[0]                             # == h0f_ref[T-1]

    # ---- layer-1 input projection, batched over all timesteps -----------------
    # layer-1 input at time t is [h0f[t] | h0b[t]]; splitting W_ih1 row-wise
    # avoids any concatenate inside or outside the loop.
    w_ih1f = w_ih1f_ref[...]                        # (2H, 4H)
    h0f_flat = h0f_ref[...].reshape(T * Bm, H)
    h0b_flat = h0b_ref[...].reshape(T * Bm, H)
    pre1 = (jnp.dot(h0f_flat, w_ih1f[0:H, :], preferred_element_type=f32)
            + jnp.dot(h0b_flat, w_ih1f[H:2 * H, :], preferred_element_type=f32)
            + b1f_ref[...])
    pre1_ref[...] = pre1.reshape(T, Bm, 4 * H)

    # ---- layer-1 forward recurrence (only the last hidden is consumed) --------
    w_hh1f = w_hh1f_ref[...]

    def step1(t, carry):
        h, c = carry
        g = jnp.dot(h, w_hh1f, preferred_element_type=f32) + pre1_ref[t]
        return gates_to_hc(g, c)

    h1f, _ = lax.fori_loop(0, T, step1, (zeros, zeros), unroll=unroll)

    # ---- layer-1 backward: out[:, -1, H:] is its FIRST step (zero state, input
    # = layer-0 output at t = T-1), so the w_hh1b term vanishes entirely.
    # NOTE: this shortcut is only valid because just out[:, -1, :] is consumed.
    w_ih1b = w_ih1b_ref[...]                        # (2H, 4H)
    g_b = (jnp.dot(h0f_last, w_ih1b[0:H, :], preferred_element_type=f32)
           + jnp.dot(h0b_ref[T - 1], w_ih1b[H:2 * H, :], preferred_element_type=f32)
           + b1b_ref[...])
    i_b = jax.nn.sigmoid(g_b[:, 0 * H:1 * H])
    g_g = jnp.tanh(g_b[:, 2 * H:3 * H])
    o_b = jax.nn.sigmoid(g_b[:, 3 * H:4 * H])
    h1b = o_b * jnp.tanh(i_b * g_g)

    # ---- dropout == identity (inference); lane-padded fully-connected head ----
    w_fc = w_fc_ref[...]                            # (2H, OUT_PAD)
    out = (jnp.dot(h1f, w_fc[0:H, :], preferred_element_type=f32)
           + jnp.dot(h1b, w_fc[H:2 * H, :], preferred_element_type=f32)
           + b_fc_ref[...])
    out_ref[...] = out.astype(out_ref.dtype)        # full unmasked (Bm, 128k) store


# ------------------------------ wrapper ------------------------------------

def bilstm_forward(x, params, *, hidden, predict_steps, output_dim):
    """x: (B, T, D) float32 -> (B, predict_steps, output_dim)."""
    B, T, D = x.shape
    H = hidden
    out_features = predict_steps * output_dim
    out_pad = pl.cdiv(out_features, 128) * 128      # lane-dense output store

    # Pad batch to a sublane multiple and tile it with a parallel 1-D grid
    # (keeps every in-kernel reshape / per-step slice tile-aligned).
    bm = 8
    B_pad = pl.cdiv(B, bm) * bm
    x_p = jnp.pad(x, ((0, B_pad - B), (0, 0), (0, 0))) if B_pad != B else x
    x_tm = jnp.transpose(x_p, (1, 0, 2))            # (T, B_pad, D) time-major

    # Lane-pad the FC head (zeros -> padded columns are sliced off below).
    w_fc = jnp.pad(params["w_fc"], ((0, 0), (0, out_pad - out_features)))
    b_fc = jnp.pad(params["b_fc"], ((0, 0), (0, out_pad - out_features)))

    weight_spec = pl.BlockSpec(memory_space=pltpu.MemorySpace.VMEM)  # whole array

    grid_spec = pltpu.PrefetchScalarGridSpec(
        num_scalar_prefetch=0,
        grid=(B_pad // bm,),
        in_specs=[pl.BlockSpec((T, bm, D), lambda i: (0, i, 0))] + [weight_spec] * 13,
        out_specs=pl.BlockSpec((bm, out_pad), lambda i: (i, 0)),
        scratch_shapes=[
            pltpu.VMEM((T, bm, 4 * H), jnp.float32),   # layer-0 fwd pre-activations
            pltpu.VMEM((T, bm, 4 * H), jnp.float32),   # layer-0 bwd pre-activations
            pltpu.VMEM((T, bm, H), jnp.float32),       # layer-0 fwd hiddens
            pltpu.VMEM((T, bm, H), jnp.float32),       # layer-0 bwd hiddens
            pltpu.VMEM((T, bm, 4 * H), jnp.float32),   # layer-1 fwd pre-activations
        ],
    )

    kernel = functools.partial(_bilstm_kernel, seq_len=T, hidden=H)
    out = pl.pallas_call(
        kernel,
        out_shape=jax.ShapeDtypeStruct((B_pad, out_pad), jnp.float32),
        grid_spec=grid_spec,
        compiler_params=pltpu.CompilerParams(
            dimension_semantics=("parallel",),
            vmem_limit_bytes=32 * 1024 * 1024,
        ),
    )(x_tm,
      params["w_ih0f"], params["w_hh0f"], params["b0f"],
      params["w_ih0b"], params["w_hh0b"], params["b0b"],
      params["w_ih1f"], params["w_hh1f"], params["b1f"],
      params["w_ih1b"], params["b1b"],
      w_fc, b_fc)

    return out[:B, :out_features].reshape(B, predict_steps, output_dim)


# --------------------------- parameter setup --------------------------------

def init_params(key, input_dim, hidden, output_dim, predict_steps):
    """PyTorch-style uniform(-k, k) init; weights stored pre-transposed so the
    kernel does x @ W directly. bias = bias_ih + bias_hh (summed once).
    w_hh1b is kept for parity but is unused (layer-1 backward starts from h=0)."""
    H = hidden
    k = 1.0 / jnp.sqrt(jnp.asarray(float(H)))
    keys = iter(jax.random.split(key, 32))

    def u(shape):
        return jax.random.uniform(next(keys), shape, jnp.float32, -k, k)

    def lstm_dir(in_dim):
        w_ih = u((4 * H, in_dim))          # PyTorch layout (4H, in)
        w_hh = u((4 * H, H))
        b_ih = u((4 * H,))
        b_hh = u((4 * H,))
        return w_ih.T, w_hh.T, (b_ih + b_hh).reshape(1, 4 * H)

    p = {}
    p["w_ih0f"], p["w_hh0f"], p["b0f"] = lstm_dir(input_dim)
    p["w_ih0b"], p["w_hh0b"], p["b0b"] = lstm_dir(input_dim)
    p["w_ih1f"], p["w_hh1f"], p["b1f"] = lstm_dir(2 * H)
    p["w_ih1b"], p["w_hh1b"], p["b1b"] = lstm_dir(2 * H)

    out_features = output_dim * predict_steps
    kf = 1.0 / jnp.sqrt(jnp.asarray(float(2 * H)))
    p["w_fc"] = jax.random.uniform(next(keys), (out_features, 2 * H),
                                   jnp.float32, -kf, kf).T      # (2H, O)
    p["b_fc"] = jax.random.uniform(next(keys), (1, out_features),
                                   jnp.float32, -kf, kf)
    return p


# ------------------------- pure-JAX reference --------------------------------

def reference_forward(x, params, *, hidden, predict_steps, output_dim):
    H = hidden
    B, T, _ = x.shape

    def cell(x_t, h, c, w_ih, w_hh, b):
        g = x_t @ w_ih + h @ w_hh + b
        i, f, gg, o = (jax.nn.sigmoid(g[:, :H]), jax.nn.sigmoid(g[:, H:2 * H]),
                       jnp.tanh(g[:, 2 * H:3 * H]), jax.nn.sigmoid(g[:, 3 * H:]))
        c = f * c + i * gg
        return o * jnp.tanh(c), c

    z = jnp.zeros((B, H), jnp.float32)
    h, c = z, z
    h0f = []
    for t in range(T):
        h, c = cell(x[:, t], h, c, params["w_ih0f"], params["w_hh0f"], params["b0f"])
        h0f.append(h)
    h, c = z, z
    h0b = [None] * T
    for t in range(T - 1, -1, -1):
        h, c = cell(x[:, t], h, c, params["w_ih0b"], params["w_hh0b"], params["b0b"])
        h0b[t] = h
    h, c = z, z
    for t in range(T):
        xin = jnp.concatenate([h0f[t], h0b[t]], -1)
        h, c = cell(xin, h, c, params["w_ih1f"], params["w_hh1f"], params["b1f"])
    h1f = h
    xin = jnp.concatenate([h0f[-1], h0b[-1]], -1)
    h1b, _ = cell(xin, z, z, params["w_ih1b"], params["w_hh1b"], params["b1b"])
    out = jnp.concatenate([h1f, h1b], -1) @ params["w_fc"] + params["b_fc"]
    return out.reshape(B, predict_steps, output_dim)


# ------------------------------- main ----------------------------------------

if __name__ == "__main__":
    B, T, D = 2, 8, 16          # batch, seq, input_feature_dim
    HIDDEN = 32                 # hidden_feature_dim (small for test)
    OUTPUT_DIM, PREDICT_STEPS = 6, 1

    key = jax.random.PRNGKey(0)
    kx, kp = jax.random.split(key)
    x = jax.random.normal(kx, (B, T, D), jnp.float32)
    params = init_params(kp, D, HIDDEN, OUTPUT_DIM, PREDICT_STEPS)

    fwd = jax.jit(functools.partial(bilstm_forward, hidden=HIDDEN,
                                    predict_steps=PREDICT_STEPS,
                                    output_dim=OUTPUT_DIM))
    out = jax.block_until_ready(fwd(x, params))

    ref = reference_forward(x, params, hidden=HIDDEN,
                            predict_steps=PREDICT_STEPS, output_dim=OUTPUT_DIM)
    assert out.shape == (B, PREDICT_STEPS, OUTPUT_DIM)
    assert jnp.allclose(out, ref, atol=1e-4, rtol=1e-4), "kernel mismatch vs reference"

    print("KERNEL_OK")
</pallas_src>

<mosaic_0001>
module attributes {stable_mosaic.version = 11 : i64} {
  func.func @_bilstm_kernel(%arg0: i32, %arg1: memref<8x8x16xf32, #tpu.memory_space<vmem>>, %arg2: memref<16x128xf32, #tpu.memory_space<vmem>>, %arg3: memref<32x128xf32, #tpu.memory_space<vmem>>, %arg4: memref<1x128xf32, #tpu.memory_space<vmem>>, %arg5: memref<16x128xf32, #tpu.memory_space<vmem>>, %arg6: memref<32x128xf32, #tpu.memory_space<vmem>>, %arg7: memref<1x128xf32, #tpu.memory_space<vmem>>, %arg8: memref<64x128xf32, #tpu.memory_space<vmem>>, %arg9: memref<32x128xf32, #tpu.memory_space<vmem>>, %arg10: memref<1x128xf32, #tpu.memory_space<vmem>>, %arg11: memref<64x128xf32, #tpu.memory_space<vmem>>, %arg12: memref<1x128xf32, #tpu.memory_space<vmem>>, %arg13: memref<64x128xf32, #tpu.memory_space<vmem>>, %arg14: memref<1x128xf32, #tpu.memory_space<vmem>>, %arg15: memref<8x128xf32, #tpu.memory_space<vmem>>, %arg16: memref<8x8x128xf32, #tpu.memory_space<vmem>>, %arg17: memref<8x8x128xf32, #tpu.memory_space<vmem>>, %arg18: memref<8x8x32xf32, #tpu.memory_space<vmem>>, %arg19: memref<8x8x32xf32, #tpu.memory_space<vmem>>, %arg20: memref<8x8x128xf32, #tpu.memory_space<vmem>>) attributes {dimension_semantics = [#tpu.dimension_semantics<parallel>], iteration_bounds = array<i64: 1>, scalar_prefetch = 0 : i64, scratch_operands = 5 : i64, tpu.core_type = #tpu.core_type<tc>, window_params = [{transform_indices = @transform_0, window_bounds = array<i64: 8, 8, 16>}, {pipeline_mode = #tpu.pipeline_mode<synchronous>, transform_indices = @transform_1, window_bounds = array<i64: 16, 128>}, {pipeline_mode = #tpu.pipeline_mode<synchronous>, transform_indices = @transform_2, window_bounds = array<i64: 32, 128>}, {pipeline_mode = #tpu.pipeline_mode<synchronous>, transform_indices = @transform_3, window_bounds = array<i64: 1, 128>}, {pipeline_mode = #tpu.pipeline_mode<synchronous>, transform_indices = @transform_4, window_bounds = array<i64: 16, 128>}, {pipeline_mode = #tpu.pipeline_mode<synchronous>, transform_indices = @transform_5, window_bounds = array<i64: 32, 128>}, {pipeline_mode = #tpu.pipeline_mode<synchronous>, transform_indices = @transform_6, window_bounds = array<i64: 1, 128>}, {pipeline_mode = #tpu.pipeline_mode<synchronous>, transform_indices = @transform_7, window_bounds = array<i64: 64, 128>}, {pipeline_mode = #tpu.pipeline_mode<synchronous>, transform_indices = @transform_8, window_bounds = array<i64: 32, 128>}, {pipeline_mode = #tpu.pipeline_mode<synchronous>, transform_indices = @transform_9, window_bounds = array<i64: 1, 128>}, {pipeline_mode = #tpu.pipeline_mode<synchronous>, transform_indices = @transform_10, window_bounds = array<i64: 64, 128>}, {pipeline_mode = #tpu.pipeline_mode<synchronous>, transform_indices = @transform_11, window_bounds = array<i64: 1, 128>}, {pipeline_mode = #tpu.pipeline_mode<synchronous>, transform_indices = @transform_12, window_bounds = array<i64: 64, 128>}, {pipeline_mode = #tpu.pipeline_mode<synchronous>, transform_indices = @transform_13, window_bounds = array<i64: 1, 128>}, {transform_indices = @transform_14, window_bounds = array<i64: 8, 128>}]} {
    %c0 = arith.constant 0 : index
    %c0_0 = arith.constant 0 : index
    %c0_1 = arith.constant 0 : index
    %0 = vector.load %arg1[%c0, %c0_0, %c0_1] : memref<8x8x16xf32, #tpu.memory_space<vmem>>, vector<8x8x16xf32>
    %1 = vector.shape_cast %0 : vector<8x8x16xf32> to vector<64x16xf32>
    %c0_2 = arith.constant 0 : index
    %c0_3 = arith.constant 0 : index
    %2 = vector.load %arg2[%c0_2, %c0_3] : memref<16x128xf32, #tpu.memory_space<vmem>>, vector<16x128xf32>
    %cst = arith.constant dense<0.000000e+00> : vector<64x128xf32>
    %3 = tpu.matmul %1, %2, %cst {dimension_numbers = #tpu.dot_dimension_numbers<[1], [0], [0], [1], [0, 0, 1, 1], [], []>} : vector<64x16xf32>, vector<16x128xf32>, vector<64x128xf32> -> vector<64x128xf32>
    %c0_4 = arith.constant 0 : index
    %c0_5 = arith.constant 0 : index
    %4 = vector.load %arg4[%c0_4, %c0_5] : memref<1x128xf32, #tpu.memory_space<vmem>>, vector<1x128xf32>
    %5 = vector.broadcast %4 : vector<1x128xf32> to vector<64x128xf32>
    %6 = arith.addf %3, %5 : vector<64x128xf32>
    %c0_6 = arith.constant 0 : index
    %c0_7 = arith.constant 0 : index
    %7 = vector.load %arg5[%c0_6, %c0_7] : memref<16x128xf32, #tpu.memory_space<vmem>>, vector<16x128xf32>
    %cst_8 = arith.constant dense<0.000000e+00> : vector<64x128xf32>
    %8 = tpu.matmul %1, %7, %cst_8 {dimension_numbers = #tpu.dot_dimension_numbers<[1], [0], [0], [1], [0, 0, 1, 1], [], []>} : vector<64x16xf32>, vector<16x128xf32>, vector<64x128xf32> -> vector<64x128xf32>
    %c0_9 = arith.constant 0 : index
    %c0_10 = arith.constant 0 : index
    %9 = vector.load %arg7[%c0_9, %c0_10] : memref<1x128xf32, #tpu.memory_space<vmem>>, vector<1x128xf32>
    %10 = vector.broadcast %9 : vector<1x128xf32> to vector<64x128xf32>
    %11 = arith.addf %8, %10 : vector<64x128xf32>
    %12 = vector.shape_cast %6 : vector<64x128xf32> to vector<8x8x128xf32>
    %c0_11 = arith.constant 0 : index
    %c0_12 = arith.constant 0 : index
    %c0_13 = arith.constant 0 : index
    %13 = vector.load %arg16[%c0_11, %c0_12, %c0_13] : memref<8x8x128xf32, #tpu.memory_space<vmem>>, vector<8x8x128xf32>
    tpu.vector_store %arg16[%c0_11, %c0_12, %c0_13], %12 {strides = array<i32>} : memref<8x8x128xf32, #tpu.memory_space<vmem>>, vector<8x8x128xf32>,
    %14 = vector.shape_cast %11 : vector<64x128xf32> to vector<8x8x128xf32>
    %c0_14 = arith.constant 0 : index
    %c0_15 = arith.constant 0 : index
    %c0_16 = arith.constant 0 : index
    %15 = vector.load %arg17[%c0_14, %c0_15, %c0_16] : memref<8x8x128xf32, #tpu.memory_space<vmem>>, vector<8x8x128xf32>
    tpu.vector_store %arg17[%c0_14, %c0_15, %c0_16], %14 {strides = array<i32>} : memref<8x8x128xf32, #tpu.memory_space<vmem>>, vector<8x8x128xf32>,
    %cst_17 = arith.constant 0.000000e+00 : f32
    %16 = vector.broadcast %cst_17 : f32 to vector<8x32xf32>
    %c0_18 = arith.constant 0 : index
    %c0_19 = arith.constant 0 : index
    %17 = vector.load %arg3[%c0_18, %c0_19] : memref<32x128xf32, #tpu.memory_space<vmem>>, vector<32x128xf32>
    %c0_20 = arith.constant 0 : index
    %c0_21 = arith.constant 0 : index
    %18 = vector.load %arg6[%c0_20, %c0_21] : memref<32x128xf32, #tpu.memory_space<vmem>>, vector<32x128xf32>
    %c0_i32 = arith.constant 0 : i32
    %c7_i32 = arith.constant 7 : i32
    %19 = arith.subi %c7_i32, %c0_i32 : i32
    %cst_22 = arith.constant dense<0.000000e+00> : vector<8x128xf32>
    %20 = tpu.matmul %16, %17, %cst_22 {dimension_numbers = #tpu.dot_dimension_numbers<[1], [0], [0], [1], [0, 0, 1, 1], [], []>} : vector<8x32xf32>, vector<32x128xf32>, vector<8x128xf32> -> vector<8x128xf32>
    %21 = arith.index_cast %c0_i32 : i32 to index
    %c0_23 = arith.constant 0 : index
    %c0_24 = arith.constant 0 : index
    %22 = vector.load %arg16[%21, %c0_23, %c0_24] : memref<8x8x128xf32, #tpu.memory_space<vmem>>, vector<1x8x128xf32>
    %23 = vector.shape_cast %22 : vector<1x8x128xf32> to vector<8x128xf32>
    %24 = arith.addf %20, %23 : vector<8x128xf32>
    %cst_25 = arith.constant dense<0.000000e+00> : vector<8x128xf32>
    %25 = tpu.matmul %16, %18, %cst_25 {dimension_numbers = #tpu.dot_dimension_numbers<[1], [0], [0], [1], [0, 0, 1, 1], [], []>} : vector<8x32xf32>, vector<32x128xf32>, vector<8x128xf32> -> vector<8x128xf32>
    %26 = arith.index_cast %19 : i32 to index
    %c0_26 = arith.constant 0 : index
    %c0_27 = arith.constant 0 : index
    %27 = vector.load %arg17[%26, %c0_26, %c0_27] : memref<8x8x128xf32, #tpu.memory_space<vmem>>, vector<1x8x128xf32>
    %28 = vector.shape_cast %27 : vector<1x8x128xf32> to vector<8x128xf32>
    %29 = arith.addf %25, %28 : vector<8x128xf32>
    %30 = vector.extract_strided_slice %24 {offsets = [0, 0], sizes = [8, 32], strides = [1, 1]} : vector<8x128xf32> to vector<8x32xf32>
    %31 = arith.negf %30 : vector<8x32xf32>
    %32 = math.exp %31 : vector<8x32xf32>
    %cst_28 = arith.constant 1.000000e+00 : f32
    %33 = vector.broadcast %cst_28 : f32 to vector<8x32xf32>
    %34 = arith.addf %33, %32 : vector<8x32xf32>
    %35 = arith.divf %33, %34 : vector<8x32xf32>
    %36 = vector.extract_strided_slice %24 {offsets = [0, 32], sizes = [8, 32], strides = [1, 1]} : vector<8x128xf32> to vector<8x32xf32>
    %37 = arith.negf %36 : vector<8x32xf32>
    %38 = math.exp %37 : vector<8x32xf32>
    %cst_29 = arith.constant 1.000000e+00 : f32
    %39 = vector.broadcast %cst_29 : f32 to vector<8x32xf32>
    %40 = arith.addf %39, %38 : vector<8x32xf32>
    %41 = arith.divf %39, %40 : vector<8x32xf32>
    %42 = vector.extract_strided_slice %24 {offsets = [0, 64], sizes = [8, 32], strides = [1, 1]} : vector<8x128xf32> to vector<8x32xf32>
    %43 = math.tanh %42 : vector<8x32xf32>
    %44 = vector.extract_strided_slice %24 {offsets = [0, 96], sizes = [8, 32], strides = [1, 1]} : vector<8x128xf32> to vector<8x32xf32>
    %45 = arith.negf %44 : vector<8x32xf32>
    %46 = math.exp %45 : vector<8x32xf32>
    %cst_30 = arith.constant 1.000000e+00 : f32
    %47 = vector.broadcast %cst_30 : f32 to vector<8x32xf32>
    %48 = arith.addf %47, %46 : vector<8x32xf32>
    %49 = arith.divf %47, %48 : vector<8x32xf32>
    %50 = arith.mulf %41, %16 : vector<8x32xf32>
    %51 = arith.mulf %35, %43 : vector<8x32xf32>
    %52 = arith.addf %50, %51 : vector<8x32xf32>
    %53 = math.tanh %52 : vector<8x32xf32>
    %54 = arith.mulf %49, %53 : vector<8x32xf32>
    %55 = vector.extract_strided_slice %29 {offsets = [0, 0], sizes = [8, 32], strides = [1, 1]} : vector<8x128xf32> to vector<8x32xf32>
    %56 = arith.negf %55 : vector<8x32xf32>
    %57 = math.exp %56 : vector<8x32xf32>
    %cst_31 = arith.constant 1.000000e+00 : f32
    %58 = vector.broadcast %cst_31 : f32 to vector<8x32xf32>
    %59 = arith.addf %58, %57 : vector<8x32xf32>
    %60 = arith.divf %58, %59 : vector<8x32xf32>
    %61 = vector.extract_strided_slice %29 {offsets = [0, 32], sizes = [8, 32], strides = [1, 1]} : vector<8x128xf32> to vector<8x32xf32>
    %62 = arith.negf %61 : vector<8x32xf32>
    %63 = math.exp %62 : vector<8x32xf32>
    %cst_32 = arith.constant 1.000000e+00 : f32
    %64 = vector.broadcast %cst_32 : f32 to vector<8x32xf32>
    %65 = arith.addf %64, %63 : vector<8x32xf32>
    %66 = arith.divf %64, %65 : vector<8x32xf32>
    %67 = vector.extract_strided_slice %29 {offsets = [0, 64], sizes = [8, 32], strides = [1, 1]} : vector<8x128xf32> to vector<8x32xf32>
    %68 = math.tanh %67 : vector<8x32xf32>
    %69 = vector.extract_strided_slice %29 {offsets = [0, 96], sizes = [8, 32], strides = [1, 1]} : vector<8x128xf32> to vector<8x32xf32>
    %70 = arith.negf %69 : vector<8x32xf32>
    %71 = math.exp %70 : vector<8x32xf32>
    %cst_33 = arith.constant 1.000000e+00 : f32
    %72 = vector.broadcast %cst_33 : f32 to vector<8x32xf32>
    %73 = arith.addf %72, %71 : vector<8x32xf32>
    %74 = arith.divf %72, %73 : vector<8x32xf32>
    %75 = arith.mulf %66, %16 : vector<8x32xf32>
    %76 = arith.mulf %60, %68 : vector<8x32xf32>
    %77 = arith.addf %75, %76 : vector<8x32xf32>
    %78 = math.tanh %77 : vector<8x32xf32>
    %79 = arith.mulf %74, %78 : vector<8x32xf32>
    %80 = arith.index_cast %c0_i32 : i32 to index
    %c0_34 = arith.constant 0 : index
    %c0_35 = arith.constant 0 : index
    %81 = vector.load %arg18[%80, %c0_34, %c0_35] : memref<8x8x32xf32, #tpu.memory_space<vmem>>, vector<1x8x32xf32>
    %82 = vector.shape_cast %81 : vector<1x8x32xf32> to vector<8x32xf32>
    %83 = vector.shape_cast %54 : vector<8x32xf32> to vector<1x8x32xf32>
    tpu.vector_store %arg18[%80, %c0_34, %c0_35], %83 {strides = array<i32>} : memref<8x8x32xf32, #tpu.memory_space<vmem>>, vector<1x8x32xf32>,
    %84 = arith.index_cast %19 : i32 to index
    %c0_36 = arith.constant 0 : index
    %c0_37 = arith.constant 0 : index
    %85 = vector.load %arg19[%84, %c0_36, %c0_37] : memref<8x8x32xf32, #tpu.memory_space<vmem>>, vector<1x8x32xf32>
    %86 = vector.shape_cast %85 : vector<1x8x32xf32> to vector<8x32xf32>
    %87 = vector.shape_cast %79 : vector<8x32xf32> to vector<1x8x32xf32>
    tpu.vector_store %arg19[%84, %c0_36, %c0_37], %87 {strides = array<i32>} : memref<8x8x32xf32, #tpu.memory_space<vmem>>, vector<1x8x32xf32>,
    %c1_i32 = arith.constant 1 : i32
    %c7_i32_38 = arith.constant 7 : i32
    %88 = arith.subi %c7_i32_38, %c1_i32 : i32
    %cst_39 = arith.constant dense<0.000000e+00> : vector<8x128xf32>
    %89 = tpu.matmul %54, %17, %cst_39 {dimension_numbers = #tpu.dot_dimension_numbers<[1], [0], [0], [1], [0, 0, 1, 1], [], []>} : vector<8x32xf32>, vector<32x128xf32>, vector<8x128xf32> -> vector<8x128xf32>
    %90 = arith.index_cast %c1_i32 : i32 to index
    %c0_40 = arith.constant 0 : index
    %c0_41 = arith.constant 0 : index
    %91 = vector.load %arg16[%90, %c0_40, %c0_41] : memref<8x8x128xf32, #tpu.memory_space<vmem>>, vector<1x8x128xf32>
    %92 = vector.shape_cast %91 : vector<1x8x128xf32> to vector<8x128xf32>
    %93 = arith.addf %89, %92 : vector<8x128xf32>
    %cst_42 = arith.constant dense<0.000000e+00> : vector<8x128xf32>
    %94 = tpu.matmul %79, %18, %cst_42 {dimension_numbers = #tpu.dot_dimension_numbers<[1], [0], [0], [1], [0, 0, 1, 1], [], []>} : vector<8x32xf32>, vector<32x128xf32>, vector<8x128xf32> -> vector<8x128xf32>
    %95 = arith.index_cast %88 : i32 to index
    %c0_43 = arith.constant 0 : index
    %c0_44 = arith.constant 0 : index
    %96 = vector.load %arg17[%95, %c0_43, %c0_44] : memref<8x8x128xf32, #tpu.memory_space<vmem>>, vector<1x8x128xf32>
    %97 = vector.shape_cast %96 : vector<1x8x128xf32> to vector<8x128xf32>
    %98 = arith.addf %94, %97 : vector<8x128xf32>
    %99 = vector.extract_strided_slice %93 {offsets = [0, 0], sizes = [8, 32], strides = [1, 1]} : vector<8x128xf32> to vector<8x32xf32>
    %100 = arith.negf %99 : vector<8x32xf32>
    %101 = math.exp %100 : vector<8x32xf32>
    %cst_45 = arith.constant 1.000000e+00 : f32
    %102 = vector.broadcast %cst_45 : f32 to vector<8x32xf32>
    %103 = arith.addf %102, %101 : vector<8x32xf32>
    %104 = arith.divf %102, %103 : vector<8x32xf32>
    %105 = vector.extract_strided_slice %93 {offsets = [0, 32], sizes = [8, 32], strides = [1, 1]} : vector<8x128xf32> to vector<8x32xf32>
    %106 = arith.negf %105 : vector<8x32xf32>
    %107 = math.exp %106 : vector<8x32xf32>
    %cst_46 = arith.constant 1.000000e+00 : f32
    %108 = vector.broadcast %cst_46 : f32 to vector<8x32xf32>
    %109 = arith.addf %108, %107 : vector<8x32xf32>
    %110 = arith.divf %108, %109 : vector<8x32xf32>
    %111 = vector.extract_strided_slice %93 {offsets = [0, 64], sizes = [8, 32], strides = [1, 1]} : vector<8x128xf32> to vector<8x32xf32>
    %112 = math.tanh %111 : vector<8x32xf32>
    %113 = vector.extract_strided_slice %93 {offsets = [0, 96], sizes = [8, 32], strides = [1, 1]} : vector<8x128xf32> to vector<8x32xf32>
    %114 = arith.negf %113 : vector<8x32xf32>
    %115 = math.exp %114 : vector<8x32xf32>
    %cst_47 = arith.constant 1.000000e+00 : f32
    %116 = vector.broadcast %cst_47 : f32 to vector<8x32xf32>
    %117 = arith.addf %116, %115 : vector<8x32xf32>
    %118 = arith.divf %116, %117 : vector<8x32xf32>
    %119 = arith.mulf %110, %52 : vector<8x32xf32>
    %120 = arith.mulf %104, %112 : vector<8x32xf32>
    %121 = arith.addf %119, %120 : vector<8x32xf32>
    %122 = math.tanh %121 : vector<8x32xf32>
    %123 = arith.mulf %118, %122 : vector<8x32xf32>
    %124 = vector.extract_strided_slice %98 {offsets = [0, 0], sizes = [8, 32], strides = [1, 1]} : vector<8x128xf32> to vector<8x32xf32>
    %125 = arith.negf %124 : vector<8x32xf32>
    %126 = math.exp %125 : vector<8x32xf32>
    %cst_48 = arith.constant 1.000000e+00 : f32
    %127 = vector.broadcast %cst_48 : f32 to vector<8x32xf32>
    %128 = arith.addf %127, %126 : vector<8x32xf32>
    %129 = arith.divf %127, %128 : vector<8x32xf32>
    %130 = vector.extract_strided_slice %98 {offsets = [0, 32], sizes = [8, 32], strides = [1, 1]} : vector<8x128xf32> to vector<8x32xf32>
    %131 = arith.negf %130 : vector<8x32xf32>
    %132 = math.exp %131 : vector<8x32xf32>
    %cst_49 = arith.constant 1.000000e+00 : f32
    %133 = vector.broadcast %cst_49 : f32 to vector<8x32xf32>
    %134 = arith.addf %133, %132 : vector<8x32xf32>
    %135 = arith.divf %133, %134 : vector<8x32xf32>
    %136 = vector.extract_strided_slice %98 {offsets = [0, 64], sizes = [8, 32], strides = [1, 1]} : vector<8x128xf32> to vector<8x32xf32>
    %137 = math.tanh %136 : vector<8x32xf32>
    %138 = vector.extract_strided_slice %98 {offsets = [0, 96], sizes = [8, 32], strides = [1, 1]} : vector<8x128xf32> to vector<8x32xf32>
    %139 = arith.negf %138 : vector<8x32xf32>
    %140 = math.exp %139 : vector<8x32xf32>
    %cst_50 = arith.constant 1.000000e+00 : f32
    %141 = vector.broadcast %cst_50 : f32 to vector<8x32xf32>
    %142 = arith.addf %141, %140 : vector<8x32xf32>
    %143 = arith.divf %141, %142 : vector<8x32xf32>
    %144 = arith.mulf %135, %77 : vector<8x32xf32>
    %145 = arith.mulf %129, %137 : vector<8x32xf32>
    %146 = arith.addf %144, %145 : vector<8x32xf32>
    %147 = math.tanh %146 : vector<8x32xf32>
    %148 = arith.mulf %143, %147 : vector<8x32xf32>
    %149 = arith.index_cast %c1_i32 : i32 to index
    %c0_51 = arith.constant 0 : index
    %c0_52 = arith.constant 0 : index
    %150 = vector.load %arg18[%149, %c0_51, %c0_52] : memref<8x8x32xf32, #tpu.memory_space<vmem>>, vector<1x8x32xf32>
    %151 = vector.shape_cast %150 : vector<1x8x32xf32> to vector<8x32xf32>
    %152 = vector.shape_cast %123 : vector<8x32xf32> to vector<1x8x32xf32>
    tpu.vector_store %arg18[%149, %c0_51, %c0_52], %152 {strides = array<i32>} : memref<8x8x32xf32, #tpu.memory_space<vmem>>, vector<1x8x32xf32>,
    %153 = arith.index_cast %88 : i32 to index
    %c0_53 = arith.constant 0 : index
    %c0_54 = arith.constant 0 : index
    %154 = vector.load %arg19[%153, %c0_53, %c0_54] : memref<8x8x32xf32, #tpu.memory_space<vmem>>, vector<1x8x32xf32>
    %155 = vector.shape_cast %154 : vector<1x8x32xf32> to vector<8x32xf32>
    %156 = vector.shape_cast %148 : vector<8x32xf32> to vector<1x8x32xf32>
    tpu.vector_store %arg19[%153, %c0_53, %c0_54], %156 {strides = array<i32>} : memref<8x8x32xf32, #tpu.memory_space<vmem>>, vector<1x8x32xf32>,
    %c2_i32 = arith.constant 2 : i32
    %c7_i32_55 = arith.constant 7 : i32
    %157 = arith.subi %c7_i32_55, %c2_i32 : i32
    %cst_56 = arith.constant dense<0.000000e+00> : vector<8x128xf32>
    %158 = tpu.matmul %123, %17, %cst_56 {dimension_numbers = #tpu.dot_dimension_numbers<[1], [0], [0], [1], [0, 0, 1, 1], [], []>} : vector<8x32xf32>, vector<32x128xf32>, vector<8x128xf32> -> vector<8x128xf32>
    %159 = arith.index_cast %c2_i32 : i32 to index
    %c0_57 = arith.constant 0 : index
    %c0_58 = arith.constant 0 : index
    %160 = vector.load %arg16[%159, %c0_57, %c0_58] : memref<8x8x128xf32, #tpu.memory_space<vmem>>, vector<1x8x128xf32>
    %161 = vector.shape_cast %160 : vector<1x8x128xf32> to vector<8x128xf32>
    %162 = arith.addf %158, %161 : vector<8x128xf32>
    %cst_59 = arith.constant dense<0.000000e+00> : vector<8x128xf32>
    %163 = tpu.matmul %148, %18, %cst_59 {dimension_numbers = #tpu.dot_dimension_numbers<[1], [0], [0], [1], [0, 0, 1, 1], [], []>} : vector<8x32xf32>, vector<32x128xf32>, vector<8x128xf32> -> vector<8x128xf32>
    %164 = arith.index_cast %157 : i32 to index
    %c0_60 = arith.constant 0 : index
    %c0_61 = arith.constant 0 : index
    %165 = vector.load %arg17[%164, %c0_60, %c0_61] : memref<8x8x128xf32, #tpu.memory_space<vmem>>, vector<1x8x128xf32>
    %166 = vector.shape_cast %165 : vector<1x8x128xf32> to vector<8x128xf32>
    %167 = arith.addf %163, %166 : vector<8x128xf32>
    %168 = vector.extract_strided_slice %162 {offsets = [0, 0], sizes = [8, 32], strides = [1, 1]} : vector<8x128xf32> to vector<8x32xf32>
    %169 = arith.negf %168 : vector<8x32xf32>
    %170 = math.exp %169 : vector<8x32xf32>
    %cst_62 = arith.constant 1.000000e+00 : f32
    %171 = vector.broadcast %cst_62 : f32 to vector<8x32xf32>
    %172 = arith.addf %171, %170 : vector<8x32xf32>
    %173 = arith.divf %171, %172 : vector<8x32xf32>
    %174 = vector.extract_strided_slice %162 {offsets = [0, 32], sizes = [8, 32], strides = [1, 1]} : vector<8x128xf32> to vector<8x32xf32>
    %175 = arith.negf %174 : vector<8x32xf32>
    %176 = math.exp %175 : vector<8x32xf32>
    %cst_63 = arith.constant 1.000000e+00 : f32
    %177 = vector.broadcast %cst_63 : f32 to vector<8x32xf32>
    %178 = arith.addf %177, %176 : vector<8x32xf32>
    %179 = arith.divf %177, %178 : vector<8x32xf32>
    %180 = vector.extract_strided_slice %162 {offsets = [0, 64], sizes = [8, 32], strides = [1, 1]} : vector<8x128xf32> to vector<8x32xf32>
    %181 = math.tanh %180 : vector<8x32xf32>
    %182 = vector.extract_strided_slice %162 {offsets = [0, 96], sizes = [8, 32], strides = [1, 1]} : vector<8x128xf32> to vector<8x32xf32>
    %183 = arith.negf %182 : vector<8x32xf32>
    %184 = math.exp %183 : vector<8x32xf32>
    %cst_64 = arith.constant 1.000000e+00 : f32
    %185 = vector.broadcast %cst_64 : f32 to vector<8x32xf32>
    %186 = arith.addf %185, %184 : vector<8x32xf32>
    %187 = arith.divf %185, %186 : vector<8x32xf32>
    %188 = arith.mulf %179, %121 : vector<8x32xf32>
    %189 = arith.mulf %173, %181 : vector<8x32xf32>
    %190 = arith.addf %188, %189 : vector<8x32xf32>
    %191 = math.tanh %190 : vector<8x32xf32>
    %192 = arith.mulf %187, %191 : vector<8x32xf32>
    %193 = vector.extract_strided_slice %167 {offsets = [0, 0], sizes = [8, 32], strides = [1, 1]} : vector<8x128xf32> to vector<8x32xf32>
    %194 = arith.negf %193 : vector<8x32xf32>
    %195 = math.exp %194 : vector<8x32xf32>
    %cst_65 = arith.constant 1.000000e+00 : f32
    %196 = vector.broadcast %cst_65 : f32 to vector<8x32xf32>
    %197 = arith.addf %196, %195 : vector<8x32xf32>
    %198 = arith.divf %196, %197 : vector<8x32xf32>
    %199 = vector.extract_strided_slice %167 {offsets = [0, 32], sizes = [8, 32], strides = [1, 1]} : vector<8x128xf32> to vector<8x32xf32>
    %200 = arith.negf %199 : vector<8x32xf32>
    %201 = math.exp %200 : vector<8x32xf32>
    %cst_66 = arith.constant 1.000000e+00 : f32
    %202 = vector.broadcast %cst_66 : f32 to vector<8x32xf32>
    %203 = arith.addf %202, %201 : vector<8x32xf32>
    %204 = arith.divf %202, %203 : vector<8x32xf32>
    %205 = vector.extract_strided_slice %167 {offsets = [0, 64], sizes = [8, 32], strides = [1, 1]} : vector<8x128xf32> to vector<8x32xf32>
    %206 = math.tanh %205 : vector<8x32xf32>
    %207 = vector.extract_strided_slice %167 {offsets = [0, 96], sizes = [8, 32], strides = [1, 1]} : vector<8x128xf32> to vector<8x32xf32>
    %208 = arith.negf %207 : vector<8x32xf32>
    %209 = math.exp %208 : vector<8x32xf32>
    %cst_67 = arith.constant 1.000000e+00 : f32
    %210 = vector.broadcast %cst_67 : f32 to vector<8x32xf32>
    %211 = arith.addf %210, %209 : vector<8x32xf32>
    %212 = arith.divf %210, %211 : vector<8x32xf32>
    %213 = arith.mulf %204, %146 : vector<8x32xf32>
    %214 = arith.mulf %198, %206 : vector<8x32xf32>
    %215 = arith.addf %213, %214 : vector<8x32xf32>
    %216 = math.tanh %215 : vector<8x32xf32>
    %217 = arith.mulf %212, %216 : vector<8x32xf32>
    %218 = arith.index_cast %c2_i32 : i32 to index
    %c0_68 = arith.constant 0 : index
    %c0_69 = arith.constant 0 : index
    %219 = vector.load %arg18[%218, %c0_68, %c0_69] : memref<8x8x32xf32, #tpu.memory_space<vmem>>, vector<1x8x32xf32>
    %220 = vector.shape_cast %219 : vector<1x8x32xf32> to vector<8x32xf32>
    %221 = vector.shape_cast %192 : vector<8x32xf32> to vector<1x8x32xf32>
    tpu.vector_store %arg18[%218, %c0_68, %c0_69], %221 {strides = array<i32>} : memref<8x8x32xf32, #tpu.memory_space<vmem>>, vector<1x8x32xf32>,
    %222 = arith.index_cast %157 : i32 to index
    %c0_70 = arith.constant 0 : index
    %c0_71 = arith.constant 0 : index
    %223 = vector.load %arg19[%222, %c0_70, %c0_71] : memref<8x8x32xf32, #tpu.memory_space<vmem>>, vector<1x8x32xf32>
    %224 = vector.shape_cast %223 : vector<1x8x32xf32> to vector<8x32xf32>
    %225 = vector.shape_cast %217 : vector<8x32xf32> to vector<1x8x32xf32>
    tpu.vector_store %arg19[%222, %c0_70, %c0_71], %225 {strides = array<i32>} : memref<8x8x32xf32, #tpu.memory_space<vmem>>, vector<1x8x32xf32>,
    %c3_i32 = arith.constant 3 : i32
    %c7_i32_72 = arith.constant 7 : i32
    %226 = arith.subi %c7_i32_72, %c3_i32 : i32
    %cst_73 = arith.constant dense<0.000000e+00> : vector<8x128xf32>
    %227 = tpu.matmul %192, %17, %cst_73 {dimension_numbers = #tpu.dot_dimension_numbers<[1], [0], [0], [1], [0, 0, 1, 1], [], []>} : vector<8x32xf32>, vector<32x128xf32>, vector<8x128xf32> -> vector<8x128xf32>
    %228 = arith.index_cast %c3_i32 : i32 to index
    %c0_74 = arith.constant 0 : index
    %c0_75 = arith.constant 0 : index
    %229 = vector.load %arg16[%228, %c0_74, %c0_75] : memref<8x8x128xf32, #tpu.memory_space<vmem>>, vector<1x8x128xf32>
    %230 = vector.shape_cast %229 : vector<1x8x128xf32> to vector<8x128xf32>
    %231 = arith.addf %227, %230 : vector<8x128xf32>
    %cst_76 = arith.constant dense<0.000000e+00> : vector<8x128xf32>
    %232 = tpu.matmul %217, %18, %cst_76 {dimension_numbers = #tpu.dot_dimension_numbers<[1], [0], [0], [1], [0, 0, 1, 1], [], []>} : vector<8x32xf32>, vector<32x128xf32>, vector<8x128xf32> -> vector<8x128xf32>
    %233 = arith.index_cast %226 : i32 to index
    %c0_77 = arith.constant 0 : index
    %c0_78 = arith.constant 0 : index
    %234 = vector.load %arg17[%233, %c0_77, %c0_78] : memref<8x8x128xf32, #tpu.memory_space<vmem>>, vector<1x8x128xf32>
    %235 = vector.shape_cast %234 : vector<1x8x128xf32> to vector<8x128xf32>
    %236 = arith.addf %232, %235 : vector<8x128xf32>
    %237 = vector.extract_strided_slice %231 {offsets = [0, 0], sizes = [8, 32], strides = [1, 1]} : vector<8x128xf32> to vector<8x32xf32>
    %238 = arith.negf %237 : vector<8x32xf32>
    %239 = math.exp %238 : vector<8x32xf32>
    %cst_79 = arith.constant 1.000000e+00 : f32
    %240 = vector.broadcast %cst_79 : f32 to vector<8x32xf32>
    %241 = arith.addf %240, %239 : vector<8x32xf32>
    %242 = arith.divf %240, %241 : vector<8x32xf32>
    %243 = vector.extract_strided_slice %231 {offsets = [0, 32], sizes = [8, 32], strides = [1, 1]} : vector<8x128xf32> to vector<8x32xf32>
    %244 = arith.negf %243 : vector<8x32xf32>
    %245 = math.exp %244 : vector<8x32xf32>
    %cst_80 = arith.constant 1.000000e+00 : f32
    %246 = vector.broadcast %cst_80 : f32 to vector<8x32xf32>
    %247 = arith.addf %246, %245 : vector<8x32xf32>
    %248 = arith.divf %246, %247 : vector<8x32xf32>
    %249 = vector.extract_strided_slice %231 {offsets = [0, 64], sizes = [8, 32], strides = [1, 1]} : vector<8x128xf32> to vector<8x32xf32>
    %250 = math.tanh %249 : vector<8x32xf32>
    %251 = vector.extract_strided_slice %231 {offsets = [0, 96], sizes = [8, 32], strides = [1, 1]} : vector<8x128xf32> to vector<8x32xf32>
    %252 = arith.negf %251 : vector<8x32xf32>
    %253 = math.exp %252 : vector<8x32xf32>
    %cst_81 = arith.constant 1.000000e+00 : f32
    %254 = vector.broadcast %cst_81 : f32 to vector<8x32xf32>
    %255 = arith.addf %254, %253 : vector<8x32xf32>
    %256 = arith.divf %254, %255 : vector<8x32xf32>
    %257 = arith.mulf %248, %190 : vector<8x32xf32>
    %258 = arith.mulf %242, %250 : vector<8x32xf32>
    %259 = arith.addf %257, %258 : vector<8x32xf32>
    %260 = math.tanh %259 : vector<8x32xf32>
    %261 = arith.mulf %256, %260 : vector<8x32xf32>
    %262 = vector.extract_strided_slice %236 {offsets = [0, 0], sizes = [8, 32], strides = [1, 1]} : vector<8x128xf32> to vector<8x32xf32>
    %263 = arith.negf %262 : vector<8x32xf32>
    %264 = math.exp %263 : vector<8x32xf32>
    %cst_82 = arith.constant 1.000000e+00 : f32
    %265 = vector.broadcast %cst_82 : f32 to vector<8x32xf32>
    %266 = arith.addf %265, %264 : vector<8x32xf32>
    %267 = arith.divf %265, %266 : vector<8x32xf32>
    %268 = vector.extract_strided_slice %236 {offsets = [0, 32], sizes = [8, 32], strides = [1, 1]} : vector<8x128xf32> to vector<8x32xf32>
    %269 = arith.negf %268 : vector<8x32xf32>
    %270 = math.exp %269 : vector<8x32xf32>
    %cst_83 = arith.constant 1.000000e+00 : f32
    %271 = vector.broadcast %cst_83 : f32 to vector<8x32xf32>
    %272 = arith.addf %271, %270 : vector<8x32xf32>
    %273 = arith.divf %271, %272 : vector<8x32xf32>
    %274 = vector.extract_strided_slice %236 {offsets = [0, 64], sizes = [8, 32], strides = [1, 1]} : vector<8x128xf32> to vector<8x32xf32>
    %275 = math.tanh %274 : vector<8x32xf32>
    %276 = vector.extract_strided_slice %236 {offsets = [0, 96], sizes = [8, 32], strides = [1, 1]} : vector<8x128xf32> to vector<8x32xf32>
    %277 = arith.negf %276 : vector<8x32xf32>
    %278 = math.exp %277 : vector<8x32xf32>
    %cst_84 = arith.constant 1.000000e+00 : f32
    %279 = vector.broadcast %cst_84 : f32 to vector<8x32xf32>
    %280 = arith.addf %279, %278 : vector<8x32xf32>
    %281 = arith.divf %279, %280 : vector<8x32xf32>
    %282 = arith.mulf %273, %215 : vector<8x32xf32>
    %283 = arith.mulf %267, %275 : vector<8x32xf32>
    %284 = arith.addf %282, %283 : vector<8x32xf32>
    %285 = math.tanh %284 : vector<8x32xf32>
    %286 = arith.mulf %281, %285 : vector<8x32xf32>
    %287 = arith.index_cast %c3_i32 : i32 to index
    %c0_85 = arith.constant 0 : index
    %c0_86 = arith.constant 0 : index
    %288 = vector.load %arg18[%287, %c0_85, %c0_86] : memref<8x8x32xf32, #tpu.memory_space<vmem>>, vector<1x8x32xf32>
    %289 = vector.shape_cast %288 : vector<1x8x32xf32> to vector<8x32xf32>
    %290 = vector.shape_cast %261 : vector<8x32xf32> to vector<1x8x32xf32>
    tpu.vector_store %arg18[%287, %c0_85, %c0_86], %290 {strides = array<i32>} : memref<8x8x32xf32, #tpu.memory_space<vmem>>, vector<1x8x32xf32>,
    %291 = arith.index_cast %226 : i32 to index
    %c0_87 = arith.constant 0 : index
    %c0_88 = arith.constant 0 : index
    %292 = vector.load %arg19[%291, %c0_87, %c0_88] : memref<8x8x32xf32, #tpu.memory_space<vmem>>, vector<1x8x32xf32>
    %293 = vector.shape_cast %292 : vector<1x8x32xf32> to vector<8x32xf32>
    %294 = vector.shape_cast %286 : vector<8x32xf32> to vector<1x8x32xf32>
    tpu.vector_store %arg19[%291, %c0_87, %c0_88], %294 {strides = array<i32>} : memref<8x8x32xf32, #tpu.memory_space<vmem>>, vector<1x8x32xf32>,
    %c4_i32 = arith.constant 4 : i32
    %c7_i32_89 = arith.constant 7 : i32
    %295 = arith.subi %c7_i32_89, %c4_i32 : i32
    %cst_90 = arith.constant dense<0.000000e+00> : vector<8x128xf32>
    %296 = tpu.matmul %261, %17, %cst_90 {dimension_numbers = #tpu.dot_dimension_numbers<[1], [0], [0], [1], [0, 0, 1, 1], [], []>} : vector<8x32xf32>, vector<32x128xf32>, vector<8x128xf32> -> vector<8x128xf32>
    %297 = arith.index_cast %c4_i32 : i32 to index
    %c0_91 = arith.constant 0 : index
    %c0_92 = arith.constant 0 : index
    %298 = vector.load %arg16[%297, %c0_91, %c0_92] : memref<8x8x128xf32, #tpu.memory_space<vmem>>, vector<1x8x128xf32>
    %299 = vector.shape_cast %298 : vector<1x8x128xf32> to vector<8x128xf32>
    %300 = arith.addf %296, %299 : vector<8x128xf32>
    %cst_93 = arith.constant dense<0.000000e+00> : vector<8x128xf32>
    %301 = tpu.matmul %286, %18, %cst_93 {dimension_numbers = #tpu.dot_dimension_numbers<[1], [0], [0], [1], [0, 0, 1, 1], [], []>} : vector<8x32xf32>, vector<32x128xf32>, vector<8x128xf32> -> vector<8x128xf32>
    %302 = arith.index_cast %295 : i32 to index
    %c0_94 = arith.constant 0 : index
    %c0_95 = arith.constant 0 : index
    %303 = vector.load %arg17[%302, %c0_94, %c0_95] : memref<8x8x128xf32, #tpu.memory_space<vmem>>, vector<1x8x128xf32>
    %304 = vector.shape_cast %303 : vector<1x8x128xf32> to vector<8x128xf32>
    %305 = arith.addf %301, %304 : vector<8x128xf32>
    %306 = vector.extract_strided_slice %300 {offsets = [0, 0], sizes = [8, 32], strides = [1, 1]} : vector<8x128xf32> to vector<8x32xf32>
    %307 = arith.negf %306 : vector<8x32xf32>
    %308 = math.exp %307 : vector<8x32xf32>
    %cst_96 = arith.constant 1.000000e+00 : f32
    %309 = vector.broadcast %cst_96 : f32 to vector<8x32xf32>
    %310 = arith.addf %309, %308 : vector<8x32xf32>
    %311 = arith.divf %309, %310 : vector<8x32xf32>
    %312 = vector.extract_strided_slice %300 {offsets = [0, 32], sizes = [8, 32], strides = [1, 1]} : vector<8x128xf32> to vector<8x32xf32>
    %313 = arith.negf %312 : vector<8x32xf32>
    %314 = math.exp %313 : vector<8x32xf32>
    %cst_97 = arith.constant 1.000000e+00 : f32
    %315 = vector.broadcast %cst_97 : f32 to vector<8x32xf32>
    %316 = arith.addf %315, %314 : vector<8x32xf32>
    %317 = arith.divf %315, %316 : vector<8x32xf32>
    %318 = vector.extract_strided_slice %300 {offsets = [0, 64], sizes = [8, 32], strides = [1, 1]} : vector<8x128xf32> to vector<8x32xf32>
    %319 = math.tanh %318 : vector<8x32xf32>
    %320 = vector.extract_strided_slice %300 {offsets = [0, 96], sizes = [8, 32], strides = [1, 1]} : vector<8x128xf32> to vector<8x32xf32>
    %321 = arith.negf %320 : vector<8x32xf32>
    %322 = math.exp %321 : vector<8x32xf32>
    %cst_98 = arith.constant 1.000000e+00 : f32
    %323 = vector.broadcast %cst_98 : f32 to vector<8x32xf32>
    %324 = arith.addf %323, %322 : vector<8x32xf32>
    %325 = arith.divf %323, %324 : vector<8x32xf32>
    %326 = arith.mulf %317, %259 : vector<8x32xf32>
    %327 = arith.mulf %311, %319 : vector<8x32xf32>
    %328 = arith.addf %326, %327 : vector<8x32xf32>
    %329 = math.tanh %328 : vector<8x32xf32>
    %330 = arith.mulf %325, %329 : vector<8x32xf32>
    %331 = vector.extract_strided_slice %305 {offsets = [0, 0], sizes = [8, 32], strides = [1, 1]} : vector<8x128xf32> to vector<8x32xf32>
    %332 = arith.negf %331 : vector<8x32xf32>
    %333 = math.exp %332 : vector<8x32xf32>
    %cst_99 = arith.constant 1.000000e+00 : f32
    %334 = vector.broadcast %cst_99 : f32 to vector<8x32xf32>
    %335 = arith.addf %334, %333 : vector<8x32xf32>
    %336 = arith.divf %334, %335 : vector<8x32xf32>
    %337 = vector.extract_strided_slice %305 {offsets = [0, 32], sizes = [8, 32], strides = [1, 1]} : vector<8x128xf32> to vector<8x32xf32>
    %338 = arith.negf %337 : vector<8x32xf32>
    %339 = math.exp %338 : vector<8x32xf32>
    %cst_100 = arith.constant 1.000000e+00 : f32
    %340 = vector.broadcast %cst_100 : f32 to vector<8x32xf32>
    %341 = arith.addf %340, %339 : vector<8x32xf32>
    %342 = arith.divf %340, %341 : vector<8x32xf32>
    %343 = vector.extract_strided_slice %305 {offsets = [0, 64], sizes = [8, 32], strides = [1, 1]} : vector<8x128xf32> to vector<8x32xf32>
    %344 = math.tanh %343 : vector<8x32xf32>
    %345 = vector.extract_strided_slice %305 {offsets = [0, 96], sizes = [8, 32], strides = [1, 1]} : vector<8x128xf32> to vector<8x32xf32>
    %346 = arith.negf %345 : vector<8x32xf32>
    %347 = math.exp %346 : vector<8x32xf32>
    %cst_101 = arith.constant 1.000000e+00 : f32
    %348 = vector.broadcast %cst_101 : f32 to vector<8x32xf32>
    %349 = arith.addf %348, %347 : vector<8x32xf32>
    %350 = arith.divf %348, %349 : vector<8x32xf32>
    %351 = arith.mulf %342, %284 : vector<8x32xf32>
    %352 = arith.mulf %336, %344 : vector<8x32xf32>
    %353 = arith.addf %351, %352 : vector<8x32xf32>
    %354 = math.tanh %353 : vector<8x32xf32>
    %355 = arith.mulf %350, %354 : vector<8x32xf32>
    %356 = arith.index_cast %c4_i32 : i32 to index
    %c0_102 = arith.constant 0 : index
    %c0_103 = arith.constant 0 : index
    %357 = vector.load %arg18[%356, %c0_102, %c0_103] : memref<8x8x32xf32, #tpu.memory_space<vmem>>, vector<1x8x32xf32>
    %358 = vector.shape_cast %357 : vector<1x8x32xf32> to vector<8x32xf32>
    %359 = vector.shape_cast %330 : vector<8x32xf32> to vector<1x8x32xf32>
    tpu.vector_store %arg18[%356, %c0_102, %c0_103], %359 {strides = array<i32>} : memref<8x8x32xf32, #tpu.memory_space<vmem>>, vector<1x8x32xf32>,
    %360 = arith.index_cast %295 : i32 to index
    %c0_104 = arith.constant 0 : index
    %c0_105 = arith.constant 0 : index
    %361 = vector.load %arg19[%360, %c0_104, %c0_105] : memref<8x8x32xf32, #tpu.memory_space<vmem>>, vector<1x8x32xf32>
    %362 = vector.shape_cast %361 : vector<1x8x32xf32> to vector<8x32xf32>
    %363 = vector.shape_cast %355 : vector<8x32xf32> to vector<1x8x32xf32>
    tpu.vector_store %arg19[%360, %c0_104, %c0_105], %363 {strides = array<i32>} : memref<8x8x32xf32, #tpu.memory_space<vmem>>, vector<1x8x32xf32>,
    %c5_i32 = arith.constant 5 : i32
    %c7_i32_106 = arith.constant 7 : i32
    %364 = arith.subi %c7_i32_106, %c5_i32 : i32
    %cst_107 = arith.constant dense<0.000000e+00> : vector<8x128xf32>
    %365 = tpu.matmul %330, %17, %cst_107 {dimension_numbers = #tpu.dot_dimension_numbers<[1], [0], [0], [1], [0, 0, 1, 1], [], []>} : vector<8x32xf32>, vector<32x128xf32>, vector<8x128xf32> -> vector<8x128xf32>
    %366 = arith.index_cast %c5_i32 : i32 to index
    %c0_108 = arith.constant 0 : index
    %c0_109 = arith.constant 0 : index
    %367 = vector.load %arg16[%366, %c0_108, %c0_109] : memref<8x8x128xf32, #tpu.memory_space<vmem>>, vector<1x8x128xf32>
    %368 = vector.shape_cast %367 : vector<1x8x128xf32> to vector<8x128xf32>
    %369 = arith.addf %365, %368 : vector<8x128xf32>
    %cst_110 = arith.constant dense<0.000000e+00> : vector<8x128xf32>
    %370 = tpu.matmul %355, %18, %cst_110 {dimension_numbers = #tpu.dot_dimension_numbers<[1], [0], [0], [1], [0, 0, 1, 1], [], []>} : vector<8x32xf32>, vector<32x128xf32>, vector<8x128xf32> -> vector<8x128xf32>
    %371 = arith.index_cast %364 : i32 to index
    %c0_111 = arith.constant 0 : index
    %c0_112 = arith.constant 0 : index
    %372 = vector.load %arg17[%371, %c0_111, %c0_112] : memref<8x8x128xf32, #tpu.memory_space<vmem>>, vector<1x8x128xf32>
    %373 = vector.shape_cast %372 : vector<1x8x128xf32> to vector<8x128xf32>
    %374 = arith.addf %370, %373 : vector<8x128xf32>
    %375 = vector.extract_strided_slice %369 {offsets = [0, 0], sizes = [8, 32], strides = [1, 1]} : vector<8x128xf32> to vector<8x32xf32>
    %376 = arith.negf %375 : vector<8x32xf32>
    %377 = math.exp %376 : vector<8x32xf32>
    %cst_113 = arith.constant 1.000000e+00 : f32
    %378 = vector.broadcast %cst_113 : f32 to vector<8x32xf32>
    %379 = arith.addf %378, %377 : vector<8x32xf32>
    %380 = arith.divf %378, %379 : vector<8x32xf32>
    %381 = vector.extract_strided_slice %369 {offsets = [0, 32], sizes = [8, 32], strides = [1, 1]} : vector<8x128xf32> to vector<8x32xf32>
    %382 = arith.negf %381 : vector<8x32xf32>
    %383 = math.exp %382 : vector<8x32xf32>
    %cst_114 = arith.constant 1.000000e+00 : f32
    %384 = vector.broadcast %cst_114 : f32 to vector<8x32xf32>
    %385 = arith.addf %384, %383 : vector<8x32xf32>
    %386 = arith.divf %384, %385 : vector<8x32xf32>
    %387 = vector.extract_strided_slice %369 {offsets = [0, 64], sizes = [8, 32], strides = [1, 1]} : vector<8x128xf32> to vector<8x32xf32>
    %388 = math.tanh %387 : vector<8x32xf32>
    %389 = vector.extract_strided_slice %369 {offsets = [0, 96], sizes = [8, 32], strides = [1, 1]} : vector<8x128xf32> to vector<8x32xf32>
    %390 = arith.negf %389 : vector<8x32xf32>
    %391 = math.exp %390 : vector<8x32xf32>
    %cst_115 = arith.constant 1.000000e+00 : f32
    %392 = vector.broadcast %cst_115 : f32 to vector<8x32xf32>
    %393 = arith.addf %392, %391 : vector<8x32xf32>
    %394 = arith.divf %392, %393 : vector<8x32xf32>
    %395 = arith.mulf %386, %328 : vector<8x32xf32>
    %396 = arith.mulf %380, %388 : vector<8x32xf32>
    %397 = arith.addf %395, %396 : vector<8x32xf32>
    %398 = math.tanh %397 : vector<8x32xf32>
    %399 = arith.mulf %394, %398 : vector<8x32xf32>
    %400 = vector.extract_strided_slice %374 {offsets = [0, 0], sizes = [8, 32], strides = [1, 1]} : vector<8x128xf32> to vector<8x32xf32>
    %401 = arith.negf %400 : vector<8x32xf32>
    %402 = math.exp %401 : vector<8x32xf32>
    %cst_116 = arith.constant 1.000000e+00 : f32
    %403 = vector.broadcast %cst_116 : f32 to vector<8x32xf32>
    %404 = arith.addf %403, %402 : vector<8x32xf32>
    %405 = arith.divf %403, %404 : vector<8x32xf32>
    %406 = vector.extract_strided_slice %374 {offsets = [0, 32], sizes = [8, 32], strides = [1, 1]} : vector<8x128xf32> to vector<8x32xf32>
    %407 = arith.negf %406 : vector<8x32xf32>
    %408 = math.exp %407 : vector<8x32xf32>
    %cst_117 = arith.constant 1.000000e+00 : f32
    %409 = vector.broadcast %cst_117 : f32 to vector<8x32xf32>
    %410 = arith.addf %409, %408 : vector<8x32xf32>
    %411 = arith.divf %409, %410 : vector<8x32xf32>
    %412 = vector.extract_strided_slice %374 {offsets = [0, 64], sizes = [8, 32], strides = [1, 1]} : vector<8x128xf32> to vector<8x32xf32>
    %413 = math.tanh %412 : vector<8x32xf32>
    %414 = vector.extract_strided_slice %374 {offsets = [0, 96], sizes = [8, 32], strides = [1, 1]} : vector<8x128xf32> to vector<8x32xf32>
    %415 = arith.negf %414 : vector<8x32xf32>
    %416 = math.exp %415 : vector<8x32xf32>
    %cst_118 = arith.constant 1.000000e+00 : f32
    %417 = vector.broadcast %cst_118 : f32 to vector<8x32xf32>
    %418 = arith.addf %417, %416 : vector<8x32xf32>
    %419 = arith.divf %417, %418 : vector<8x32xf32>
    %420 = arith.mulf %411, %353 : vector<8x32xf32>
    %421 = arith.mulf %405, %413 : vector<8x32xf32>
    %422 = arith.addf %420, %421 : vector<8x32xf32>
    %423 = math.tanh %422 : vector<8x32xf32>
    %424 = arith.mulf %419, %423 : vector<8x32xf32>
    %425 = arith.index_cast %c5_i32 : i32 to index
    %c0_119 = arith.constant 0 : index
    %c0_120 = arith.constant 0 : index
    %426 = vector.load %arg18[%425, %c0_119, %c0_120] : memref<8x8x32xf32, #tpu.memory_space<vmem>>, vector<1x8x32xf32>
    %427 = vector.shape_cast %426 : vector<1x8x32xf32> to vector<8x32xf32>
    %428 = vector.shape_cast %399 : vector<8x32xf32> to vector<1x8x32xf32>
    tpu.vector_store %arg18[%425, %c0_119, %c0_120], %428 {strides = array<i32>} : memref<8x8x32xf32, #tpu.memory_space<vmem>>, vector<1x8x32xf32>,
    %429 = arith.index_cast %364 : i32 to index
    %c0_121 = arith.constant 0 : index
    %c0_122 = arith.constant 0 : index
    %430 = vector.load %arg19[%429, %c0_121, %c0_122] : memref<8x8x32xf32, #tpu.memory_space<vmem>>, vector<1x8x32xf32>
    %431 = vector.shape_cast %430 : vector<1x8x32xf32> to vector<8x32xf32>
    %432 = vector.shape_cast %424 : vector<8x32xf32> to vector<1x8x32xf32>
    tpu.vector_store %arg19[%429, %c0_121, %c0_122], %432 {strides = array<i32>} : memref<8x8x32xf32, #tpu.memory_space<vmem>>, vector<1x8x32xf32>,
    %c6_i32 = arith.constant 6 : i32
    %c7_i32_123 = arith.constant 7 : i32
    %433 = arith.subi %c7_i32_123, %c6_i32 : i32
    %cst_124 = arith.constant dense<0.000000e+00> : vector<8x128xf32>
    %434 = tpu.matmul %399, %17, %cst_124 {dimension_numbers = #tpu.dot_dimension_numbers<[1], [0], [0], [1], [0, 0, 1, 1], [], []>} : vector<8x32xf32>, vector<32x128xf32>, vector<8x128xf32> -> vector<8x128xf32>
    %435 = arith.index_cast %c6_i32 : i32 to index
    %c0_125 = arith.constant 0 : index
    %c0_126 = arith.constant 0 : index
    %436 = vector.load %arg16[%435, %c0_125, %c0_126] : memref<8x8x128xf32, #tpu.memory_space<vmem>>, vector<1x8x128xf32>
    %437 = vector.shape_cast %436 : vector<1x8x128xf32> to vector<8x128xf32>
    %438 = arith.addf %434, %437 : vector<8x128xf32>
    %cst_127 = arith.constant dense<0.000000e+00> : vector<8x128xf32>
    %439 = tpu.matmul %424, %18, %cst_127 {dimension_numbers = #tpu.dot_dimension_numbers<[1], [0], [0], [1], [0, 0, 1, 1], [], []>} : vector<8x32xf32>, vector<32x128xf32>, vector<8x128xf32> -> vector<8x128xf32>
    %440 = arith.index_cast %433 : i32 to index
    %c0_128 = arith.constant 0 : index
    %c0_129 = arith.constant 0 : index
    %441 = vector.load %arg17[%440, %c0_128, %c0_129] : memref<8x8x128xf32, #tpu.memory_space<vmem>>, vector<1x8x128xf32>
    %442 = vector.shape_cast %441 : vector<1x8x128xf32> to vector<8x128xf32>
    %443 = arith.addf %439, %442 : vector<8x128xf32>
    %444 = vector.extract_strided_slice %438 {offsets = [0, 0], sizes = [8, 32], strides = [1, 1]} : vector<8x128xf32> to vector<8x32xf32>
    %445 = arith.negf %444 : vector<8x32xf32>
    %446 = math.exp %445 : vector<8x32xf32>
    %cst_130 = arith.constant 1.000000e+00 : f32
    %447 = vector.broadcast %cst_130 : f32 to vector<8x32xf32>
    %448 = arith.addf %447, %446 : vector<8x32xf32>
    %449 = arith.divf %447, %448 : vector<8x32xf32>
    %450 = vector.extract_strided_slice %438 {offsets = [0, 32], sizes = [8, 32], strides = [1, 1]} : vector<8x128xf32> to vector<8x32xf32>
    %451 = arith.negf %450 : vector<8x32xf32>
    %452 = math.exp %451 : vector<8x32xf32>
    %cst_131 = arith.constant 1.000000e+00 : f32
    %453 = vector.broadcast %cst_131 : f32 to vector<8x32xf32>
    %454 = arith.addf %453, %452 : vector<8x32xf32>
    %455 = arith.divf %453, %454 : vector<8x32xf32>
    %456 = vector.extract_strided_slice %438 {offsets = [0, 64], sizes = [8, 32], strides = [1, 1]} : vector<8x128xf32> to vector<8x32xf32>
    %457 = math.tanh %456 : vector<8x32xf32>
    %458 = vector.extract_strided_slice %438 {offsets = [0, 96], sizes = [8, 32], strides = [1, 1]} : vector<8x128xf32> to vector<8x32xf32>
    %459 = arith.negf %458 : vector<8x32xf32>
    %460 = math.exp %459 : vector<8x32xf32>
    %cst_132 = arith.constant 1.000000e+00 : f32
    %461 = vector.broadcast %cst_132 : f32 to vector<8x32xf32>
    %462 = arith.addf %461, %460 : vector<8x32xf32>
    %463 = arith.divf %461, %462 : vector<8x32xf32>
    %464 = arith.mulf %455, %397 : vector<8x32xf32>
    %465 = arith.mulf %449, %457 : vector<8x32xf32>
    %466 = arith.addf %464, %465 : vector<8x32xf32>
    %467 = math.tanh %466 : vector<8x32xf32>
    %468 = arith.mulf %463, %467 : vector<8x32xf32>
    %469 = vector.extract_strided_slice %443 {offsets = [0, 0], sizes = [8, 32], strides = [1, 1]} : vector<8x128xf32> to vector<8x32xf32>
    %470 = arith.negf %469 : vector<8x32xf32>
    %471 = math.exp %470 : vector<8x32xf32>
    %cst_133 = arith.constant 1.000000e+00 : f32
    %472 = vector.broadcast %cst_133 : f32 to vector<8x32xf32>
    %473 = arith.addf %472, %471 : vector<8x32xf32>
    %474 = arith.divf %472, %473 : vector<8x32xf32>
    %475 = vector.extract_strided_slice %443 {offsets = [0, 32], sizes = [8, 32], strides = [1, 1]} : vector<8x128xf32> to vector<8x32xf32>
    %476 = arith.negf %475 : vector<8x32xf32>
    %477 = math.exp %476 : vector<8x32xf32>
    %cst_134 = arith.constant 1.000000e+00 : f32
    %478 = vector.broadcast %cst_134 : f32 to vector<8x32xf32>
    %479 = arith.addf %478, %477 : vector<8x32xf32>
    %480 = arith.divf %478, %479 : vector<8x32xf32>
    %481 = vector.extract_strided_slice %443 {offsets = [0, 64], sizes = [8, 32], strides = [1, 1]} : vector<8x128xf32> to vector<8x32xf32>
    %482 = math.tanh %481 : vector<8x32xf32>
    %483 = vector.extract_strided_slice %443 {offsets = [0, 96], sizes = [8, 32], strides = [1, 1]} : vector<8x128xf32> to vector<8x32xf32>
    %484 = arith.negf %483 : vector<8x32xf32>
    %485 = math.exp %484 : vector<8x32xf32>
    %cst_135 = arith.constant 1.000000e+00 : f32
    %486 = vector.broadcast %cst_135 : f32 to vector<8x32xf32>
    %487 = arith.addf %486, %485 : vector<8x32xf32>
    %488 = arith.divf %486, %487 : vector<8x32xf32>
    %489 = arith.mulf %480, %422 : vector<8x32xf32>
    %490 = arith.mulf %474, %482 : vector<8x32xf32>
    %491 = arith.addf %489, %490 : vector<8x32xf32>
    %492 = math.tanh %491 : vector<8x32xf32>
    %493 = arith.mulf %488, %492 : vector<8x32xf32>
    %494 = arith.index_cast %c6_i32 : i32 to index
    %c0_136 = arith.constant 0 : index
    %c0_137 = arith.constant 0 : index
    %495 = vector.load %arg18[%494, %c0_136, %c0_137] : memref<8x8x32xf32, #tpu.memory_space<vmem>>, vector<1x8x32xf32>
    %496 = vector.shape_cast %495 : vector<1x8x32xf32> to vector<8x32xf32>
    %497 = vector.shape_cast %468 : vector<8x32xf32> to vector<1x8x32xf32>
    tpu.vector_store %arg18[%494, %c0_136, %c0_137], %497 {strides = array<i32>} : memref<8x8x32xf32, #tpu.memory_space<vmem>>, vector<1x8x32xf32>,
    %498 = arith.index_cast %433 : i32 to index
    %c0_138 = arith.constant 0 : index
    %c0_139 = arith.constant 0 : index
    %499 = vector.load %arg19[%498, %c0_138, %c0_139] : memref<8x8x32xf32, #tpu.memory_space<vmem>>, vector<1x8x32xf32>
    %500 = vector.shape_cast %499 : vector<1x8x32xf32> to vector<8x32xf32>
    %501 = vector.shape_cast %493 : vector<8x32xf32> to vector<1x8x32xf32>
    tpu.vector_store %arg19[%498, %c0_138, %c0_139], %501 {strides = array<i32>} : memref<8x8x32xf32, #tpu.memory_space<vmem>>, vector<1x8x32xf32>,
    %c7_i32_140 = arith.constant 7 : i32
    %c7_i32_141 = arith.constant 7 : i32
    %502 = arith.subi %c7_i32_141, %c7_i32_140 : i32
    %cst_142 = arith.constant dense<0.000000e+00> : vector<8x128xf32>
    %503 = tpu.matmul %468, %17, %cst_142 {dimension_numbers = #tpu.dot_dimension_numbers<[1], [0], [0], [1], [0, 0, 1, 1], [], []>} : vector<8x32xf32>, vector<32x128xf32>, vector<8x128xf32> -> vector<8x128xf32>
    %504 = arith.index_cast %c7_i32_140 : i32 to index
    %c0_143 = arith.constant 0 : index
    %c0_144 = arith.constant 0 : index
    %505 = vector.load %arg16[%504, %c0_143, %c0_144] : memref<8x8x128xf32, #tpu.memory_space<vmem>>, vector<1x8x128xf32>
    %506 = vector.shape_cast %505 : vector<1x8x128xf32> to vector<8x128xf32>
    %507 = arith.addf %503, %506 : vector<8x128xf32>
    %cst_145 = arith.constant dense<0.000000e+00> : vector<8x128xf32>
    %508 = tpu.matmul %493, %18, %cst_145 {dimension_numbers = #tpu.dot_dimension_numbers<[1], [0], [0], [1], [0, 0, 1, 1], [], []>} : vector<8x32xf32>, vector<32x128xf32>, vector<8x128xf32> -> vector<8x128xf32>
    %509 = arith.index_cast %502 : i32 to index
    %c0_146 = arith.constant 0 : index
    %c0_147 = arith.constant 0 : index
    %510 = vector.load %arg17[%509, %c0_146, %c0_147] : memref<8x8x128xf32, #tpu.memory_space<vmem>>, vector<1x8x128xf32>
    %511 = vector.shape_cast %510 : vector<1x8x128xf32> to vector<8x128xf32>
    %512 = arith.addf %508, %511 : vector<8x128xf32>
    %513 = vector.extract_strided_slice %507 {offsets = [0, 0], sizes = [8, 32], strides = [1, 1]} : vector<8x128xf32> to vector<8x32xf32>
    %514 = arith.negf %513 : vector<8x32xf32>
    %515 = math.exp %514 : vector<8x32xf32>
    %cst_148 = arith.constant 1.000000e+00 : f32
    %516 = vector.broadcast %cst_148 : f32 to vector<8x32xf32>
    %517 = arith.addf %516, %515 : vector<8x32xf32>
    %518 = arith.divf %516, %517 : vector<8x32xf32>
    %519 = vector.extract_strided_slice %507 {offsets = [0, 32], sizes = [8, 32], strides = [1, 1]} : vector<8x128xf32> to vector<8x32xf32>
    %520 = arith.negf %519 : vector<8x32xf32>
    %521 = math.exp %520 : vector<8x32xf32>
    %cst_149 = arith.constant 1.000000e+00 : f32
    %522 = vector.broadcast %cst_149 : f32 to vector<8x32xf32>
    %523 = arith.addf %522, %521 : vector<8x32xf32>
    %524 = arith.divf %522, %523 : vector<8x32xf32>
    %525 = vector.extract_strided_slice %507 {offsets = [0, 64], sizes = [8, 32], strides = [1, 1]} : vector<8x128xf32> to vector<8x32xf32>
    %526 = math.tanh %525 : vector<8x32xf32>
    %527 = vector.extract_strided_slice %507 {offsets = [0, 96], sizes = [8, 32], strides = [1, 1]} : vector<8x128xf32> to vector<8x32xf32>
    %528 = arith.negf %527 : vector<8x32xf32>
    %529 = math.exp %528 : vector<8x32xf32>
    %cst_150 = arith.constant 1.000000e+00 : f32
    %530 = vector.broadcast %cst_150 : f32 to vector<8x32xf32>
    %531 = arith.addf %530, %529 : vector<8x32xf32>
    %532 = arith.divf %530, %531 : vector<8x32xf32>
    %533 = arith.mulf %524, %466 : vector<8x32xf32>
    %534 = arith.mulf %518, %526 : vector<8x32xf32>
    %535 = arith.addf %533, %534 : vector<8x32xf32>
    %536 = math.tanh %535 : vector<8x32xf32>
    %537 = arith.mulf %532, %536 : vector<8x32xf32>
    %538 = vector.extract_strided_slice %512 {offsets = [0, 0], sizes = [8, 32], strides = [1, 1]} : vector<8x128xf32> to vector<8x32xf32>
    %539 = arith.negf %538 : vector<8x32xf32>
    %540 = math.exp %539 : vector<8x32xf32>
    %cst_151 = arith.constant 1.000000e+00 : f32
    %541 = vector.broadcast %cst_151 : f32 to vector<8x32xf32>
    %542 = arith.addf %541, %540 : vector<8x32xf32>
    %543 = arith.divf %541, %542 : vector<8x32xf32>
    %544 = vector.extract_strided_slice %512 {offsets = [0, 32], sizes = [8, 32], strides = [1, 1]} : vector<8x128xf32> to vector<8x32xf32>
    %545 = arith.negf %544 : vector<8x32xf32>
    %546 = math.exp %545 : vector<8x32xf32>
    %cst_152 = arith.constant 1.000000e+00 : f32
    %547 = vector.broadcast %cst_152 : f32 to vector<8x32xf32>
    %548 = arith.addf %547, %546 : vector<8x32xf32>
    %549 = arith.divf %547, %548 : vector<8x32xf32>
    %550 = vector.extract_strided_slice %512 {offsets = [0, 64], sizes = [8, 32], strides = [1, 1]} : vector<8x128xf32> to vector<8x32xf32>
    %551 = math.tanh %550 : vector<8x32xf32>
    %552 = vector.extract_strided_slice %512 {offsets = [0, 96], sizes = [8, 32], strides = [1, 1]} : vector<8x128xf32> to vector<8x32xf32>
    %553 = arith.negf %552 : vector<8x32xf32>
    %554 = math.exp %553 : vector<8x32xf32>
    %cst_153 = arith.constant 1.000000e+00 : f32
    %555 = vector.broadcast %cst_153 : f32 to vector<8x32xf32>
    %556 = arith.addf %555, %554 : vector<8x32xf32>
    %557 = arith.divf %555, %556 : vector<8x32xf32>
    %558 = arith.mulf %549, %491 : vector<8x32xf32>
    %559 = arith.mulf %543, %551 : vector<8x32xf32>
    %560 = arith.addf %558, %559 : vector<8x32xf32>
    %561 = math.tanh %560 : vector<8x32xf32>
    %562 = arith.mulf %557, %561 : vector<8x32xf32>
    %563 = arith.index_cast %c7_i32_140 : i32 to index
    %c0_154 = arith.constant 0 : index
    %c0_155 = arith.constant 0 : index
    %564 = vector.load %arg18[%563, %c0_154, %c0_155] : memref<8x8x32xf32, #tpu.memory_space<vmem>>, vector<1x8x32xf32>
    %565 = vector.shape_cast %564 : vector<1x8x32xf32> to vector<8x32xf32>
    %566 = vector.shape_cast %537 : vector<8x32xf32> to vector<1x8x32xf32>
    tpu.vector_store %arg18[%563, %c0_154, %c0_155], %566 {strides = array<i32>} : memref<8x8x32xf32, #tpu.memory_space<vmem>>, vector<1x8x32xf32>,
    %567 = arith.index_cast %502 : i32 to index
    %c0_156 = arith.constant 0 : index
    %c0_157 = arith.constant 0 : index
    %568 = vector.load %arg19[%567, %c0_156, %c0_157] : memref<8x8x32xf32, #tpu.memory_space<vmem>>, vector<1x8x32xf32>
    %569 = vector.shape_cast %568 : vector<1x8x32xf32> to vector<8x32xf32>
    %570 = vector.shape_cast %562 : vector<8x32xf32> to vector<1x8x32xf32>
    tpu.vector_store %arg19[%567, %c0_156, %c0_157], %570 {strides = array<i32>} : memref<8x8x32xf32, #tpu.memory_space<vmem>>, vector<1x8x32xf32>,
    %c8_i32 = arith.constant 8 : i32
    %c0_158 = arith.constant 0 : index
    %c0_159 = arith.constant 0 : index
    %571 = vector.load %arg8[%c0_158, %c0_159] : memref<64x128xf32, #tpu.memory_space<vmem>>, vector<64x128xf32>
    %c0_160 = arith.constant 0 : index
    %c0_161 = arith.constant 0 : index
    %c0_162 = arith.constant 0 : index
    %572 = vector.load %arg18[%c0_160, %c0_161, %c0_162] : memref<8x8x32xf32, #tpu.memory_space<vmem>>, vector<8x8x32xf32>
    %573 = vector.shape_cast %572 : vector<8x8x32xf32> to vector<64x32xf32>
    %c0_163 = arith.constant 0 : index
    %c0_164 = arith.constant 0 : index
    %c0_165 = arith.constant 0 : index
    %574 = vector.load %arg19[%c0_163, %c0_164, %c0_165] : memref<8x8x32xf32, #tpu.memory_space<vmem>>, vector<8x8x32xf32>
    %575 = vector.shape_cast %574 : vector<8x8x32xf32> to vector<64x32xf32>
    %576 = vector.extract_strided_slice %571 {offsets = [0, 0], sizes = [32, 128], strides = [1, 1]} : vector<64x128xf32> to vector<32x128xf32>
    %cst_166 = arith.constant dense<0.000000e+00> : vector<64x128xf32>
    %577 = tpu.matmul %573, %576, %cst_166 {dimension_numbers = #tpu.dot_dimension_numbers<[1], [0], [0], [1], [0, 0, 1, 1], [], []>} : vector<64x32xf32>, vector<32x128xf32>, vector<64x128xf32> -> vector<64x128xf32>
    %578 = vector.extract_strided_slice %571 {offsets = [32, 0], sizes = [32, 128], strides = [1, 1]} : vector<64x128xf32> to vector<32x128xf32>
    %cst_167 = arith.constant dense<0.000000e+00> : vector<64x128xf32>
    %579 = tpu.matmul %575, %578, %cst_167 {dimension_numbers = #tpu.dot_dimension_numbers<[1], [0], [0], [1], [0, 0, 1, 1], [], []>} : vector<64x32xf32>, vector<32x128xf32>, vector<64x128xf32> -> vector<64x128xf32>
    %580 = arith.addf %577, %579 : vector<64x128xf32>
    %c0_168 = arith.constant 0 : index
    %c0_169 = arith.constant 0 : index
    %581 = vector.load %arg10[%c0_168, %c0_169] : memref<1x128xf32, #tpu.memory_space<vmem>>, vector<1x128xf32>
    %582 = vector.broadcast %581 : vector<1x128xf32> to vector<64x128xf32>
    %583 = arith.addf %580, %582 : vector<64x128xf32>
    %584 = vector.shape_cast %583 : vector<64x128xf32> to vector<8x8x128xf32>
    %c0_170 = arith.constant 0 : index
    %c0_171 = arith.constant 0 : index
    %c0_172 = arith.constant 0 : index
    %585 = vector.load %arg20[%c0_170, %c0_171, %c0_172] : memref<8x8x128xf32, #tpu.memory_space<vmem>>, vector<8x8x128xf32>
    tpu.vector_store %arg20[%c0_170, %c0_171, %c0_172], %584 {strides = array<i32>} : memref<8x8x128xf32, #tpu.memory_space<vmem>>, vector<8x8x128xf32>,
    %c0_173 = arith.constant 0 : index
    %c0_174 = arith.constant 0 : index
    %586 = vector.load %arg9[%c0_173, %c0_174] : memref<32x128xf32, #tpu.memory_space<vmem>>, vector<32x128xf32>
    %c0_i32_175 = arith.constant 0 : i32
    %cst_176 = arith.constant dense<0.000000e+00> : vector<8x128xf32>
    %587 = tpu.matmul %16, %586, %cst_176 {dimension_numbers = #tpu.dot_dimension_numbers<[1], [0], [0], [1], [0, 0, 1, 1], [], []>} : vector<8x32xf32>, vector<32x128xf32>, vector<8x128xf32> -> vector<8x128xf32>
    %588 = arith.index_cast %c0_i32_175 : i32 to index
    %c0_177 = arith.constant 0 : index
    %c0_178 = arith.constant 0 : index
    %589 = vector.load %arg20[%588, %c0_177, %c0_178] : memref<8x8x128xf32, #tpu.memory_space<vmem>>, vector<1x8x128xf32>
    %590 = vector.shape_cast %589 : vector<1x8x128xf32> to vector<8x128xf32>
    %591 = arith.addf %587, %590 : vector<8x128xf32>
    %592 = vector.extract_strided_slice %591 {offsets = [0, 0], sizes = [8, 32], strides = [1, 1]} : vector<8x128xf32> to vector<8x32xf32>
    %593 = arith.negf %592 : vector<8x32xf32>
    %594 = math.exp %593 : vector<8x32xf32>
    %cst_179 = arith.constant 1.000000e+00 : f32
    %595 = vector.broadcast %cst_179 : f32 to vector<8x32xf32>
    %596 = arith.addf %595, %594 : vector<8x32xf32>
    %597 = arith.divf %595, %596 : vector<8x32xf32>
    %598 = vector.extract_strided_slice %591 {offsets = [0, 32], sizes = [8, 32], strides = [1, 1]} : vector<8x128xf32> to vector<8x32xf32>
    %599 = arith.negf %598 : vector<8x32xf32>
    %600 = math.exp %599 : vector<8x32xf32>
    %cst_180 = arith.constant 1.000000e+00 : f32
    %601 = vector.broadcast %cst_180 : f32 to vector<8x32xf32>
    %602 = arith.addf %601, %600 : vector<8x32xf32>
    %603 = arith.divf %601, %602 : vector<8x32xf32>
    %604 = vector.extract_strided_slice %591 {offsets = [0, 64], sizes = [8, 32], strides = [1, 1]} : vector<8x128xf32> to vector<8x32xf32>
    %605 = math.tanh %604 : vector<8x32xf32>
    %606 = vector.extract_strided_slice %591 {offsets = [0, 96], sizes = [8, 32], strides = [1, 1]} : vector<8x128xf32> to vector<8x32xf32>
    %607 = arith.negf %606 : vector<8x32xf32>
    %608 = math.exp %607 : vector<8x32xf32>
    %cst_181 = arith.constant 1.000000e+00 : f32
    %609 = vector.broadcast %cst_181 : f32 to vector<8x32xf32>
    %610 = arith.addf %609, %608 : vector<8x32xf32>
    %611 = arith.divf %609, %610 : vector<8x32xf32>
    %612 = arith.mulf %603, %16 : vector<8x32xf32>
    %613 = arith.mulf %597, %605 : vector<8x32xf32>
    %614 = arith.addf %612, %613 : vector<8x32xf32>
    %615 = math.tanh %614 : vector<8x32xf32>
    %616 = arith.mulf %611, %615 : vector<8x32xf32>
    %c1_i32_182 = arith.constant 1 : i32
    %cst_183 = arith.constant dense<0.000000e+00> : vector<8x128xf32>
    %617 = tpu.matmul %616, %586, %cst_183 {dimension_numbers = #tpu.dot_dimension_numbers<[1], [0], [0], [1], [0, 0, 1, 1], [], []>} : vector<8x32xf32>, vector<32x128xf32>, vector<8x128xf32> -> vector<8x128xf32>
    %618 = arith.index_cast %c1_i32_182 : i32 to index
    %c0_184 = arith.constant 0 : index
    %c0_185 = arith.constant 0 : index
    %619 = vector.load %arg20[%618, %c0_184, %c0_185] : memref<8x8x128xf32, #tpu.memory_space<vmem>>, vector<1x8x128xf32>
    %620 = vector.shape_cast %619 : vector<1x8x128xf32> to vector<8x128xf32>
    %621 = arith.addf %617, %620 : vector<8x128xf32>
    %622 = vector.extract_strided_slice %621 {offsets = [0, 0], sizes = [8, 32], strides = [1, 1]} : vector<8x128xf32> to vector<8x32xf32>
    %623 = arith.negf %622 : vector<8x32xf32>
    %624 = math.exp %623 : vector<8x32xf32>
    %cst_186 = arith.constant 1.000000e+00 : f32
    %625 = vector.broadcast %cst_186 : f32 to vector<8x32xf32>
    %626 = arith.addf %625, %624 : vector<8x32xf32>
    %627 = arith.divf %625, %626 : vector<8x32xf32>
    %628 = vector.extract_strided_slice %621 {offsets = [0, 32], sizes = [8, 32], strides = [1, 1]} : vector<8x128xf32> to vector<8x32xf32>
    %629 = arith.negf %628 : vector<8x32xf32>
    %630 = math.exp %629 : vector<8x32xf32>
    %cst_187 = arith.constant 1.000000e+00 : f32
    %631 = vector.broadcast %cst_187 : f32 to vector<8x32xf32>
    %632 = arith.addf %631, %630 : vector<8x32xf32>
    %633 = arith.divf %631, %632 : vector<8x32xf32>
    %634 = vector.extract_strided_slice %621 {offsets = [0, 64], sizes = [8, 32], strides = [1, 1]} : vector<8x128xf32> to vector<8x32xf32>
    %635 = math.tanh %634 : vector<8x32xf32>
    %636 = vector.extract_strided_slice %621 {offsets = [0, 96], sizes = [8, 32], strides = [1, 1]} : vector<8x128xf32> to vector<8x32xf32>
    %637 = arith.negf %636 : vector<8x32xf32>
    %638 = math.exp %637 : vector<8x32xf32>
    %cst_188 = arith.constant 1.000000e+00 : f32
    %639 = vector.broadcast %cst_188 : f32 to vector<8x32xf32>
    %640 = arith.addf %639, %638 : vector<8x32xf32>
    %641 = arith.divf %639, %640 : vector<8x32xf32>
    %642 = arith.mulf %633, %614 : vector<8x32xf32>
    %643 = arith.mulf %627, %635 : vector<8x32xf32>
    %644 = arith.addf %642, %643 : vector<8x32xf32>
    %645 = math.tanh %644 : vector<8x32xf32>
    %646 = arith.mulf %641, %645 : vector<8x32xf32>
    %c2_i32_189 = arith.constant 2 : i32
    %cst_190 = arith.constant dense<0.000000e+00> : vector<8x128xf32>
    %647 = tpu.matmul %646, %586, %cst_190 {dimension_numbers = #tpu.dot_dimension_numbers<[1], [0], [0], [1], [0, 0, 1, 1], [], []>} : vector<8x32xf32>, vector<32x128xf32>, vector<8x128xf32> -> vector<8x128xf32>
    %648 = arith.index_cast %c2_i32_189 : i32 to index
    %c0_191 = arith.constant 0 : index
    %c0_192 = arith.constant 0 : index
    %649 = vector.load %arg20[%648, %c0_191, %c0_192] : memref<8x8x128xf32, #tpu.memory_space<vmem>>, vector<1x8x128xf32>
    %650 = vector.shape_cast %649 : vector<1x8x128xf32> to vector<8x128xf32>
    %651 = arith.addf %647, %650 : vector<8x128xf32>
    %652 = vector.extract_strided_slice %651 {offsets = [0, 0], sizes = [8, 32], strides = [1, 1]} : vector<8x128xf32> to vector<8x32xf32>
    %653 = arith.negf %652 : vector<8x32xf32>
    %654 = math.exp %653 : vector<8x32xf32>
    %cst_193 = arith.constant 1.000000e+00 : f32
    %655 = vector.broadcast %cst_193 : f32 to vector<8x32xf32>
    %656 = arith.addf %655, %654 : vector<8x32xf32>
    %657 = arith.divf %655, %656 : vector<8x32xf32>
    %658 = vector.extract_strided_slice %651 {offsets = [0, 32], sizes = [8, 32], strides = [1, 1]} : vector<8x128xf32> to vector<8x32xf32>
    %659 = arith.negf %658 : vector<8x32xf32>
    %660 = math.exp %659 : vector<8x32xf32>
    %cst_194 = arith.constant 1.000000e+00 : f32
    %661 = vector.broadcast %cst_194 : f32 to vector<8x32xf32>
    %662 = arith.addf %661, %660 : vector<8x32xf32>
    %663 = arith.divf %661, %662 : vector<8x32xf32>
    %664 = vector.extract_strided_slice %651 {offsets = [0, 64], sizes = [8, 32], strides = [1, 1]} : vector<8x128xf32> to vector<8x32xf32>
    %665 = math.tanh %664 : vector<8x32xf32>
    %666 = vector.extract_strided_slice %651 {offsets = [0, 96], sizes = [8, 32], strides = [1, 1]} : vector<8x128xf32> to vector<8x32xf32>
    %667 = arith.negf %666 : vector<8x32xf32>
    %668 = math.exp %667 : vector<8x32xf32>
    %cst_195 = arith.constant 1.000000e+00 : f32
    %669 = vector.broadcast %cst_195 : f32 to vector<8x32xf32>
    %670 = arith.addf %669, %668 : vector<8x32xf32>
    %671 = arith.divf %669, %670 : vector<8x32xf32>
    %672 = arith.mulf %663, %644 : vector<8x32xf32>
    %673 = arith.mulf %657, %665 : vector<8x32xf32>
    %674 = arith.addf %672, %673 : vector<8x32xf32>
    %675 = math.tanh %674 : vector<8x32xf32>
    %676 = arith.mulf %671, %675 : vector<8x32xf32>
    %c3_i32_196 = arith.constant 3 : i32
    %cst_197 = arith.constant dense<0.000000e+00> : vector<8x128xf32>
    %677 = tpu.matmul %676, %586, %cst_197 {dimension_numbers = #tpu.dot_dimension_numbers<[1], [0], [0], [1], [0, 0, 1, 1], [], []>} : vector<8x32xf32>, vector<32x128xf32>, vector<8x128xf32> -> vector<8x128xf32>
    %678 = arith.index_cast %c3_i32_196 : i32 to index
    %c0_198 = arith.constant 0 : index
    %c0_199 = arith.constant 0 : index
    %679 = vector.load %arg20[%678, %c0_198, %c0_199] : memref<8x8x128xf32, #tpu.memory_space<vmem>>, vector<1x8x128xf32>
    %680 = vector.shape_cast %679 : vector<1x8x128xf32> to vector<8x128xf32>
    %681 = arith.addf %677, %680 : vector<8x128xf32>
    %682 = vector.extract_strided_slice %681 {offsets = [0, 0], sizes = [8, 32], strides = [1, 1]} : vector<8x128xf32> to vector<8x32xf32>
    %683 = arith.negf %682 : vector<8x32xf32>
    %684 = math.exp %683 : vector<8x32xf32>
    %cst_200 = arith.constant 1.000000e+00 : f32
    %685 = vector.broadcast %cst_200 : f32 to vector<8x32xf32>
    %686 = arith.addf %685, %684 : vector<8x32xf32>
    %687 = arith.divf %685, %686 : vector<8x32xf32>
    %688 = vector.extract_strided_slice %681 {offsets = [0, 32], sizes = [8, 32], strides = [1, 1]} : vector<8x128xf32> to vector<8x32xf32>
    %689 = arith.negf %688 : vector<8x32xf32>
    %690 = math.exp %689 : vector<8x32xf32>
    %cst_201 = arith.constant 1.000000e+00 : f32
    %691 = vector.broadcast %cst_201 : f32 to vector<8x32xf32>
    %692 = arith.addf %691, %690 : vector<8x32xf32>
    %693 = arith.divf %691, %692 : vector<8x32xf32>
    %694 = vector.extract_strided_slice %681 {offsets = [0, 64], sizes = [8, 32], strides = [1, 1]} : vector<8x128xf32> to vector<8x32xf32>
    %695 = math.tanh %694 : vector<8x32xf32>
    %696 = vector.extract_strided_slice %681 {offsets = [0, 96], sizes = [8, 32], strides = [1, 1]} : vector<8x128xf32> to vector<8x32xf32>
    %697 = arith.negf %696 : vector<8x32xf32>
    %698 = math.exp %697 : vector<8x32xf32>
    %cst_202 = arith.constant 1.000000e+00 : f32
    %699 = vector.broadcast %cst_202 : f32 to vector<8x32xf32>
    %700 = arith.addf %699, %698 : vector<8x32xf32>
    %701 = arith.divf %699, %700 : vector<8x32xf32>
    %702 = arith.mulf %693, %674 : vector<8x32xf32>
    %703 = arith.mulf %687, %695 : vector<8x32xf32>
    %704 = arith.addf %702, %703 : vector<8x32xf32>
    %705 = math.tanh %704 : vector<8x32xf32>
    %706 = arith.mulf %701, %705 : vector<8x32xf32>
    %c4_i32_203 = arith.constant 4 : i32
    %cst_204 = arith.constant dense<0.000000e+00> : vector<8x128xf32>
    %707 = tpu.matmul %706, %586, %cst_204 {dimension_numbers = #tpu.dot_dimension_numbers<[1], [0], [0], [1], [0, 0, 1, 1], [], []>} : vector<8x32xf32>, vector<32x128xf32>, vector<8x128xf32> -> vector<8x128xf32>
    %708 = arith.index_cast %c4_i32_203 : i32 to index
    %c0_205 = arith.constant 0 : index
    %c0_206 = arith.constant 0 : index
    %709 = vector.load %arg20[%708, %c0_205, %c0_206] : memref<8x8x128xf32, #tpu.memory_space<vmem>>, vector<1x8x128xf32>
    %710 = vector.shape_cast %709 : vector<1x8x128xf32> to vector<8x128xf32>
    %711 = arith.addf %707, %710 : vector<8x128xf32>
    %712 = vector.extract_strided_slice %711 {offsets = [0, 0], sizes = [8, 32], strides = [1, 1]} : vector<8x128xf32> to vector<8x32xf32>
    %713 = arith.negf %712 : vector<8x32xf32>
    %714 = math.exp %713 : vector<8x32xf32>
    %cst_207 = arith.constant 1.000000e+00 : f32
    %715 = vector.broadcast %cst_207 : f32 to vector<8x32xf32>
    %716 = arith.addf %715, %714 : vector<8x32xf32>
    %717 = arith.divf %715, %716 : vector<8x32xf32>
    %718 = vector.extract_strided_slice %711 {offsets = [0, 32], sizes = [8, 32], strides = [1, 1]} : vector<8x128xf32> to vector<8x32xf32>
    %719 = arith.negf %718 : vector<8x32xf32>
    %720 = math.exp %719 : vector<8x32xf32>
    %cst_208 = arith.constant 1.000000e+00 : f32
    %721 = vector.broadcast %cst_208 : f32 to vector<8x32xf32>
    %722 = arith.addf %721, %720 : vector<8x32xf32>
    %723 = arith.divf %721, %722 : vector<8x32xf32>
    %724 = vector.extract_strided_slice %711 {offsets = [0, 64], sizes = [8, 32], strides = [1, 1]} : vector<8x128xf32> to vector<8x32xf32>
    %725 = math.tanh %724 : vector<8x32xf32>
    %726 = vector.extract_strided_slice %711 {offsets = [0, 96], sizes = [8, 32], strides = [1, 1]} : vector<8x128xf32> to vector<8x32xf32>
    %727 = arith.negf %726 : vector<8x32xf32>
    %728 = math.exp %727 : vector<8x32xf32>
    %cst_209 = arith.constant 1.000000e+00 : f32
    %729 = vector.broadcast %cst_209 : f32 to vector<8x32xf32>
    %730 = arith.addf %729, %728 : vector<8x32xf32>
    %731 = arith.divf %729, %730 : vector<8x32xf32>
    %732 = arith.mulf %723, %704 : vector<8x32xf32>
    %733 = arith.mulf %717, %725 : vector<8x32xf32>
    %734 = arith.addf %732, %733 : vector<8x32xf32>
    %735 = math.tanh %734 : vector<8x32xf32>
    %736 = arith.mulf %731, %735 : vector<8x32xf32>
    %c5_i32_210 = arith.constant 5 : i32
    %cst_211 = arith.constant dense<0.000000e+00> : vector<8x128xf32>
    %737 = tpu.matmul %736, %586, %cst_211 {dimension_numbers = #tpu.dot_dimension_numbers<[1], [0], [0], [1], [0, 0, 1, 1], [], []>} : vector<8x32xf32>, vector<32x128xf32>, vector<8x128xf32> -> vector<8x128xf32>
    %738 = arith.index_cast %c5_i32_210 : i32 to index
    %c0_212 = arith.constant 0 : index
    %c0_213 = arith.constant 0 : index
    %739 = vector.load %arg20[%738, %c0_212, %c0_213] : memref<8x8x128xf32, #tpu.memory_space<vmem>>, vector<1x8x128xf32>
    %740 = vector.shape_cast %739 : vector<1x8x128xf32> to vector<8x128xf32>
    %741 = arith.addf %737, %740 : vector<8x128xf32>
    %742 = vector.extract_strided_slice %741 {offsets = [0, 0], sizes = [8, 32], strides = [1, 1]} : vector<8x128xf32> to vector<8x32xf32>
    %743 = arith.negf %742 : vector<8x32xf32>
    %744 = math.exp %743 : vector<8x32xf32>
    %cst_214 = arith.constant 1.000000e+00 : f32
    %745 = vector.broadcast %cst_214 : f32 to vector<8x32xf32>
    %746 = arith.addf %745, %744 : vector<8x32xf32>
    %747 = arith.divf %745, %746 : vector<8x32xf32>
    %748 = vector.extract_strided_slice %741 {offsets = [0, 32], sizes = [8, 32], strides = [1, 1]} : vector<8x128xf32> to vector<8x32xf32>
    %749 = arith.negf %748 : vector<8x32xf32>
    %750 = math.exp %749 : vector<8x32xf32>
    %cst_215 = arith.constant 1.000000e+00 : f32
    %751 = vector.broadcast %cst_215 : f32 to vector<8x32xf32>
    %752 = arith.addf %751, %750 : vector<8x32xf32>
    %753 = arith.divf %751, %752 : vector<8x32xf32>
    %754 = vector.extract_strided_slice %741 {offsets = [0, 64], sizes = [8, 32], strides = [1, 1]} : vector<8x128xf32> to vector<8x32xf32>
    %755 = math.tanh %754 : vector<8x32xf32>
    %756 = vector.extract_strided_slice %741 {offsets = [0, 96], sizes = [8, 32], strides = [1, 1]} : vector<8x128xf32> to vector<8x32xf32>
    %757 = arith.negf %756 : vector<8x32xf32>
    %758 = math.exp %757 : vector<8x32xf32>
    %cst_216 = arith.constant 1.000000e+00 : f32
    %759 = vector.broadcast %cst_216 : f32 to vector<8x32xf32>
    %760 = arith.addf %759, %758 : vector<8x32xf32>
    %761 = arith.divf %759, %760 : vector<8x32xf32>
    %762 = arith.mulf %753, %734 : vector<8x32xf32>
    %763 = arith.mulf %747, %755 : vector<8x32xf32>
    %764 = arith.addf %762, %763 : vector<8x32xf32>
    %765 = math.tanh %764 : vector<8x32xf32>
    %766 = arith.mulf %761, %765 : vector<8x32xf32>
    %c6_i32_217 = arith.constant 6 : i32
    %cst_218 = arith.constant dense<0.000000e+00> : vector<8x128xf32>
    %767 = tpu.matmul %766, %586, %cst_218 {dimension_numbers = #tpu.dot_dimension_numbers<[1], [0], [0], [1], [0, 0, 1, 1], [], []>} : vector<8x32xf32>, vector<32x128xf32>, vector<8x128xf32> -> vector<8x128xf32>
    %768 = arith.index_cast %c6_i32_217 : i32 to index
    %c0_219 = arith.constant 0 : index
    %c0_220 = arith.constant 0 : index
    %769 = vector.load %arg20[%768, %c0_219, %c0_220] : memref<8x8x128xf32, #tpu.memory_space<vmem>>, vector<1x8x128xf32>
    %770 = vector.shape_cast %769 : vector<1x8x128xf32> to vector<8x128xf32>
    %771 = arith.addf %767, %770 : vector<8x128xf32>
    %772 = vector.extract_strided_slice %771 {offsets = [0, 0], sizes = [8, 32], strides = [1, 1]} : vector<8x128xf32> to vector<8x32xf32>
    %773 = arith.negf %772 : vector<8x32xf32>
    %774 = math.exp %773 : vector<8x32xf32>
    %cst_221 = arith.constant 1.000000e+00 : f32
    %775 = vector.broadcast %cst_221 : f32 to vector<8x32xf32>
    %776 = arith.addf %775, %774 : vector<8x32xf32>
    %777 = arith.divf %775, %776 : vector<8x32xf32>
    %778 = vector.extract_strided_slice %771 {offsets = [0, 32], sizes = [8, 32], strides = [1, 1]} : vector<8x128xf32> to vector<8x32xf32>
    %779 = arith.negf %778 : vector<8x32xf32>
    %780 = math.exp %779 : vector<8x32xf32>
    %cst_222 = arith.constant 1.000000e+00 : f32
    %781 = vector.broadcast %cst_222 : f32 to vector<8x32xf32>
    %782 = arith.addf %781, %780 : vector<8x32xf32>
    %783 = arith.divf %781, %782 : vector<8x32xf32>
    %784 = vector.extract_strided_slice %771 {offsets = [0, 64], sizes = [8, 32], strides = [1, 1]} : vector<8x128xf32> to vector<8x32xf32>
    %785 = math.tanh %784 : vector<8x32xf32>
    %786 = vector.extract_strided_slice %771 {offsets = [0, 96], sizes = [8, 32], strides = [1, 1]} : vector<8x128xf32> to vector<8x32xf32>
    %787 = arith.negf %786 : vector<8x32xf32>
    %788 = math.exp %787 : vector<8x32xf32>
    %cst_223 = arith.constant 1.000000e+00 : f32
    %789 = vector.broadcast %cst_223 : f32 to vector<8x32xf32>
    %790 = arith.addf %789, %788 : vector<8x32xf32>
    %791 = arith.divf %789, %790 : vector<8x32xf32>
    %792 = arith.mulf %783, %764 : vector<8x32xf32>
    %793 = arith.mulf %777, %785 : vector<8x32xf32>
    %794 = arith.addf %792, %793 : vector<8x32xf32>
    %795 = math.tanh %794 : vector<8x32xf32>
    %796 = arith.mulf %791, %795 : vector<8x32xf32>
    %c7_i32_224 = arith.constant 7 : i32
    %cst_225 = arith.constant dense<0.000000e+00> : vector<8x128xf32>
    %797 = tpu.matmul %796, %586, %cst_225 {dimension_numbers = #tpu.dot_dimension_numbers<[1], [0], [0], [1], [0, 0, 1, 1], [], []>} : vector<8x32xf32>, vector<32x128xf32>, vector<8x128xf32> -> vector<8x128xf32>
    %798 = arith.index_cast %c7_i32_224 : i32 to index
    %c0_226 = arith.constant 0 : index
    %c0_227 = arith.constant 0 : index
    %799 = vector.load %arg20[%798, %c0_226, %c0_227] : memref<8x8x128xf32, #tpu.memory_space<vmem>>, vector<1x8x128xf32>
    %800 = vector.shape_cast %799 : vector<1x8x128xf32> to vector<8x128xf32>
    %801 = arith.addf %797, %800 : vector<8x128xf32>
    %802 = vector.extract_strided_slice %801 {offsets = [0, 0], sizes = [8, 32], strides = [1, 1]} : vector<8x128xf32> to vector<8x32xf32>
    %803 = arith.negf %802 : vector<8x32xf32>
    %804 = math.exp %803 : vector<8x32xf32>
    %cst_228 = arith.constant 1.000000e+00 : f32
    %805 = vector.broadcast %cst_228 : f32 to vector<8x32xf32>
    %806 = arith.addf %805, %804 : vector<8x32xf32>
    %807 = arith.divf %805, %806 : vector<8x32xf32>
    %808 = vector.extract_strided_slice %801 {offsets = [0, 32], sizes = [8, 32], strides = [1, 1]} : vector<8x128xf32> to vector<8x32xf32>
    %809 = arith.negf %808 : vector<8x32xf32>
    %810 = math.exp %809 : vector<8x32xf32>
    %cst_229 = arith.constant 1.000000e+00 : f32
    %811 = vector.broadcast %cst_229 : f32 to vector<8x32xf32>
    %812 = arith.addf %811, %810 : vector<8x32xf32>
    %813 = arith.divf %811, %812 : vector<8x32xf32>
    %814 = vector.extract_strided_slice %801 {offsets = [0, 64], sizes = [8, 32], strides = [1, 1]} : vector<8x128xf32> to vector<8x32xf32>
    %815 = math.tanh %814 : vector<8x32xf32>
    %816 = vector.extract_strided_slice %801 {offsets = [0, 96], sizes = [8, 32], strides = [1, 1]} : vector<8x128xf32> to vector<8x32xf32>
    %817 = arith.negf %816 : vector<8x32xf32>
    %818 = math.exp %817 : vector<8x32xf32>
    %cst_230 = arith.constant 1.000000e+00 : f32
    %819 = vector.broadcast %cst_230 : f32 to vector<8x32xf32>
    %820 = arith.addf %819, %818 : vector<8x32xf32>
    %821 = arith.divf %819, %820 : vector<8x32xf32>
    %822 = arith.mulf %813, %794 : vector<8x32xf32>
    %823 = arith.mulf %807, %815 : vector<8x32xf32>
    %824 = arith.addf %822, %823 : vector<8x32xf32>
    %825 = math.tanh %824 : vector<8x32xf32>
    %826 = arith.mulf %821, %825 : vector<8x32xf32>
    %c8_i32_231 = arith.constant 8 : i32
    %c0_232 = arith.constant 0 : index
    %c0_233 = arith.constant 0 : index
    %827 = vector.load %arg11[%c0_232, %c0_233] : memref<64x128xf32, #tpu.memory_space<vmem>>, vector<64x128xf32>
    %828 = vector.extract_strided_slice %827 {offsets = [0, 0], sizes = [32, 128], strides = [1, 1]} : vector<64x128xf32> to vector<32x128xf32>
    %cst_234 = arith.constant dense<0.000000e+00> : vector<8x128xf32>
    %829 = tpu.matmul %537, %828, %cst_234 {dimension_numbers = #tpu.dot_dimension_numbers<[1], [0], [0], [1], [0, 0, 1, 1], [], []>} : vector<8x32xf32>, vector<32x128xf32>, vector<8x128xf32> -> vector<8x128xf32>
    %c7 = arith.constant 7 : index
    %c0_235 = arith.constant 0 : index
    %c0_236 = arith.constant 0 : index
    %830 = vector.load %arg19[%c7, %c0_235, %c0_236] : memref<8x8x32xf32, #tpu.memory_space<vmem>>, vector<1x8x32xf32>
    %831 = vector.shape_cast %830 : vector<1x8x32xf32> to vector<8x32xf32>
    %832 = vector.extract_strided_slice %827 {offsets = [32, 0], sizes = [32, 128], strides = [1, 1]} : vector<64x128xf32> to vector<32x128xf32>
    %cst_237 = arith.constant dense<0.000000e+00> : vector<8x128xf32>
    %833 = tpu.matmul %831, %832, %cst_237 {dimension_numbers = #tpu.dot_dimension_numbers<[1], [0], [0], [1], [0, 0, 1, 1], [], []>} : vector<8x32xf32>, vector<32x128xf32>, vector<8x128xf32> -> vector<8x128xf32>
    %834 = arith.addf %829, %833 : vector<8x128xf32>
    %c0_238 = arith.constant 0 : index
    %c0_239 = arith.constant 0 : index
    %835 = vector.load %arg12[%c0_238, %c0_239] : memref<1x128xf32, #tpu.memory_space<vmem>>, vector<1x128xf32>
    %836 = vector.broadcast %835 : vector<1x128xf32> to vector<8x128xf32>
    %837 = arith.addf %834, %836 : vector<8x128xf32>
    %838 = vector.extract_strided_slice %837 {offsets = [0, 0], sizes = [8, 32], strides = [1, 1]} : vector<8x128xf32> to vector<8x32xf32>
    %839 = arith.negf %838 : vector<8x32xf32>
    %840 = math.exp %839 : vector<8x32xf32>
    %cst_240 = arith.constant 1.000000e+00 : f32
    %841 = vector.broadcast %cst_240 : f32 to vector<8x32xf32>
    %842 = arith.addf %841, %840 : vector<8x32xf32>
    %843 = arith.divf %841, %842 : vector<8x32xf32>
    %844 = vector.extract_strided_slice %837 {offsets = [0, 64], sizes = [8, 32], strides = [1, 1]} : vector<8x128xf32> to vector<8x32xf32>
    %845 = math.tanh %844 : vector<8x32xf32>
    %846 = vector.extract_strided_slice %837 {offsets = [0, 96], sizes = [8, 32], strides = [1, 1]} : vector<8x128xf32> to vector<8x32xf32>
    %847 = arith.negf %846 : vector<8x32xf32>
    %848 = math.exp %847 : vector<8x32xf32>
    %cst_241 = arith.constant 1.000000e+00 : f32
    %849 = vector.broadcast %cst_241 : f32 to vector<8x32xf32>
    %850 = arith.addf %849, %848 : vector<8x32xf32>
    %851 = arith.divf %849, %850 : vector<8x32xf32>
    %852 = arith.mulf %843, %845 : vector<8x32xf32>
    %853 = math.tanh %852 : vector<8x32xf32>
    %854 = arith.mulf %851, %853 : vector<8x32xf32>
    %c0_242 = arith.constant 0 : index
    %c0_243 = arith.constant 0 : index
    %855 = vector.load %arg13[%c0_242, %c0_243] : memref<64x128xf32, #tpu.memory_space<vmem>>, vector<64x128xf32>
    %856 = vector.extract_strided_slice %855 {offsets = [0, 0], sizes = [32, 128], strides = [1, 1]} : vector<64x128xf32> to vector<32x128xf32>
    %cst_244 = arith.constant dense<0.000000e+00> : vector<8x128xf32>
    %857 = tpu.matmul %826, %856, %cst_244 {dimension_numbers = #tpu.dot_dimension_numbers<[1], [0], [0], [1], [0, 0, 1, 1], [], []>} : vector<8x32xf32>, vector<32x128xf32>, vector<8x128xf32> -> vector<8x128xf32>
    %858 = vector.extract_strided_slice %855 {offsets = [32, 0], sizes = [32, 128], strides = [1, 1]} : vector<64x128xf32> to vector<32x128xf32>
    %cst_245 = arith.constant dense<0.000000e+00> : vector<8x128xf32>
    %859 = tpu.matmul %854, %858, %cst_245 {dimension_numbers = #tpu.dot_dimension_numbers<[1], [0], [0], [1], [0, 0, 1, 1], [], []>} : vector<8x32xf32>, vector<32x128xf32>, vector<8x128xf32> -> vector<8x128xf32>
    %860 = arith.addf %857, %859 : vector<8x128xf32>
    %c0_246 = arith.constant 0 : index
    %c0_247 = arith.constant 0 : index
    %861 = vector.load %arg14[%c0_246, %c0_247] : memref<1x128xf32, #tpu.memory_space<vmem>>, vector<1x128xf32>
    %862 = vector.broadcast %861 : vector<1x128xf32> to vector<8x128xf32>
    %863 = arith.addf %860, %862 : vector<8x128xf32>
    %c0_248 = arith.constant 0 : index
    %c0_249 = arith.constant 0 : index
    %864 = vector.load %arg15[%c0_248, %c0_249] : memref<8x128xf32, #tpu.memory_space<vmem>>, vector<8x128xf32>
    tpu.vector_store %arg15[%c0_248, %c0_249], %863 {strides = array<i32>} : memref<8x128xf32, #tpu.memory_space<vmem>>, vector<8x128xf32>,
    return
  }
  func.func @transform_0(%arg0: i32) -> (i32, i32, i32) {
    %c0_i32 = arith.constant 0 : i32
    %c0_i32_0 = arith.constant 0 : i32
    %c0_i32_1 = arith.constant 0 : i32
    return %c0_i32, %arg0, %c0_i32_0 : i32, i32, i32
  }
  func.func @transform_1(%arg0: i32) -> (i32, i32) {
    %c0_i32 = arith.constant 0 : i32
    %c0_i32_0 = arith.constant 0 : i32
    %c0_i32_1 = arith.constant 0 : i32
    return %c0_i32, %c0_i32_0 : i32, i32
  }
  func.func @transform_2(%arg0: i32) -> (i32, i32) {
    %c0_i32 = arith.constant 0 : i32
    %c0_i32_0 = arith.constant 0 : i32
    %c0_i32_1 = arith.constant 0 : i32
    return %c0_i32, %c0_i32_0 : i32, i32
  }
  func.func @transform_3(%arg0: i32) -> (i32, i32) {
    %c0_i32 = arith.constant 0 : i32
    %c0_i32_0 = arith.constant 0 : i32
    %c0_i32_1 = arith.constant 0 : i32
    return %c0_i32, %c0_i32_0 : i32, i32
  }
  func.func @transform_4(%arg0: i32) -> (i32, i32) {
    %c0_i32 = arith.constant 0 : i32
    %c0_i32_0 = arith.constant 0 : i32
    %c0_i32_1 = arith.constant 0 : i32
    return %c0_i32, %c0_i32_0 : i32, i32
  }
  func.func @transform_5(%arg0: i32) -> (i32, i32) {
    %c0_i32 = arith.constant 0 : i32
    %c0_i32_0 = arith.constant 0 : i32
    %c0_i32_1 = arith.constant 0 : i32
    return %c0_i32, %c0_i32_0 : i32, i32
  }
  func.func @transform_6(%arg0: i32) -> (i32, i32) {
    %c0_i32 = arith.constant 0 : i32
    %c0_i32_0 = arith.constant 0 : i32
    %c0_i32_1 = arith.constant 0 : i32
    return %c0_i32, %c0_i32_0 : i32, i32
  }
  func.func @transform_7(%arg0: i32) -> (i32, i32) {
    %c0_i32 = arith.constant 0 : i32
    %c0_i32_0 = arith.constant 0 : i32
    %c0_i32_1 = arith.constant 0 : i32
    return %c0_i32, %c0_i32_0 : i32, i32
  }
  func.func @transform_8(%arg0: i32) -> (i32, i32) {
    %c0_i32 = arith.constant 0 : i32
    %c0_i32_0 = arith.constant 0 : i32
    %c0_i32_1 = arith.constant 0 : i32
    return %c0_i32, %c0_i32_0 : i32, i32
  }
  func.func @transform_9(%arg0: i32) -> (i32, i32) {
    %c0_i32 = arith.constant 0 : i32
    %c0_i32_0 = arith.constant 0 : i32
    %c0_i32_1 = arith.constant 0 : i32
    return %c0_i32, %c0_i32_0 : i32, i32
  }
  func.func @transform_10(%arg0: i32) -> (i32, i32) {
    %c0_i32 = arith.constant 0 : i32
    %c0_i32_0 = arith.constant 0 : i32
    %c0_i32_1 = arith.constant 0 : i32
    return %c0_i32, %c0_i32_0 : i32, i32
  }
  func.func @transform_11(%arg0: i32) -> (i32, i32) {
    %c0_i32 = arith.constant 0 : i32
    %c0_i32_0 = arith.constant 0 : i32
    %c0_i32_1 = arith.constant 0 : i32
    return %c0_i32, %c0_i32_0 : i32, i32
  }
  func.func @transform_12(%arg0: i32) -> (i32, i32) {
    %c0_i32 = arith.constant 0 : i32
    %c0_i32_0 = arith.constant 0 : i32
    %c0_i32_1 = arith.constant 0 : i32
    return %c0_i32, %c0_i32_0 : i32, i32
  }
  func.func @transform_13(%arg0: i32) -> (i32, i32) {
    %c0_i32 = arith.constant 0 : i32
    %c0_i32_0 = arith.constant 0 : i32
    %c0_i32_1 = arith.constant 0 : i32
    return %c0_i32, %c0_i32_0 : i32, i32
  }
  func.func @transform_14(%arg0: i32) -> (i32, i32) {
    %c0_i32 = arith.constant 0 : i32
    %c0_i32_0 = arith.constant 0 : i32
    return %arg0, %c0_i32 : i32, i32
  }
}

</mosaic_0001>

<llo_original>
// kernel: bilstm_forward.1
$region0: #{bilstm_forward.1}
  #allocation0 [shape = 'u32[]', space=smem, size = 0x4, offset = 0x4, fixed_abs, tag = 'smem constant byte address 0x4 - core index']
  #allocation1 [shape = 'u32[144,128]{1,0:T(1,128)}', space=vmem, size = 0x12000, scoped, tag = 'internal scratch']
  #allocation2 [shape = 'f32[8,8,128]{2,1,0:T(8,128)}', space=vmem, size = 0x8000, scoped, tag = 'scratch operand']
  #allocation3 [shape = 'f32[8,8,128]{2,1,0:T(8,128)}', space=vmem, size = 0x8000, scoped, tag = 'scratch operand']
  #allocation4 [shape = 'f32[8,8,32]{2,1,0:T(8,128)}', space=vmem, size = 0x8000, scoped, tag = 'scratch operand']
  #allocation5 [shape = 'f32[8,8,32]{2,1,0:T(8,128)}', space=vmem, size = 0x8000, scoped, tag = 'scratch operand']
  #allocation6 [shape = 'f32[8,8,128]{2,1,0:T(8,128)}', space=vmem, size = 0x8000, scoped, tag = 'scratch operand']
  %s0 = inlined_call_operand.vmem [shape: f32[8,8,16], index: 0, kind: input, shape index: {}]
  %s1 = inlined_call_operand.vmem [shape: f32[16,128], index: 1, kind: input, shape index: {}]
  %s2 = inlined_call_operand.vmem [shape: f32[32,128], index: 2, kind: input, shape index: {}]
  %s3 = inlined_call_operand.vmem [shape: f32[1,128], index: 3, kind: input, shape index: {}]
  %s4 = inlined_call_operand.vmem [shape: f32[16,128], index: 4, kind: input, shape index: {}]
  %s5 = inlined_call_operand.vmem [shape: f32[32,128], index: 5, kind: input, shape index: {}]
  %s6 = inlined_call_operand.vmem [shape: f32[1,128], index: 6, kind: input, shape index: {}]
  %s7 = inlined_call_operand.vmem [shape: f32[64,128], index: 7, kind: input, shape index: {}]
  %s8 = inlined_call_operand.vmem [shape: f32[32,128], index: 8, kind: input, shape index: {}]
  %s9 = inlined_call_operand.vmem [shape: f32[1,128], index: 9, kind: input, shape index: {}]
  %s10 = inlined_call_operand.vmem [shape: f32[64,128], index: 10, kind: input, shape index: {}]
  %s11 = inlined_call_operand.vmem [shape: f32[1,128], index: 11, kind: input, shape index: {}]
  %s12 = inlined_call_operand.vmem [shape: f32[64,128], index: 12, kind: input, shape index: {}]
  %s13 = inlined_call_operand.vmem [shape: f32[1,128], index: 13, kind: input, shape index: {}]
  %s14 = inlined_call_operand.vmem [shape: f32[8,128], index: 14, kind: output, shape index: {}]
  %s15 = sld [smem:[#allocation0]]
  $region66: #{bilstm_forward.1} parent=0
    _
  %s17 = ssub.s32 1, %s15
  %s18 = scalar_select 0, %s17, %s15
  // Predicated region
  $region2: #{bilstm_forward.1} parent=0 // pred_check
    _
  $region3: #{bilstm_forward.1} parent=0 // pred_check_branch
    %20 = sbr.rel (0) target = $region5
  $region4: #{bilstm_forward.1} parent=0 // pred_region
    _
  $region5: #{bilstm_forward.1} parent=0 // pred_fallthru
    _
  // Predicated region
  $region6: #{bilstm_forward.1} parent=0 // pred_check
    _
  $region7: #{bilstm_forward.1} parent=0 // pred_check_branch
    %22 = sbr.rel (0) target = $region9
  $region8: #{bilstm_forward.1} parent=0 // pred_region
    _
  $region9: #{bilstm_forward.1} parent=0 // pred_fallthru
    _
  // Predicated region
  $region10: #{bilstm_forward.1} parent=0 // pred_check
    _
  $region11: #{bilstm_forward.1} parent=0 // pred_check_branch
    %24 = sbr.rel (0) target = $region13
  $region12: #{bilstm_forward.1} parent=0 // pred_region
    _
  $region13: #{bilstm_forward.1} parent=0 // pred_fallthru
    _
  // Predicated region
  $region14: #{bilstm_forward.1} parent=0 // pred_check
    _
  $region15: #{bilstm_forward.1} parent=0 // pred_check_branch
    %26 = sbr.rel (0) target = $region17
  $region16: #{bilstm_forward.1} parent=0 // pred_region
    _
  $region17: #{bilstm_forward.1} parent=0 // pred_fallthru
    _
  // Predicated region
  $region18: #{bilstm_forward.1} parent=0 // pred_check
    _
  $region19: #{bilstm_forward.1} parent=0 // pred_check_branch
    %28 = sbr.rel (0) target = $region21
  $region20: #{bilstm_forward.1} parent=0 // pred_region
    _
  $region21: #{bilstm_forward.1} parent=0 // pred_fallthru
    _
  // Predicated region
  $region22: #{bilstm_forward.1} parent=0 // pred_check
    _
  $region23: #{bilstm_forward.1} parent=0 // pred_check_branch
    %30 = sbr.rel (0) target = $region25
  $region24: #{bilstm_forward.1} parent=0 // pred_region
    _
  $region25: #{bilstm_forward.1} parent=0 // pred_fallthru
    _
  // Predicated region
  $region26: #{bilstm_forward.1} parent=0 // pred_check
    _
  $region27: #{bilstm_forward.1} parent=0 // pred_check_branch
    %32 = sbr.rel (0) target = $region29
  $region28: #{bilstm_forward.1} parent=0 // pred_region
    _
  $region29: #{bilstm_forward.1} parent=0 // pred_fallthru
    _
  // Predicated region
  $region30: #{bilstm_forward.1} parent=0 // pred_check
    _
  $region31: #{bilstm_forward.1} parent=0 // pred_check_branch
    %34 = sbr.rel (0) target = $region33
  $region32: #{bilstm_forward.1} parent=0 // pred_region
    _
  $region33: #{bilstm_forward.1} parent=0 // pred_fallthru
    _
  // Predicated region
  $region34: #{bilstm_forward.1} parent=0 // pred_check
    _
  $region35: #{bilstm_forward.1} parent=0 // pred_check_branch
    %36 = sbr.rel (0) target = $region37
  $region36: #{bilstm_forward.1} parent=0 // pred_region
    _
  $region37: #{bilstm_forward.1} parent=0 // pred_fallthru
    _
  // Predicated region
  $region38: #{bilstm_forward.1} parent=0 // pred_check
    _
  $region39: #{bilstm_forward.1} parent=0 // pred_check_branch
    %38 = sbr.rel (0) target = $region41
  $region40: #{bilstm_forward.1} parent=0 // pred_region
    _
  $region41: #{bilstm_forward.1} parent=0 // pred_fallthru
    _
  // Predicated region
  $region42: #{bilstm_forward.1} parent=0 // pred_check
    _
  $region43: #{bilstm_forward.1} parent=0 // pred_check_branch
    %40 = sbr.rel (0) target = $region45
  $region44: #{bilstm_forward.1} parent=0 // pred_region
    _
  $region45: #{bilstm_forward.1} parent=0 // pred_fallthru
    _
  // Predicated region
  $region46: #{bilstm_forward.1} parent=0 // pred_check
    _
  $region47: #{bilstm_forward.1} parent=0 // pred_check_branch
    %42 = sbr.rel (0) target = $region49
  $region48: #{bilstm_forward.1} parent=0 // pred_region
    _
  $region49: #{bilstm_forward.1} parent=0 // pred_fallthru
    _
  // Predicated region
  $region50: #{bilstm_forward.1} parent=0 // pred_check
    _
  $region51: #{bilstm_forward.1} parent=0 // pred_check_branch
    %44 = sbr.rel (0) target = $region53
  $region52: #{bilstm_forward.1} parent=0 // pred_region
    _
  $region53: #{bilstm_forward.1} parent=0 // pred_fallthru
    _
  // Predicated region
  $region54: #{bilstm_forward.1} parent=0 // pred_check
    _
  $region55: #{bilstm_forward.1} parent=0 // pred_check_branch
    %46 = sbr.rel (0) target = $region57
  $region56: #{bilstm_forward.1} parent=0 // pred_region
    _
  $region57: #{bilstm_forward.1} parent=0 // pred_fallthru
    _
  %v47 = vld [vmem:[%s0] sm:$0xff]
  %v48 = vld [vmem:[%s0 + $0x8] sm:$0xff]
  %v49 = vld [vmem:[%s0 + $0x10] sm:$0xff]
  %v50 = vld [vmem:[%s0 + $0x18] sm:$0xff]
  %v51 = vld [vmem:[%s0 + $0x20] sm:$0xff]
  %v52 = vld [vmem:[%s0 + $0x28] sm:$0xff]
  %v53 = vld [vmem:[%s0 + $0x30] sm:$0xff]
  %v54 = vld [vmem:[%s0 + $0x38] sm:$0xff]
  %v55 = vld [vmem:[%s1] sm:$0xff]
  %v56 = vld [vmem:[%s1 + $0x8] sm:$0xff]
  %v57 = vld [vmem:[%s3] sm:$0x1]
  %v59 = vlaneseq
  %v60 = vshrl.u32 %v59, 7
  %v61 = vsub.s32 0, %v60
  %v62 = vrot.slane %v57, %v61
  %vm64 = vcmask 130048
  %v66 = vsel %vm64, %v47, 0
  %v69 = vsel %vm64, %v48, 0
  %v72 = vsel %vm64, %v49, 0
  %v75 = vsel %vm64, %v50, 0
  %v78 = vsel %vm64, %v51, 0
  %v81 = vsel %vm64, %v52, 0
  %v84 = vsel %vm64, %v53, 0
  %v87 = vsel %vm64, %v54, 0
  %89 = vmatprep.subr.mxu0 0.0
  %90 = vmatpush1.msra.mxu0 %v55
  %91 = vmatprep.subr.mxu0 0.0
  %92 = vmatpush1.msra.mxu0 %v56
  %93 = vmatprep.subr.mxu0 0.0
  %94 = vmatpush1.msra.mxu0 0.0
  %95 = vmatprep.subr.mxu0 0.0
  %96 = vmatpush1.msra.mxu0 0.0
  %97 = vmatprep.subr.mxu0 0.0
  %98 = vmatpush1.msra.mxu0 0.0
  %99 = vmatprep.subr.mxu0 0.0
  %100 = vmatpush1.msra.mxu0 0.0
  %101 = vmatprep.subr.mxu0 0.0
  %102 = vmatpush1.msra.mxu0 0.0
  %103 = vmatprep.subr.mxu0 0.0
  %104 = vmatpush1.msra.mxu0 0.0
  %105 = vmatprep.subr.mxu0 0.0
  %106 = vmatpush1.msra.mxu0 0.0
  %107 = vmatprep.subr.mxu0 0.0
  %108 = vmatpush1.msra.mxu0 0.0
  %109 = vmatprep.subr.mxu0 0.0
  %110 = vmatpush1.msra.mxu0 0.0
  %111 = vmatprep.subr.mxu0 0.0
  %112 = vmatpush1.msra.mxu0 0.0
  %113 = vmatprep.subr.mxu0 0.0
  %114 = vmatpush1.msra.mxu0 0.0
  %115 = vmatprep.subr.mxu0 0.0
  %116 = vmatpush1.msra.mxu0 0.0
  %117 = vmatprep.subr.mxu0 0.0
  %118 = vmatpush1.msra.mxu0 0.0
  %119 = vmatprep.subr.mxu0 0.0
  %120 = vmatpush1.msra.mxu0 0.0
  %121 = vmatprep.subr.mxu0 0.0
  %122 = vmatpush1.msra.mxu0 0.0
  %123 = vmatprep.subr.mxu0 0.0
  %124 = vmatpush1.msra.mxu0 0.0
  %125 = vmatprep.subr.mxu0 0.0
  %126 = vmatpush1.msra.mxu0 0.0
  %127 = vmatprep.subr.mxu0 0.0
  %128 = vmatpush1.msra.mxu0 0.0
  %129 = vmatprep.subr.mxu0 0.0
  %130 = vmatpush1.msra.mxu0 0.0
  %131 = vmatprep.subr.mxu0 0.0
  %132 = vmatpush1.msra.mxu0 0.0
  %133 = vmatprep.subr.mxu0 0.0
  %134 = vmatpush1.msra.mxu0 0.0
  %135 = vmatprep.subr.mxu0 0.0
  %136 = vmatpush1.msra.mxu0 0.0
  %137 = vmatprep.subr.mxu0 0.0
  %138 = vmatpush1.msra.mxu0 0.0
  %139 = vmatprep.subr.mxu0 0.0
  %140 = vmatpush1.msra.mxu0 0.0
  %141 = vmatprep.subr.mxu0 0.0
  %142 = vmatpush1.msra.mxu0 0.0
  %143 = vmatprep.subr.mxu0 0.0
  %144 = vmatpush1.msra.mxu0 0.0
  %145 = vmatprep.subr.mxu0 0.0
  %146 = vmatpush1.msra.mxu0 0.0
  %147 = vmatprep.subr.mxu0 0.0
  %148 = vmatpush1.msra.mxu0 0.0
  %149 = vmatprep.subr.mxu0 0.0
  %150 = vmatpush1.msra.mxu0 0.0
  %151 = vmatprep.subr.mxu0 0.0
  %152 = vmatpush1.msra.mxu0 0.0
  %153 = vmatprep.mubr.f32.mxu0 0.0
  %154 = vmatmul.mubr.f32.gmra.mrb[0].mxu0 %v66
  %v155 = vpop.f32.mrb[0].mxu0
  %v156 = vadd.f32 %v62, %v155
  %v157 = vpop.f32.mrb[0].mxu0
  %158 = vmatprep.mubr.f32.mxu0 0.0
  %159 = vmatmul.mubr.f32.gmra.mrb[0].mxu0 %v69
  %v160 = vpop.f32.mrb[0].mxu0
  %v161 = vadd.f32 %v62, %v160
  %v162 = vpop.f32.mrb[0].mxu0
  %163 = vmatprep.mubr.f32.mxu0 0.0
  %164 = vmatmul.mubr.f32.gmra.mrb[0].mxu0 %v72
  %v165 = vpop.f32.mrb[0].mxu0
  %v166 = vadd.f32 %v62, %v165
  %v167 = vpop.f32.mrb[0].mxu0
  %168 = vmatprep.mubr.f32.mxu0 0.0
  %169 = vmatmul.mubr.f32.gmra.mrb[0].mxu0 %v75
  %v170 = vpop.f32.mrb[0].mxu0
  %v171 = vadd.f32 %v62, %v170
  %v172 = vpop.f32.mrb[0].mxu0
  %173 = vmatprep.mubr.f32.mxu0 0.0
  %174 = vmatmul.mubr.f32.gmra.mrb[0].mxu0 %v78
  %v175 = vpop.f32.mrb[0].mxu0
  %v176 = vadd.f32 %v62, %v175
  %v177 = vpop.f32.mrb[0].mxu0
  %178 = vmatprep.mubr.f32.mxu0 0.0
  %179 = vmatmul.mubr.f32.gmra.mrb[0].mxu0 %v81
  %v180 = vpop.f32.mrb[0].mxu0
  %v181 = vadd.f32 %v62, %v180
  %v182 = vpop.f32.mrb[0].mxu0
  %183 = vmatprep.mubr.f32.mxu0 0.0
  %184 = vmatmul.mubr.f32.gmra.mrb[0].mxu0 %v84
  %v185 = vpop.f32.mrb[0].mxu0
  %v186 = vadd.f32 %v62, %v185
  %v187 = vpop.f32.mrb[0].mxu0
  %188 = vmatprep.mubr.f32.mxu0 0.0
  %189 = vmatmul.mubr.f32.gmra.mrb[0].mxu0 %v87
  %v190 = vpop.f32.mrb[0].mxu0
  %v191 = vadd.f32 %v62, %v190
  %v192 = vpop.f32.mrb[0].mxu0
  %193 = vdwg.mxu0
  %v194 = vld [vmem:[%s4] sm:$0xff]
  %v195 = vld [vmem:[%s4 + $0x8] sm:$0xff]
  %v196 = vld [vmem:[%s6] sm:$0x1]
  %v198 = vlaneseq
  %v199 = vshrl.u32 %v198, 7
  %v200 = vsub.s32 0, %v199
  %v201 = vrot.slane %v196, %v200
  %203 = vmatprep.subr.mxu0 0.0
  %204 = vmatpush1.msra.mxu0 %v194
  %205 = vmatprep.subr.mxu0 0.0
  %206 = vmatpush1.msra.mxu0 %v195
  %207 = vmatprep.subr.mxu0 0.0
  %208 = vmatpush1.msra.mxu0 0.0
  %209 = vmatprep.subr.mxu0 0.0
  %210 = vmatpush1.msra.mxu0 0.0
  %211 = vmatprep.subr.mxu0 0.0
  %212 = vmatpush1.msra.mxu0 0.0
  %213 = vmatprep.subr.mxu0 0.0
  %214 = vmatpush1.msra.mxu0 0.0
  %215 = vmatprep.subr.mxu0 0.0
  %216 = vmatpush1.msra.mxu0 0.0
  %217 = vmatprep.subr.mxu0 0.0
  %218 = vmatpush1.msra.mxu0 0.0
  %219 = vmatprep.subr.mxu0 0.0
  %220 = vmatpush1.msra.mxu0 0.0
  %221 = vmatprep.subr.mxu0 0.0
  %222 = vmatpush1.msra.mxu0 0.0
  %223 = vmatprep.subr.mxu0 0.0
  %224 = vmatpush1.msra.mxu0 0.0
  %225 = vmatprep.subr.mxu0 0.0
  %226 = vmatpush1.msra.mxu0 0.0
  %227 = vmatprep.subr.mxu0 0.0
  %228 = vmatpush1.msra.mxu0 0.0
  %229 = vmatprep.subr.mxu0 0.0
  %230 = vmatpush1.msra.mxu0 0.0
  %231 = vmatprep.subr.mxu0 0.0
  %232 = vmatpush1.msra.mxu0 0.0
  %233 = vmatprep.subr.mxu0 0.0
  %234 = vmatpush1.msra.mxu0 0.0
  %235 = vmatprep.subr.mxu0 0.0
  %236 = vmatpush1.msra.mxu0 0.0
  %237 = vmatprep.subr.mxu0 0.0
  %238 = vmatpush1.msra.mxu0 0.0
  %239 = vmatprep.subr.mxu0 0.0
  %240 = vmatpush1.msra.mxu0 0.0
  %241 = vmatprep.subr.mxu0 0.0
  %242 = vmatpush1.msra.mxu0 0.0
  %243 = vmatprep.subr.mxu0 0.0
  %244 = vmatpush1.msra.mxu0 0.0
  %245 = vmatprep.subr.mxu0 0.0
  %246 = vmatpush1.msra.mxu0 0.0
  %247 = vmatprep.subr.mxu0 0.0
  %248 = vmatpush1.msra.mxu0 0.0
  %249 = vmatprep.subr.mxu0 0.0
  %250 = vmatpush1.msra.mxu0 0.0
  %251 = vmatprep.subr.mxu0 0.0
  %252 = vmatpush1.msra.mxu0 0.0
  %253 = vmatprep.subr.mxu0 0.0
  %254 = vmatpush1.msra.mxu0 0.0
  %255 = vmatprep.subr.mxu0 0.0
  %256 = vmatpush1.msra.mxu0 0.0
  %257 = vmatprep.subr.mxu0 0.0
  %258 = vmatpush1.msra.mxu0 0.0
  %259 = vmatprep.subr.mxu0 0.0
  %260 = vmatpush1.msra.mxu0 0.0
  %261 = vmatprep.subr.mxu0 0.0
  %262 = vmatpush1.msra.mxu0 0.0
  %263 = vmatprep.subr.mxu0 0.0
  %264 = vmatpush1.msra.mxu0 0.0
  %265 = vmatprep.subr.mxu0 0.0
  %266 = vmatpush1.msra.mxu0 0.0
  %267 = vmatprep.mubr.f32.mxu0 0.0
  %268 = vmatmul.mubr.f32.gmra.mrb[0].mxu0 %v66
  %v269 = vpop.f32.mrb[0].mxu0
  %v270 = vadd.f32 %v201, %v269
  %v271 = vpop.f32.mrb[0].mxu0
  %272 = vmatprep.mubr.f32.mxu0 0.0
  %273 = vmatmul.mubr.f32.gmra.mrb[0].mxu0 %v69
  %v274 = vpop.f32.mrb[0].mxu0
  %v275 = vadd.f32 %v201, %v274
  %v276 = vpop.f32.mrb[0].mxu0
  %277 = vmatprep.mubr.f32.mxu0 0.0
  %278 = vmatmul.mubr.f32.gmra.mrb[0].mxu0 %v72
  %v279 = vpop.f32.mrb[0].mxu0
  %v280 = vadd.f32 %v201, %v279
  %v281 = vpop.f32.mrb[0].mxu0
  %282 = vmatprep.mubr.f32.mxu0 0.0
  %283 = vmatmul.mubr.f32.gmra.mrb[0].mxu0 %v75
  %v284 = vpop.f32.mrb[0].mxu0
  %v285 = vadd.f32 %v201, %v284
  %v286 = vpop.f32.mrb[0].mxu0
  %287 = vmatprep.mubr.f32.mxu0 0.0
  %288 = vmatmul.mubr.f32.gmra.mrb[0].mxu0 %v78
  %v289 = vpop.f32.mrb[0].mxu0
  %v290 = vadd.f32 %v201, %v289
  %v291 = vpop.f32.mrb[0].mxu0
  %292 = vmatprep.mubr.f32.mxu0 0.0
  %293 = vmatmul.mubr.f32.gmra.mrb[0].mxu0 %v81
  %v294 = vpop.f32.mrb[0].mxu0
  %v295 = vadd.f32 %v201, %v294
  %v296 = vpop.f32.mrb[0].mxu0
  %297 = vmatprep.mubr.f32.mxu0 0.0
  %298 = vmatmul.mubr.f32.gmra.mrb[0].mxu0 %v84
  %v299 = vpop.f32.mrb[0].mxu0
  %v300 = vadd.f32 %v201, %v299
  %v301 = vpop.f32.mrb[0].mxu0
  %302 = vmatprep.mubr.f32.mxu0 0.0
  %303 = vmatmul.mubr.f32.gmra.mrb[0].mxu0 %v87
  %v304 = vpop.f32.mrb[0].mxu0
  %v305 = vadd.f32 %v201, %v304
  %v306 = vpop.f32.mrb[0].mxu0
  %307 = vdwg.mxu0
  %308 = vst [vmem:[#allocation2] sm:$0xff] %v156
  %309 = vst [vmem:[#allocation2 + $0x8] sm:$0xff] %v161
  %310 = vst [vmem:[#allocation2 + $0x10] sm:$0xff] %v166
  %311 = vst [vmem:[#allocation2 + $0x18] sm:$0xff] %v171
  %312 = vst [vmem:[#allocation2 + $0x20] sm:$0xff] %v176
  %313 = vst [vmem:[#allocation2 + $0x28] sm:$0xff] %v181
  %314 = vst [vmem:[#allocation2 + $0x30] sm:$0xff] %v186
  %315 = vst [vmem:[#allocation2 + $0x38] sm:$0xff] %v191
  %316 = vst [vmem:[#allocation3] sm:$0xff] %v270
  %317 = vst [vmem:[#allocation3 + $0x8] sm:$0xff] %v275
  %318 = vst [vmem:[#allocation3 + $0x10] sm:$0xff] %v280
  %319 = vst [vmem:[#allocation3 + $0x18] sm:$0xff] %v285
  %320 = vst [vmem:[#allocation3 + $0x20] sm:$0xff] %v290
  %321 = vst [vmem:[#allocation3 + $0x28] sm:$0xff] %v295
  %322 = vst [vmem:[#allocation3 + $0x30] sm:$0xff] %v300
  %323 = vst [vmem:[#allocation3 + $0x38] sm:$0xff] %v305
  %v324 = vld [vmem:[%s2] sm:$0xff]
  %v325 = vld [vmem:[%s2 + $0x8] sm:$0xff]
  %v326 = vld [vmem:[%s2 + $0x10] sm:$0xff]
  %v327 = vld [vmem:[%s2 + $0x18] sm:$0xff]
  %v328 = vld [vmem:[%s5] sm:$0xff]
  %v329 = vld [vmem:[%s5 + $0x8] sm:$0xff]
  %v330 = vld [vmem:[%s5 + $0x10] sm:$0xff]
  %v331 = vld [vmem:[%s5 + $0x18] sm:$0xff]
  %v332 = vld [vmem:[#allocation2] sm:$0xff]
  %vm333 = vcmask 261120
  %v335 = vsel %vm333, 0.0, 0
  %337 = vmatprep.subr.mxu0 0.0
  %338 = vmatpush1.msra.mxu0 %v324
  %339 = vmatprep.subr.mxu0 0.0
  %340 = vmatpush1.msra.mxu0 %v325
  %341 = vmatprep.subr.mxu0 0.0
  %342 = vmatpush1.msra.mxu0 %v326
  %343 = vmatprep.subr.mxu0 0.0
  %344 = vmatpush1.msra.mxu0 %v327
  %345 = vmatprep.subr.mxu0 0.0
  %346 = vmatpush1.msra.mxu0 0.0
  %347 = vmatprep.subr.mxu0 0.0
  %348 = vmatpush1.msra.mxu0 0.0
  %349 = vmatprep.subr.mxu0 0.0
  %350 = vmatpush1.msra.mxu0 0.0
  %351 = vmatprep.subr.mxu0 0.0
  %352 = vmatpush1.msra.mxu0 0.0
  %353 = vmatprep.subr.mxu0 0.0
  %354 = vmatpush1.msra.mxu0 0.0
  %355 = vmatprep.subr.mxu0 0.0
  %356 = vmatpush1.msra.mxu0 0.0
  %357 = vmatprep.subr.mxu0 0.0
  %358 = vmatpush1.msra.mxu0 0.0
  %359 = vmatprep.subr.mxu0 0.0
  %360 = vmatpush1.msra.mxu0 0.0
  %361 = vmatprep.subr.mxu0 0.0
  %362 = vmatpush1.msra.mxu0 0.0
  %363 = vmatprep.subr.mxu0 0.0
  %364 = vmatpush1.msra.mxu0 0.0
  %365 = vmatprep.subr.mxu0 0.0
  %366 = vmatpush1.msra.mxu0 0.0
  %367 = vmatprep.subr.mxu0 0.0
  %368 = vmatpush1.msra.mxu0 0.0
  %369 = vmatprep.subr.mxu0 0.0
  %370 = vmatpush1.msra.mxu0 0.0
  %371 = vmatprep.subr.mxu0 0.0
  %372 = vmatpush1.msra.mxu0 0.0
  %373 = vmatprep.subr.mxu0 0.0
  %374 = vmatpush1.msra.mxu0 0.0
  %375 = vmatprep.subr.mxu0 0.0
  %376 = vmatpush1.msra.mxu0 0.0
  %377 = vmatprep.subr.mxu0 0.0
  %378 = vmatpush1.msra.mxu0 0.0
  %379 = vmatprep.subr.mxu0 0.0
  %380 = vmatpush1.msra.mxu0 0.0
  %381 = vmatprep.subr.mxu0 0.0
  %382 = vmatpush1.msra.mxu0 0.0
  %383 = vmatprep.subr.mxu0 0.0
  %384 = vmatpush1.msra.mxu0 0.0
  %385 = vmatprep.subr.mxu0 0.0
  %386 = vmatpush1.msra.mxu0 0.0
  %387 = vmatprep.subr.mxu0 0.0
  %388 = vmatpush1.msra.mxu0 0.0
  %389 = vmatprep.subr.mxu0 0.0
  %390 = vmatpush1.msra.mxu0 0.0
  %391 = vmatprep.subr.mxu0 0.0
  %392 = vmatpush1.msra.mxu0 0.0
  %393 = vmatprep.subr.mxu0 0.0
  %394 = vmatpush1.msra.mxu0 0.0
  %395 = vmatprep.subr.mxu0 0.0
  %396 = vmatpush1.msra.mxu0 0.0
  %397 = vmatprep.subr.mxu0 0.0
  %398 = vmatpush1.msra.mxu0 0.0
  %399 = vmatprep.subr.mxu0 0.0
  %400 = vmatpush1.msra.mxu0 0.0
  %401 = vmatprep.mubr.f32.mxu0 0.0
  %402 = vmatmul.mubr.f32.gmra.mrb[0].mxu0 %v335
  %v403 = vpop.f32.mrb[0].mxu0
  %v404 = vadd.f32 %v332, %v403
  %v405 = vpop.f32.mrb[0].mxu0
  %406 = vdwg.mxu0
  %s407 = scalar_lea.vmem [#allocation3], 56
  %v408 = vld [vmem:[%s407] sm:$0xff]
  %409 = vmatprep.subr.mxu0 0.0
  %410 = vmatpush1.msra.mxu0 %v328
  %411 = vmatprep.subr.mxu0 0.0
  %412 = vmatpush1.msra.mxu0 %v329
  %413 = vmatprep.subr.mxu0 0.0
  %414 = vmatpush1.msra.mxu0 %v330
  %415 = vmatprep.subr.mxu0 0.0
  %416 = vmatpush1.msra.mxu0 %v331
  %417 = vmatprep.subr.mxu0 0.0
  %418 = vmatpush1.msra.mxu0 0.0
  %419 = vmatprep.subr.mxu0 0.0
  %420 = vmatpush1.msra.mxu0 0.0
  %421 = vmatprep.subr.mxu0 0.0
  %422 = vmatpush1.msra.mxu0 0.0
  %423 = vmatprep.subr.mxu0 0.0
  %424 = vmatpush1.msra.mxu0 0.0
  %425 = vmatprep.subr.mxu0 0.0
  %426 = vmatpush1.msra.mxu0 0.0
  %427 = vmatprep.subr.mxu0 0.0
  %428 = vmatpush1.msra.mxu0 0.0
  %429 = vmatprep.subr.mxu0 0.0
  %430 = vmatpush1.msra.mxu0 0.0
  %431 = vmatprep.subr.mxu0 0.0
  %432 = vmatpush1.msra.mxu0 0.0
  %433 = vmatprep.subr.mxu0 0.0
  %434 = vmatpush1.msra.mxu0 0.0
  %435 = vmatprep.subr.mxu0 0.0
  %436 = vmatpush1.msra.mxu0 0.0
  %437 = vmatprep.subr.mxu0 0.0
  %438 = vmatpush1.msra.mxu0 0.0
  %439 = vmatprep.subr.mxu0 0.0
  %440 = vmatpush1.msra.mxu0 0.0
  %441 = vmatprep.subr.mxu0 0.0
  %442 = vmatpush1.msra.mxu0 0.0
  %443 = vmatprep.subr.mxu0 0.0
  %444 = vmatpush1.msra.mxu0 0.0
  %445 = vmatprep.subr.mxu0 0.0
  %446 = vmatpush1.msra.mxu0 0.0
  %447 = vmatprep.subr.mxu0 0.0
  %448 = vmatpush1.msra.mxu0 0.0
  %449 = vmatprep.subr.mxu0 0.0
  %450 = vmatpush1.msra.mxu0 0.0
  %451 = vmatprep.subr.mxu0 0.0
  %452 = vmatpush1.msra.mxu0 0.0
  %453 = vmatprep.subr.mxu0 0.0
  %454 = vmatpush1.msra.mxu0 0.0
  %455 = vmatprep.subr.mxu0 0.0
  %456 = vmatpush1.msra.mxu0 0.0
  %457 = vmatprep.subr.mxu0 0.0
  %458 = vmatpush1.msra.mxu0 0.0
  %459 = vmatprep.subr.mxu0 0.0
  %460 = vmatpush1.msra.mxu0 0.0
  %461 = vmatprep.subr.mxu0 0.0
  %462 = vmatpush1.msra.mxu0 0.0
  %463 = vmatprep.subr.mxu0 0.0
  %464 = vmatpush1.msra.mxu0 0.0
  %465 = vmatprep.subr.mxu0 0.0
  %466 = vmatpush1.msra.mxu0 0.0
  %467 = vmatprep.subr.mxu0 0.0
  %468 = vmatpush1.msra.mxu0 0.0
  %469 = vmatprep.subr.mxu0 0.0
  %470 = vmatpush1.msra.mxu0 0.0
  %471 = vmatprep.subr.mxu0 0.0
  %472 = vmatpush1.msra.mxu0 0.0
  %473 = vmatprep.mubr.f32.mxu0 0.0
  %474 = vmatmul.mubr.f32.gmra.mrb[0].mxu0 %v335
  %v475 = vpop.f32.mrb[0].mxu0
  %v476 = vadd.f32 %v408, %v475
  %v477 = vpop.f32.mrb[0].mxu0
  %478 = vdwg.mxu0
  %v479 = vxor.u32 %v404, 2147483648
  %v480 = vmul.f32 %v479, 1.442695
  %v481 = vpow.pop %v480
  %v482 = vadd.f32 %v481, 1.0
  %v483 = vrcp.pop %v482
  %v484 = vmul.f32 1.0, %v483
  %v485 = vtanh.pop %v404
  %v486 = vmul.f32 %v484, 0.0
  %488 = vrot.lane.b32.xlu0 %v485, 64
  %v489 = vpop.permute.xlu0 %488
  %v491 = vmul.f32 %v484, %v489
  %493 = vrot.lane.b32.xlu0 %v491, 32
  %v494 = vpop.permute.xlu0 %493
  %v496 = vadd.f32 %v486, %v494
  %v497 = vtanh.pop %v496
  %499 = vrot.lane.b32.xlu0 %v497, 64
  %v500 = vpop.permute.xlu0 %499
  %v502 = vmul.f32 %v484, %v500
  %v503 = vxor.u32 %v476, 2147483648
  %v504 = vmul.f32 %v503, 1.442695
  %v505 = vpow.pop %v504
  %v506 = vadd.f32 %v505, 1.0
  %v507 = vrcp.pop %v506
  %v508 = vmul.f32 1.0, %v507
  %v509 = vtanh.pop %v476
  %v510 = vmul.f32 %v508, 0.0
  %512 = vrot.lane.b32.xlu0 %v509, 64
  %v513 = vpop.permute.xlu0 %512
  %v515 = vmul.f32 %v508, %v513
  %517 = vrot.lane.b32.xlu0 %v515, 32
  %v518 = vpop.permute.xlu0 %517
  %v520 = vadd.f32 %v510, %v518
  %v521 = vtanh.pop %v520
  %523 = vrot.lane.b32.xlu0 %v521, 64
  %v524 = vpop.permute.xlu0 %523
  %v526 = vmul.f32 %v508, %v524
  %528 = vrot.lane.b32.xlu0 %v502, 32
  %v529 = vpop.permute.xlu0 %528
  %531 = vst.msk [vmem:[#allocation4] sm:$0xff] %vm333, %v529
  %533 = vrot.lane.b32.xlu0 %v526, 32
  %v534 = vpop.permute.xlu0 %533
  %s536 = scalar_lea.vmem [#allocation5], 56
  %537 = vst.msk [vmem:[%s536] sm:$0xff] %vm333, %v534
  %s538 = scalar_lea.vmem [#allocation2], 8
  %v539 = vld [vmem:[%s538] sm:$0xff]
  %v540 = vsel %vm333, %v529, 0
  %542 = vmatprep.subr.mxu0 0.0
  %543 = vmatpush1.msra.mxu0 %v324
  %544 = vmatprep.subr.mxu0 0.0
  %545 = vmatpush1.msra.mxu0 %v325
  %546 = vmatprep.subr.mxu0 0.0
  %547 = vmatpush1.msra.mxu0 %v326
  %548 = vmatprep.subr.mxu0 0.0
  %549 = vmatpush1.msra.mxu0 %v327
  %550 = vmatprep.subr.mxu0 0.0
  %551 = vmatpush1.msra.mxu0 0.0
  %552 = vmatprep.subr.mxu0 0.0
  %553 = vmatpush1.msra.mxu0 0.0
  %554 = vmatprep.subr.mxu0 0.0
  %555 = vmatpush1.msra.mxu0 0.0
  %556 = vmatprep.subr.mxu0 0.0
  %557 = vmatpush1.msra.mxu0 0.0
  %558 = vmatprep.subr.mxu0 0.0
  %559 = vmatpush1.msra.mxu0 0.0
  %560 = vmatprep.subr.mxu0 0.0
  %561 = vmatpush1.msra.mxu0 0.0
  %562 = vmatprep.subr.mxu0 0.0
  %563 = vmatpush1.msra.mxu0 0.0
  %564 = vmatprep.subr.mxu0 0.0
  %565 = vmatpush1.msra.mxu0 0.0
  %566 = vmatprep.subr.mxu0 0.0
  %567 = vmatpush1.msra.mxu0 0.0
  %568 = vmatprep.subr.mxu0 0.0
  %569 = vmatpush1.msra.mxu0 0.0
  %570 = vmatprep.subr.mxu0 0.0
  %571 = vmatpush1.msra.mxu0 0.0
  %572 = vmatprep.subr.mxu0 0.0
  %573 = vmatpush1.msra.mxu0 0.0
  %574 = vmatprep.subr.mxu0 0.0
  %575 = vmatpush1.msra.mxu0 0.0
  %576 = vmatprep.subr.mxu0 0.0
  %577 = vmatpush1.msra.mxu0 0.0
  %578 = vmatprep.subr.mxu0 0.0
  %579 = vmatpush1.msra.mxu0 0.0
  %580 = vmatprep.subr.mxu0 0.0
  %581 = vmatpush1.msra.mxu0 0.0
  %582 = vmatprep.subr.mxu0 0.0
  %583 = vmatpush1.msra.mxu0 0.0
  %584 = vmatprep.subr.mxu0 0.0
  %585 = vmatpush1.msra.mxu0 0.0
  %586 = vmatprep.subr.mxu0 0.0
  %587 = vmatpush1.msra.mxu0 0.0
  %588 = vmatprep.subr.mxu0 0.0
  %589 = vmatpush1.msra.mxu0 0.0
  %590 = vmatprep.subr.mxu0 0.0
  %591 = vmatpush1.msra.mxu0 0.0
  %592 = vmatprep.subr.mxu0 0.0
  %593 = vmatpush1.msra.mxu0 0.0
  %594 = vmatprep.subr.mxu0 0.0
  %595 = vmatpush1.msra.mxu0 0.0
  %596 = vmatprep.subr.mxu0 0.0
  %597 = vmatpush1.msra.mxu0 0.0
  %598 = vmatprep.subr.mxu0 0.0
  %599 = vmatpush1.msra.mxu0 0.0
  %600 = vmatprep.subr.mxu0 0.0
  %601 = vmatpush1.msra.mxu0 0.0
  %602 = vmatprep.subr.mxu0 0.0
  %603 = vmatpush1.msra.mxu0 0.0
  %604 = vmatprep.subr.mxu0 0.0
  %605 = vmatpush1.msra.mxu0 0.0
  %606 = vmatprep.mubr.f32.mxu0 0.0
  %607 = vmatmul.mubr.f32.gmra.mrb[0].mxu0 %v540
  %v608 = vpop.f32.mrb[0].mxu0
  %v609 = vadd.f32 %v539, %v608
  %v610 = vpop.f32.mrb[0].mxu0
  %611 = vdwg.mxu0
  %s612 = scalar_lea.vmem [#allocation3], 48
  %v613 = vld [vmem:[%s612] sm:$0xff]
  %v614 = vsel %vm333, %v534, 0
  %616 = vmatprep.subr.mxu0 0.0
  %617 = vmatpush1.msra.mxu0 %v328
  %618 = vmatprep.subr.mxu0 0.0
  %619 = vmatpush1.msra.mxu0 %v329
  %620 = vmatprep.subr.mxu0 0.0
  %621 = vmatpush1.msra.mxu0 %v330
  %622 = vmatprep.subr.mxu0 0.0
  %623 = vmatpush1.msra.mxu0 %v331
  %624 = vmatprep.subr.mxu0 0.0
  %625 = vmatpush1.msra.mxu0 0.0
  %626 = vmatprep.subr.mxu0 0.0
  %627 = vmatpush1.msra.mxu0 0.0
  %628 = vmatprep.subr.mxu0 0.0
  %629 = vmatpush1.msra.mxu0 0.0
  %630 = vmatprep.subr.mxu0 0.0
  %631 = vmatpush1.msra.mxu0 0.0
  %632 = vmatprep.subr.mxu0 0.0
  %633 = vmatpush1.msra.mxu0 0.0
  %634 = vmatprep.subr.mxu0 0.0
  %635 = vmatpush1.msra.mxu0 0.0
  %636 = vmatprep.subr.mxu0 0.0
  %637 = vmatpush1.msra.mxu0 0.0
  %638 = vmatprep.subr.mxu0 0.0
  %639 = vmatpush1.msra.mxu0 0.0
  %640 = vmatprep.subr.mxu0 0.0
  %641 = vmatpush1.msra.mxu0 0.0
  %642 = vmatprep.subr.mxu0 0.0
  %643 = vmatpush1.msra.mxu0 0.0
  %644 = vmatprep.subr.mxu0 0.0
  %645 = vmatpush1.msra.mxu0 0.0
  %646 = vmatprep.subr.mxu0 0.0
  %647 = vmatpush1.msra.mxu0 0.0
  %648 = vmatprep.subr.mxu0 0.0
  %649 = vmatpush1.msra.mxu0 0.0
  %650 = vmatprep.subr.mxu0 0.0
  %651 = vmatpush1.msra.mxu0 0.0
  %652 = vmatprep.subr.mxu0 0.0
  %653 = vmatpush1.msra.mxu0 0.0
  %654 = vmatprep.subr.mxu0 0.0
  %655 = vmatpush1.msra.mxu0 0.0
  %656 = vmatprep.subr.mxu0 0.0
  %657 = vmatpush1.msra.mxu0 0.0
  %658 = vmatprep.subr.mxu0 0.0
  %659 = vmatpush1.msra.mxu0 0.0
  %660 = vmatprep.subr.mxu0 0.0
  %661 = vmatpush1.msra.mxu0 0.0
  %662 = vmatprep.subr.mxu0 0.0
  %663 = vmatpush1.msra.mxu0 0.0
  %664 = vmatprep.subr.mxu0 0.0
  %665 = vmatpush1.msra.mxu0 0.0
  %666 = vmatprep.subr.mxu0 0.0
  %667 = vmatpush1.msra.mxu0 0.0
  %668 = vmatprep.subr.mxu0 0.0
  %669 = vmatpush1.msra.mxu0 0.0
  %670 = vmatprep.subr.mxu0 0.0
  %671 = vmatpush1.msra.mxu0 0.0
  %672 = vmatprep.subr.mxu0 0.0
  %673 = vmatpush1.msra.mxu0 0.0
  %674 = vmatprep.subr.mxu0 0.0
  %675 = vmatpush1.msra.mxu0 0.0
  %676 = vmatprep.subr.mxu0 0.0
  %677 = vmatpush1.msra.mxu0 0.0
  %678 = vmatprep.subr.mxu0 0.0
  %679 = vmatpush1.msra.mxu0 0.0
  %680 = vmatprep.mubr.f32.mxu0 0.0
  %681 = vmatmul.mubr.f32.gmra.mrb[0].mxu0 %v614
  %v682 = vpop.f32.mrb[0].mxu0
  %v683 = vadd.f32 %v613, %v682
  %v684 = vpop.f32.mrb[0].mxu0
  %685 = vdwg.mxu0
  %v686 = vxor.u32 %v609, 2147483648
  %v687 = vmul.f32 %v686, 1.442695
  %v688 = vpow.pop %v687
  %v689 = vadd.f32 %v688, 1.0
  %v690 = vrcp.pop %v689
  %v691 = vmul.f32 1.0, %v690
  %v692 = vtanh.pop %v609
  %v693 = vmul.f32 %v691, %v496
  %695 = vrot.lane.b32.xlu0 %v692, 64
  %v696 = vpop.permute.xlu0 %695
  %v698 = vmul.f32 %v691, %v696
  %700 = vrot.lane.b32.xlu0 %v698, 32
  %v701 = vpop.permute.xlu0 %700
  %v703 = vadd.f32 %v693, %v701
  %v704 = vtanh.pop %v703
  %706 = vrot.lane.b32.xlu0 %v704, 64
  %v707 = vpop.permute.xlu0 %706
  %v709 = vmul.f32 %v691, %v707
  %v710 = vxor.u32 %v683, 2147483648
  %v711 = vmul.f32 %v710, 1.442695
  %v712 = vpow.pop %v711
  %v713 = vadd.f32 %v712, 1.0
  %v714 = vrcp.pop %v713
  %v715 = vmul.f32 1.0, %v714
  %v716 = vtanh.pop %v683
  %v717 = vmul.f32 %v715, %v520
  %719 = vrot.lane.b32.xlu0 %v716, 64
  %v720 = vpop.permute.xlu0 %719
  %v722 = vmul.f32 %v715, %v720
  %724 = vrot.lane.b32.xlu0 %v722, 32
  %v725 = vpop.permute.xlu0 %724
  %v727 = vadd.f32 %v717, %v725
  %v728 = vtanh.pop %v727
  %730 = vrot.lane.b32.xlu0 %v728, 64
  %v731 = vpop.permute.xlu0 %730
  %v733 = vmul.f32 %v715, %v731
  %735 = vrot.lane.b32.xlu0 %v709, 32
  %v736 = vpop.permute.xlu0 %735
  %s738 = scalar_lea.vmem [#allocation4], 8
  %739 = vst.msk [vmem:[%s738] sm:$0xff] %vm333, %v736
  %741 = vrot.lane.b32.xlu0 %v733, 32
  %v742 = vpop.permute.xlu0 %741
  %s744 = scalar_lea.vmem [#allocation5], 48
  %745 = vst.msk [vmem:[%s744] sm:$0xff] %vm333, %v742
  %s746 = scalar_lea.vmem [#allocation2], 16
  %v747 = vld [vmem:[%s746] sm:$0xff]
  %v748 = vsel %vm333, %v736, 0
  %750 = vmatprep.subr.mxu0 0.0
  %751 = vmatpush1.msra.mxu0 %v324
  %752 = vmatprep.subr.mxu0 0.0
  %753 = vmatpush1.msra.mxu0 %v325
  %754 = vmatprep.subr.mxu0 0.0
  %755 = vmatpush1.msra.mxu0 %v326
  %756 = vmatprep.subr.mxu0 0.0
  %757 = vmatpush1.msra.mxu0 %v327
  %758 = vmatprep.subr.mxu0 0.0
  %759 = vmatpush1.msra.mxu0 0.0
  %760 = vmatprep.subr.mxu0 0.0
  %761 = vmatpush1.msra.mxu0 0.0
  %762 = vmatprep.subr.mxu0 0.0
  %763 = vmatpush1.msra.mxu0 0.0
  %764 = vmatprep.subr.mxu0 0.0
  %765 = vmatpush1.msra.mxu0 0.0
  %766 = vmatprep.subr.mxu0 0.0
  %767 = vmatpush1.msra.mxu0 0.0
  %768 = vmatprep.subr.mxu0 0.0
  %769 = vmatpush1.msra.mxu0 0.0
  %770 = vmatprep.subr.mxu0 0.0
  %771 = vmatpush1.msra.mxu0 0.0
  %772 = vmatprep.subr.mxu0 0.0
  %773 = vmatpush1.msra.mxu0 0.0
  %774 = vmatprep.subr.mxu0 0.0
  %775 = vmatpush1.msra.mxu0 0.0
  %776 = vmatprep.subr.mxu0 0.0
  %777 = vmatpush1.msra.mxu0 0.0
  %778 = vmatprep.subr.mxu0 0.0
  %779 = vmatpush1.msra.mxu0 0.0
  %780 = vmatprep.subr.mxu0 0.0
  %781 = vmatpush1.msra.mxu0 0.0
  %782 = vmatprep.subr.mxu0 0.0
  %783 = vmatpush1.msra.mxu0 0.0
  %784 = vmatprep.subr.mxu0 0.0
  %785 = vmatpush1.msra.mxu0 0.0
  %786 = vmatprep.subr.mxu0 0.0
  %787 = vmatpush1.msra.mxu0 0.0
  %788 = vmatprep.subr.mxu0 0.0
  %789 = vmatpush1.msra.mxu0 0.0
  %790 = vmatprep.subr.mxu0 0.0
  %791 = vmatpush1.msra.mxu0 0.0
  %792 = vmatprep.subr.mxu0 0.0
  %793 = vmatpush1.msra.mxu0 0.0
  %794 = vmatprep.subr.mxu0 0.0
  %795 = vmatpush1.msra.mxu0 0.0
  %796 = vmatprep.subr.mxu0 0.0
  %797 = vmatpush1.msra.mxu0 0.0
  %798 = vmatprep.subr.mxu0 0.0
  %799 = vmatpush1.msra.mxu0 0.0
  %800 = vmatprep.subr.mxu0 0.0
  %801 = vmatpush1.msra.mxu0 0.0
  %802 = vmatprep.subr.mxu0 0.0
  %803 = vmatpush1.msra.mxu0 0.0
  %804 = vmatprep.subr.mxu0 0.0
  %805 = vmatpush1.msra.mxu0 0.0
  %806 = vmatprep.subr.mxu0 0.0
  %807 = vmatpush1.msra.mxu0 0.0
  %808 = vmatprep.subr.mxu0 0.0
  %809 = vmatpush1.msra.mxu0 0.0
  %810 = vmatprep.subr.mxu0 0.0
  %811 = vmatpush1.msra.mxu0 0.0
  %812 = vmatprep.subr.mxu0 0.0
  %813 = vmatpush1.msra.mxu0 0.0
  %814 = vmatprep.mubr.f32.mxu0 0.0
  %815 = vmatmul.mubr.f32.gmra.mrb[0].mxu0 %v748
  %v816 = vpop.f32.mrb[0].mxu0
  %v817 = vadd.f32 %v747, %v816
  %v818 = vpop.f32.mrb[0].mxu0
  %819 = vdwg.mxu0
  %s820 = scalar_lea.vmem [#allocation3], 40
  %v821 = vld [vmem:[%s820] sm:$0xff]
  %v822 = vsel %vm333, %v742, 0
  %824 = vmatprep.subr.mxu0 0.0
  %825 = vmatpush1.msra.mxu0 %v328
  %826 = vmatprep.subr.mxu0 0.0
  %827 = vmatpush1.msra.mxu0 %v329
  %828 = vmatprep.subr.mxu0 0.0
  %829 = vmatpush1.msra.mxu0 %v330
  %830 = vmatprep.subr.mxu0 0.0
  %831 = vmatpush1.msra.mxu0 %v331
  %832 = vmatprep.subr.mxu0 0.0
  %833 = vmatpush1.msra.mxu0 0.0
  %834 = vmatprep.subr.mxu0 0.0
  %835 = vmatpush1.msra.mxu0 0.0
  %836 = vmatprep.subr.mxu0 0.0
  %837 = vmatpush1.msra.mxu0 0.0
  %838 = vmatprep.subr.mxu0 0.0
  %839 = vmatpush1.msra.mxu0 0.0
  %840 = vmatprep.subr.mxu0 0.0
  %841 = vmatpush1.msra.mxu0 0.0
  %842 = vmatprep.subr.mxu0 0.0
  %843 = vmatpush1.msra.mxu0 0.0
  %844 = vmatprep.subr.mxu0 0.0
  %845 = vmatpush1.msra.mxu0 0.0
  %846 = vmatprep.subr.mxu0 0.0
  %847 = vmatpush1.msra.mxu0 0.0
  %848 = vmatprep.subr.mxu0 0.0
  %849 = vmatpush1.msra.mxu0 0.0
  %850 = vmatprep.subr.mxu0 0.0
  %851 = vmatpush1.msra.mxu0 0.0
  %852 = vmatprep.subr.mxu0 0.0
  %853 = vmatpush1.msra.mxu0 0.0
  %854 = vmatprep.subr.mxu0 0.0
  %855 = vmatpush1.msra.mxu0 0.0
  %856 = vmatprep.subr.mxu0 0.0
  %857 = vmatpush1.msra.mxu0 0.0
  %858 = vmatprep.subr.mxu0 0.0
  %859 = vmatpush1.msra.mxu0 0.0
  %860 = vmatprep.subr.mxu0 0.0
  %861 = vmatpush1.msra.mxu0 0.0
  %862 = vmatprep.subr.mxu0 0.0
  %863 = vmatpush1.msra.mxu0 0.0
  %864 = vmatprep.subr.mxu0 0.0
  %865 = vmatpush1.msra.mxu0 0.0
  %866 = vmatprep.subr.mxu0 0.0
  %867 = vmatpush1.msra.mxu0 0.0
  %868 = vmatprep.subr.mxu0 0.0
  %869 = vmatpush1.msra.mxu0 0.0
  %870 = vmatprep.subr.mxu0 0.0
  %871 = vmatpush1.msra.mxu0 0.0
  %872 = vmatprep.subr.mxu0 0.0
  %873 = vmatpush1.msra.mxu0 0.0
  %874 = vmatprep.subr.mxu0 0.0
  %875 = vmatpush1.msra.mxu0 0.0
  %876 = vmatprep.subr.mxu0 0.0
  %877 = vmatpush1.msra.mxu0 0.0
  %878 = vmatprep.subr.mxu0 0.0
  %879 = vmatpush1.msra.mxu0 0.0
  %880 = vmatprep.subr.mxu0 0.0
  %881 = vmatpush1.msra.mxu0 0.0
  %882 = vmatprep.subr.mxu0 0.0
  %883 = vmatpush1.msra.mxu0 0.0
  %884 = vmatprep.subr.mxu0 0.0
  %885 = vmatpush1.msra.mxu0 0.0
  %886 = vmatprep.subr.mxu0 0.0
  %887 = vmatpush1.msra.mxu0 0.0
  %888 = vmatprep.mubr.f32.mxu0 0.0
  %889 = vmatmul.mubr.f32.gmra.mrb[0].mxu0 %v822
  %v890 = vpop.f32.mrb[0].mxu0
  %v891 = vadd.f32 %v821, %v890
  %v892 = vpop.f32.mrb[0].mxu0
  %893 = vdwg.mxu0
  %v894 = vxor.u32 %v817, 2147483648
  %v895 = vmul.f32 %v894, 1.442695
  %v896 = vpow.pop %v895
  %v897 = vadd.f32 %v896, 1.0
  %v898 = vrcp.pop %v897
  %v899 = vmul.f32 1.0, %v898
  %v900 = vtanh.pop %v817
  %v901 = vmul.f32 %v899, %v703
  %903 = vrot.lane.b32.xlu0 %v900, 64
  %v904 = vpop.permute.xlu0 %903
  %v906 = vmul.f32 %v899, %v904
  %908 = vrot.lane.b32.xlu0 %v906, 32
  %v909 = vpop.permute.xlu0 %908
  %v911 = vadd.f32 %v901, %v909
  %v912 = vtanh.pop %v911
  %914 = vrot.lane.b32.xlu0 %v912, 64
  %v915 = vpop.permute.xlu0 %914
  %v917 = vmul.f32 %v899, %v915
  %v918 = vxor.u32 %v891, 2147483648
  %v919 = vmul.f32 %v918, 1.442695
  %v920 = vpow.pop %v919
  %v921 = vadd.f32 %v920, 1.0
  %v922 = vrcp.pop %v921
  %v923 = vmul.f32 1.0, %v922
  %v924 = vtanh.pop %v891
  %v925 = vmul.f32 %v923, %v727
  %927 = vrot.lane.b32.xlu0 %v924, 64
  %v928 = vpop.permute.xlu0 %927
  %v930 = vmul.f32 %v923, %v928
  %932 = vrot.lane.b32.xlu0 %v930, 32
  %v933 = vpop.permute.xlu0 %932
  %v935 = vadd.f32 %v925, %v933
  %v936 = vtanh.pop %v935
  %938 = vrot.lane.b32.xlu0 %v936, 64
  %v939 = vpop.permute.xlu0 %938
  %v941 = vmul.f32 %v923, %v939
  %943 = vrot.lane.b32.xlu0 %v917, 32
  %v944 = vpop.permute.xlu0 %943
  %s946 = scalar_lea.vmem [#allocation4], 16
  %947 = vst.msk [vmem:[%s946] sm:$0xff] %vm333, %v944
  %949 = vrot.lane.b32.xlu0 %v941, 32
  %v950 = vpop.permute.xlu0 %949
  %s952 = scalar_lea.vmem [#allocation5], 40
  %953 = vst.msk [vmem:[%s952] sm:$0xff] %vm333, %v950
  %s954 = scalar_lea.vmem [#allocation2], 24
  %v955 = vld [vmem:[%s954] sm:$0xff]
  %v956 = vsel %vm333, %v944, 0
  %958 = vmatprep.subr.mxu0 0.0
  %959 = vmatpush1.msra.mxu0 %v324
  %960 = vmatprep.subr.mxu0 0.0
  %961 = vmatpush1.msra.mxu0 %v325
  %962 = vmatprep.subr.mxu0 0.0
  %963 = vmatpush1.msra.mxu0 %v326
  %964 = vmatprep.subr.mxu0 0.0
  %965 = vmatpush1.msra.mxu0 %v327
  %966 = vmatprep.subr.mxu0 0.0
  %967 = vmatpush1.msra.mxu0 0.0
  %968 = vmatprep.subr.mxu0 0.0
  %969 = vmatpush1.msra.mxu0 0.0
  %970 = vmatprep.subr.mxu0 0.0
  %971 = vmatpush1.msra.mxu0 0.0
  %972 = vmatprep.subr.mxu0 0.0
  %973 = vmatpush1.msra.mxu0 0.0
  %974 = vmatprep.subr.mxu0 0.0
  %975 = vmatpush1.msra.mxu0 0.0
  %976 = vmatprep.subr.mxu0 0.0
  %977 = vmatpush1.msra.mxu0 0.0
  %978 = vmatprep.subr.mxu0 0.0
  %979 = vmatpush1.msra.mxu0 0.0
  %980 = vmatprep.subr.mxu0 0.0
  %981 = vmatpush1.msra.mxu0 0.0
  %982 = vmatprep.subr.mxu0 0.0
  %983 = vmatpush1.msra.mxu0 0.0
  %984 = vmatprep.subr.mxu0 0.0
  %985 = vmatpush1.msra.mxu0 0.0
  %986 = vmatprep.subr.mxu0 0.0
  %987 = vmatpush1.msra.mxu0 0.0
  %988 = vmatprep.subr.mxu0 0.0
  %989 = vmatpush1.msra.mxu0 0.0
  %990 = vmatprep.subr.mxu0 0.0
  %991 = vmatpush1.msra.mxu0 0.0
  %992 = vmatprep.subr.mxu0 0.0
  %993 = vmatpush1.msra.mxu0 0.0
  %994 = vmatprep.subr.mxu0 0.0
  %995 = vmatpush1.msra.mxu0 0.0
  %996 = vmatprep.subr.mxu0 0.0
  %997 = vmatpush1.msra.mxu0 0.0
  %998 = vmatprep.subr.mxu0 0.0
  %999 = vmatpush1.msra.mxu0 0.0
  %1000 = vmatprep.subr.mxu0 0.0
  %1001 = vmatpush1.msra.mxu0 0.0
  %1002 = vmatprep.subr.mxu0 0.0
  %1003 = vmatpush1.msra.mxu0 0.0
  %1004 = vmatprep.subr.mxu0 0.0
  %1005 = vmatpush1.msra.mxu0 0.0
  %1006 = vmatprep.subr.mxu0 0.0
  %1007 = vmatpush1.msra.mxu0 0.0
  %1008 = vmatprep.subr.mxu0 0.0
  %1009 = vmatpush1.msra.mxu0 0.0
  %1010 = vmatprep.subr.mxu0 0.0
  %1011 = vmatpush1.msra.mxu0 0.0
  %1012 = vmatprep.subr.mxu0 0.0
  %1013 = vmatpush1.msra.mxu0 0.0
  %1014 = vmatprep.subr.mxu0 0.0
  %1015 = vmatpush1.msra.mxu0 0.0
  %1016 = vmatprep.subr.mxu0 0.0
  %1017 = vmatpush1.msra.mxu0 0.0
  %1018 = vmatprep.subr.mxu0 0.0
  %1019 = vmatpush1.msra.mxu0 0.0
  %1020 = vmatprep.subr.mxu0 0.0
  %1021 = vmatpush1.msra.mxu0 0.0
  %1022 = vmatprep.mubr.f32.mxu0 0.0
  %1023 = vmatmul.mubr.f32.gmra.mrb[0].mxu0 %v956
  %v1024 = vpop.f32.mrb[0].mxu0
  %v1025 = vadd.f32 %v955, %v1024
  %v1026 = vpop.f32.mrb[0].mxu0
  %1027 = vdwg.mxu0
  %s1028 = scalar_lea.vmem [#allocation3], 32
  %v1029 = vld [vmem:[%s1028] sm:$0xff]
  %v1030 = vsel %vm333, %v950, 0
  %1032 = vmatprep.subr.mxu0 0.0
  %1033 = vmatpush1.msra.mxu0 %v328
  %1034 = vmatprep.subr.mxu0 0.0
  %1035 = vmatpush1.msra.mxu0 %v329
  %1036 = vmatprep.subr.mxu0 0.0
  %1037 = vmatpush1.msra.mxu0 %v330
  %1038 = vmatprep.subr.mxu0 0.0
  %1039 = vmatpush1.msra.mxu0 %v331
  %1040 = vmatprep.subr.mxu0 0.0
  %1041 = vmatpush1.msra.mxu0 0.0
  %1042 = vmatprep.subr.mxu0 0.0
  %1043 = vmatpush1.msra.mxu0 0.0
  %1044 = vmatprep.subr.mxu0 0.0
  %1045 = vmatpush1.msra.mxu0 0.0
  %1046 = vmatprep.subr.mxu0 0.0
  %1047 = vmatpush1.msra.mxu0 0.0
  %1048 = vmatprep.subr.mxu0 0.0
  %1049 = vmatpush1.msra.mxu0 0.0
  %1050 = vmatprep.subr.mxu0 0.0
  %1051 = vmatpush1.msra.mxu0 0.0
  %1052 = vmatprep.subr.mxu0 0.0
  %1053 = vmatpush1.msra.mxu0 0.0
  %1054 = vmatprep.subr.mxu0 0.0
  %1055 = vmatpush1.msra.mxu0 0.0
  %1056 = vmatprep.subr.mxu0 0.0
  %1057 = vmatpush1.msra.mxu0 0.0
  %1058 = vmatprep.subr.mxu0 0.0
  %1059 = vmatpush1.msra.mxu0 0.0
  %1060 = vmatprep.subr.mxu0 0.0
  %1061 = vmatpush1.msra.mxu0 0.0
  %1062 = vmatprep.subr.mxu0 0.0
  %1063 = vmatpush1.msra.mxu0 0.0
  %1064 = vmatprep.subr.mxu0 0.0
  %1065 = vmatpush1.msra.mxu0 0.0
  %1066 = vmatprep.subr.mxu0 0.0
  %1067 = vmatpush1.msra.mxu0 0.0
  %1068 = vmatprep.subr.mxu0 0.0
  %1069 = vmatpush1.msra.mxu0 0.0
  %1070 = vmatprep.subr.mxu0 0.0
  %1071 = vmatpush1.msra.mxu0 0.0
  %1072 = vmatprep.subr.mxu0 0.0
  %1073 = vmatpush1.msra.mxu0 0.0
  %1074 = vmatprep.subr.mxu0 0.0
  %1075 = vmatpush1.msra.mxu0 0.0
  %1076 = vmatprep.subr.mxu0 0.0
  %1077 = vmatpush1.msra.mxu0 0.0
  %1078 = vmatprep.subr.mxu0 0.0
  %1079 = vmatpush1.msra.mxu0 0.0
  %1080 = vmatprep.subr.mxu0 0.0
  %1081 = vmatpush1.msra.mxu0 0.0
  %1082 = vmatprep.subr.mxu0 0.0
  %1083 = vmatpush1.msra.mxu0 0.0
  %1084 = vmatprep.subr.mxu0 0.0
  %1085 = vmatpush1.msra.mxu0 0.0
  %1086 = vmatprep.subr.mxu0 0.0
  %1087 = vmatpush1.msra.mxu0 0.0
  %1088 = vmatprep.subr.mxu0 0.0
  %1089 = vmatpush1.msra.mxu0 0.0
  %1090 = vmatprep.subr.mxu0 0.0
  %1091 = vmatpush1.msra.mxu0 0.0
  %1092 = vmatprep.subr.mxu0 0.0
  %1093 = vmatpush1.msra.mxu0 0.0
  %1094 = vmatprep.subr.mxu0 0.0
  %1095 = vmatpush1.msra.mxu0 0.0
  %1096 = vmatprep.mubr.f32.mxu0 0.0
  %1097 = vmatmul.mubr.f32.gmra.mrb[0].mxu0 %v1030
  %v1098 = vpop.f32.mrb[0].mxu0
  %v1099 = vadd.f32 %v1029, %v1098
  %v1100 = vpop.f32.mrb[0].mxu0
  %1101 = vdwg.mxu0
  %v1102 = vxor.u32 %v1025, 2147483648
  %v1103 = vmul.f32 %v1102, 1.442695
  %v1104 = vpow.pop %v1103
  %v1105 = vadd.f32 %v1104, 1.0
  %v1106 = vrcp.pop %v1105
  %v1107 = vmul.f32 1.0, %v1106
  %v1108 = vtanh.pop %v1025
  %v1109 = vmul.f32 %v1107, %v911
  %1111 = vrot.lane.b32.xlu0 %v1108, 64
  %v1112 = vpop.permute.xlu0 %1111
  %v1114 = vmul.f32 %v1107, %v1112
  %1116 = vrot.lane.b32.xlu0 %v1114, 32
  %v1117 = vpop.permute.xlu0 %1116
  %v1119 = vadd.f32 %v1109, %v1117
  %v1120 = vtanh.pop %v1119
  %1122 = vrot.lane.b32.xlu0 %v1120, 64
  %v1123 = vpop.permute.xlu0 %1122
  %v1125 = vmul.f32 %v1107, %v1123
  %v1126 = vxor.u32 %v1099, 2147483648
  %v1127 = vmul.f32 %v1126, 1.442695
  %v1128 = vpow.pop %v1127
  %v1129 = vadd.f32 %v1128, 1.0
  %v1130 = vrcp.pop %v1129
  %v1131 = vmul.f32 1.0, %v1130
  %v1132 = vtanh.pop %v1099
  %v1133 = vmul.f32 %v1131, %v935
  %1135 = vrot.lane.b32.xlu0 %v1132, 64
  %v1136 = vpop.permute.xlu0 %1135
  %v1138 = vmul.f32 %v1131, %v1136
  %1140 = vrot.lane.b32.xlu0 %v1138, 32
  %v1141 = vpop.permute.xlu0 %1140
  %v1143 = vadd.f32 %v1133, %v1141
  %v1144 = vtanh.pop %v1143
  %1146 = vrot.lane.b32.xlu0 %v1144, 64
  %v1147 = vpop.permute.xlu0 %1146
  %v1149 = vmul.f32 %v1131, %v1147
  %1151 = vrot.lane.b32.xlu0 %v1125, 32
  %v1152 = vpop.permute.xlu0 %1151
  %s1154 = scalar_lea.vmem [#allocation4], 24
  %1155 = vst.msk [vmem:[%s1154] sm:$0xff] %vm333, %v1152
  %1157 = vrot.lane.b32.xlu0 %v1149, 32
  %v1158 = vpop.permute.xlu0 %1157
  %s1160 = scalar_lea.vmem [#allocation5], 32
  %1161 = vst.msk [vmem:[%s1160] sm:$0xff] %vm333, %v1158
  %s1162 = scalar_lea.vmem [#allocation2], 32
  %v1163 = vld [vmem:[%s1162] sm:$0xff]
  %v1164 = vsel %vm333, %v1152, 0
  %1166 = vmatprep.subr.mxu0 0.0
  %1167 = vmatpush1.msra.mxu0 %v324
  %1168 = vmatprep.subr.mxu0 0.0
  %1169 = vmatpush1.msra.mxu0 %v325
  %1170 = vmatprep.subr.mxu0 0.0
  %1171 = vmatpush1.msra.mxu0 %v326
  %1172 = vmatprep.subr.mxu0 0.0
  %1173 = vmatpush1.msra.mxu0 %v327
  %1174 = vmatprep.subr.mxu0 0.0
  %1175 = vmatpush1.msra.mxu0 0.0
  %1176 = vmatprep.subr.mxu0 0.0
  %1177 = vmatpush1.msra.mxu0 0.0
  %1178 = vmatprep.subr.mxu0 0.0
  %1179 = vmatpush1.msra.mxu0 0.0
  %1180 = vmatprep.subr.mxu0 0.0
  %1181 = vmatpush1.msra.mxu0 0.0
  %1182 = vmatprep.subr.mxu0 0.0
  %1183 = vmatpush1.msra.mxu0 0.0
  %1184 = vmatprep.subr.mxu0 0.0
  %1185 = vmatpush1.msra.mxu0 0.0
  %1186 = vmatprep.subr.mxu0 0.0
  %1187 = vmatpush1.msra.mxu0 0.0
  %1188 = vmatprep.subr.mxu0 0.0
  %1189 = vmatpush1.msra.mxu0 0.0
  %1190 = vmatprep.subr.mxu0 0.0
  %1191 = vmatpush1.msra.mxu0 0.0
  %1192 = vmatprep.subr.mxu0 0.0
  %1193 = vmatpush1.msra.mxu0 0.0
  %1194 = vmatprep.subr.mxu0 0.0
  %1195 = vmatpush1.msra.mxu0 0.0
  %1196 = vmatprep.subr.mxu0 0.0
  %1197 = vmatpush1.msra.mxu0 0.0
  %1198 = vmatprep.subr.mxu0 0.0
  %1199 = vmatpush1.msra.mxu0 0.0
  %1200 = vmatprep.subr.mxu0 0.0
  %1201 = vmatpush1.msra.mxu0 0.0
  %1202 = vmatprep.subr.mxu0 0.0
  %1203 = vmatpush1.msra.mxu0 0.0
  %1204 = vmatprep.subr.mxu0 0.0
  %1205 = vmatpush1.msra.mxu0 0.0
  %1206 = vmatprep.subr.mxu0 0.0
  %1207 = vmatpush1.msra.mxu0 0.0
  %1208 = vmatprep.subr.mxu0 0.0
  %1209 = vmatpush1.msra.mxu0 0.0
  %1210 = vmatprep.subr.mxu0 0.0
  %1211 = vmatpush1.msra.mxu0 0.0
  %1212 = vmatprep.subr.mxu0 0.0
  %1213 = vmatpush1.msra.mxu0 0.0
  %1214 = vmatprep.subr.mxu0 0.0
  %1215 = vmatpush1.msra.mxu0 0.0
  %1216 = vmatprep.subr.mxu0 0.0
  %1217 = vmatpush1.msra.mxu0 0.0
  %1218 = vmatprep.subr.mxu0 0.0
  %1219 = vmatpush1.msra.mxu0 0.0
  %1220 = vmatprep.subr.mxu0 0.0
  %1221 = vmatpush1.msra.mxu0 0.0
  %1222 = vmatprep.subr.mxu0 0.0
  %1223 = vmatpush1.msra.mxu0 0.0
  %1224 = vmatprep.subr.mxu0 0.0
  %1225 = vmatpush1.msra.mxu0 0.0
  %1226 = vmatprep.subr.mxu0 0.0
  %1227 = vmatpush1.msra.mxu0 0.0
  %1228 = vmatprep.subr.mxu0 0.0
  %1229 = vmatpush1.msra.mxu0 0.0
  %1230 = vmatprep.mubr.f32.mxu0 0.0
  %1231 = vmatmul.mubr.f32.gmra.mrb[0].mxu0 %v1164
  %v1232 = vpop.f32.mrb[0].mxu0
  %v1233 = vadd.f32 %v1163, %v1232
  %v1234 = vpop.f32.mrb[0].mxu0
  %1235 = vdwg.mxu0
  %s1236 = scalar_lea.vmem [#allocation3], 24
  %v1237 = vld [vmem:[%s1236] sm:$0xff]
  %v1238 = vsel %vm333, %v1158, 0
  %1240 = vmatprep.subr.mxu0 0.0
  %1241 = vmatpush1.msra.mxu0 %v328
  %1242 = vmatprep.subr.mxu0 0.0
  %1243 = vmatpush1.msra.mxu0 %v329
  %1244 = vmatprep.subr.mxu0 0.0
  %1245 = vmatpush1.msra.mxu0 %v330
  %1246 = vmatprep.subr.mxu0 0.0
  %1247 = vmatpush1.msra.mxu0 %v331
  %1248 = vmatprep.subr.mxu0 0.0
  %1249 = vmatpush1.msra.mxu0 0.0
  %1250 = vmatprep.subr.mxu0 0.0
  %1251 = vmatpush1.msra.mxu0 0.0
  %1252 = vmatprep.subr.mxu0 0.0
  %1253 = vmatpush1.msra.mxu0 0.0
  %1254 = vmatprep.subr.mxu0 0.0
  %1255 = vmatpush1.msra.mxu0 0.0
  %1256 = vmatprep.subr.mxu0 0.0
  %1257 = vmatpush1.msra.mxu0 0.0
  %1258 = vmatprep.subr.mxu0 0.0
  %1259 = vmatpush1.msra.mxu0 0.0
  %1260 = vmatprep.subr.mxu0 0.0
  %1261 = vmatpush1.msra.mxu0 0.0
  %1262 = vmatprep.subr.mxu0 0.0
  %1263 = vmatpush1.msra.mxu0 0.0
  %1264 = vmatprep.subr.mxu0 0.0
  %1265 = vmatpush1.msra.mxu0 0.0
  %1266 = vmatprep.subr.mxu0 0.0
  %1267 = vmatpush1.msra.mxu0 0.0
  %1268 = vmatprep.subr.mxu0 0.0
  %1269 = vmatpush1.msra.mxu0 0.0
  %1270 = vmatprep.subr.mxu0 0.0
  %1271 = vmatpush1.msra.mxu0 0.0
  %1272 = vmatprep.subr.mxu0 0.0
  %1273 = vmatpush1.msra.mxu0 0.0
  %1274 = vmatprep.subr.mxu0 0.0
  %1275 = vmatpush1.msra.mxu0 0.0
  %1276 = vmatprep.subr.mxu0 0.0
  %1277 = vmatpush1.msra.mxu0 0.0
  %1278 = vmatprep.subr.mxu0 0.0
  %1279 = vmatpush1.msra.mxu0 0.0
  %1280 = vmatprep.subr.mxu0 0.0
  %1281 = vmatpush1.msra.mxu0 0.0
  %1282 = vmatprep.subr.mxu0 0.0
  %1283 = vmatpush1.msra.mxu0 0.0
  %1284 = vmatprep.subr.mxu0 0.0
  %1285 = vmatpush1.msra.mxu0 0.0
  %1286 = vmatprep.subr.mxu0 0.0
  %1287 = vmatpush1.msra.mxu0 0.0
  %1288 = vmatprep.subr.mxu0 0.0
  %1289 = vmatpush1.msra.mxu0 0.0
  %1290 = vmatprep.subr.mxu0 0.0
  %1291 = vmatpush1.msra.mxu0 0.0
  %1292 = vmatprep.subr.mxu0 0.0
  %1293 = vmatpush1.msra.mxu0 0.0
  %1294 = vmatprep.subr.mxu0 0.0
  %1295 = vmatpush1.msra.mxu0 0.0
  %1296 = vmatprep.subr.mxu0 0.0
  %1297 = vmatpush1.msra.mxu0 0.0
  %1298 = vmatprep.subr.mxu0 0.0
  %1299 = vmatpush1.msra.mxu0 0.0
  %1300 = vmatprep.subr.mxu0 0.0
  %1301 = vmatpush1.msra.mxu0 0.0
  %1302 = vmatprep.subr.mxu0 0.0
  %1303 = vmatpush1.msra.mxu0 0.0
  %1304 = vmatprep.mubr.f32.mxu0 0.0
  %1305 = vmatmul.mubr.f32.gmra.mrb[0].mxu0 %v1238
  %v1306 = vpop.f32.mrb[0].mxu0
  %v1307 = vadd.f32 %v1237, %v1306
  %v1308 = vpop.f32.mrb[0].mxu0
  %1309 = vdwg.mxu0
  %v1310 = vxor.u32 %v1233, 2147483648
  %v1311 = vmul.f32 %v1310, 1.442695
  %v1312 = vpow.pop %v1311
  %v1313 = vadd.f32 %v1312, 1.0
  %v1314 = vrcp.pop %v1313
  %v1315 = vmul.f32 1.0, %v1314
  %v1316 = vtanh.pop %v1233
  %v1317 = vmul.f32 %v1315, %v1119
  %1319 = vrot.lane.b32.xlu0 %v1316, 64
  %v1320 = vpop.permute.xlu0 %1319
  %v1322 = vmul.f32 %v1315, %v1320
  %1324 = vrot.lane.b32.xlu0 %v1322, 32
  %v1325 = vpop.permute.xlu0 %1324
  %v1327 = vadd.f32 %v1317, %v1325
  %v1328 = vtanh.pop %v1327
  %1330 = vrot.lane.b32.xlu0 %v1328, 64
  %v1331 = vpop.permute.xlu0 %1330
  %v1333 = vmul.f32 %v1315, %v1331
  %v1334 = vxor.u32 %v1307, 2147483648
  %v1335 = vmul.f32 %v1334, 1.442695
  %v1336 = vpow.pop %v1335
  %v1337 = vadd.f32 %v1336, 1.0
  %v1338 = vrcp.pop %v1337
  %v1339 = vmul.f32 1.0, %v1338
  %v1340 = vtanh.pop %v1307
  %v1341 = vmul.f32 %v1339, %v1143
  %1343 = vrot.lane.b32.xlu0 %v1340, 64
  %v1344 = vpop.permute.xlu0 %1343
  %v1346 = vmul.f32 %v1339, %v1344
  %1348 = vrot.lane.b32.xlu0 %v1346, 32
  %v1349 = vpop.permute.xlu0 %1348
  %v1351 = vadd.f32 %v1341, %v1349
  %v1352 = vtanh.pop %v1351
  %1354 = vrot.lane.b32.xlu0 %v1352, 64
  %v1355 = vpop.permute.xlu0 %1354
  %v1357 = vmul.f32 %v1339, %v1355
  %1359 = vrot.lane.b32.xlu0 %v1333, 32
  %v1360 = vpop.permute.xlu0 %1359
  %s1362 = scalar_lea.vmem [#allocation4], 32
  %1363 = vst.msk [vmem:[%s1362] sm:$0xff] %vm333, %v1360
  %1365 = vrot.lane.b32.xlu0 %v1357, 32
  %v1366 = vpop.permute.xlu0 %1365
  %s1368 = scalar_lea.vmem [#allocation5], 24
  %1369 = vst.msk [vmem:[%s1368] sm:$0xff] %vm333, %v1366
  %s1370 = scalar_lea.vmem [#allocation2], 40
  %v1371 = vld [vmem:[%s1370] sm:$0xff]
  %v1372 = vsel %vm333, %v1360, 0
  %1374 = vmatprep.subr.mxu0 0.0
  %1375 = vmatpush1.msra.mxu0 %v324
  %1376 = vmatprep.subr.mxu0 0.0
  %1377 = vmatpush1.msra.mxu0 %v325
  %1378 = vmatprep.subr.mxu0 0.0
  %1379 = vmatpush1.msra.mxu0 %v326
  %1380 = vmatprep.subr.mxu0 0.0
  %1381 = vmatpush1.msra.mxu0 %v327
  %1382 = vmatprep.subr.mxu0 0.0
  %1383 = vmatpush1.msra.mxu0 0.0
  %1384 = vmatprep.subr.mxu0 0.0
  %1385 = vmatpush1.msra.mxu0 0.0
  %1386 = vmatprep.subr.mxu0 0.0
  %1387 = vmatpush1.msra.mxu0 0.0
  %1388 = vmatprep.subr.mxu0 0.0
  %1389 = vmatpush1.msra.mxu0 0.0
  %1390 = vmatprep.subr.mxu0 0.0
  %1391 = vmatpush1.msra.mxu0 0.0
  %1392 = vmatprep.subr.mxu0 0.0
  %1393 = vmatpush1.msra.mxu0 0.0
  %1394 = vmatprep.subr.mxu0 0.0
  %1395 = vmatpush1.msra.mxu0 0.0
  %1396 = vmatprep.subr.mxu0 0.0
  %1397 = vmatpush1.msra.mxu0 0.0
  %1398 = vmatprep.subr.mxu0 0.0
  %1399 = vmatpush1.msra.mxu0 0.0
  %1400 = vmatprep.subr.mxu0 0.0
  %1401 = vmatpush1.msra.mxu0 0.0
  %1402 = vmatprep.subr.mxu0 0.0
  %1403 = vmatpush1.msra.mxu0 0.0
  %1404 = vmatprep.subr.mxu0 0.0
  %1405 = vmatpush1.msra.mxu0 0.0
  %1406 = vmatprep.subr.mxu0 0.0
  %1407 = vmatpush1.msra.mxu0 0.0
  %1408 = vmatprep.subr.mxu0 0.0
  %1409 = vmatpush1.msra.mxu0 0.0
  %1410 = vmatprep.subr.mxu0 0.0
  %1411 = vmatpush1.msra.mxu0 0.0
  %1412 = vmatprep.subr.mxu0 0.0
  %1413 = vmatpush1.msra.mxu0 0.0
  %1414 = vmatprep.subr.mxu0 0.0
  %1415 = vmatpush1.msra.mxu0 0.0
  %1416 = vmatprep.subr.mxu0 0.0
  %1417 = vmatpush1.msra.mxu0 0.0
  %1418 = vmatprep.subr.mxu0 0.0
  %1419 = vmatpush1.msra.mxu0 0.0
  %1420 = vmatprep.subr.mxu0 0.0
  %1421 = vmatpush1.msra.mxu0 0.0
  %1422 = vmatprep.subr.mxu0 0.0
  %1423 = vmatpush1.msra.mxu0 0.0
  %1424 = vmatprep.subr.mxu0 0.0
  %1425 = vmatpush1.msra.mxu0 0.0
  %1426 = vmatprep.subr.mxu0 0.0
  %1427 = vmatpush1.msra.mxu0 0.0
  %1428 = vmatprep.subr.mxu0 0.0
  %1429 = vmatpush1.msra.mxu0 0.0
  %1430 = vmatprep.subr.mxu0 0.0
  %1431 = vmatpush1.msra.mxu0 0.0
  %1432 = vmatprep.subr.mxu0 0.0
  %1433 = vmatpush1.msra.mxu0 0.0
  %1434 = vmatprep.subr.mxu0 0.0
  %1435 = vmatpush1.msra.mxu0 0.0
  %1436 = vmatprep.subr.mxu0 0.0
  %1437 = vmatpush1.msra.mxu0 0.0
  %1438 = vmatprep.mubr.f32.mxu0 0.0
  %1439 = vmatmul.mubr.f32.gmra.mrb[0].mxu0 %v1372
  %v1440 = vpop.f32.mrb[0].mxu0
  %v1441 = vadd.f32 %v1371, %v1440
  %v1442 = vpop.f32.mrb[0].mxu0
  %1443 = vdwg.mxu0
  %s1444 = scalar_lea.vmem [#allocation3], 16
  %v1445 = vld [vmem:[%s1444] sm:$0xff]
  %v1446 = vsel %vm333, %v1366, 0
  %1448 = vmatprep.subr.mxu0 0.0
  %1449 = vmatpush1.msra.mxu0 %v328
  %1450 = vmatprep.subr.mxu0 0.0
  %1451 = vmatpush1.msra.mxu0 %v329
  %1452 = vmatprep.subr.mxu0 0.0
  %1453 = vmatpush1.msra.mxu0 %v330
  %1454 = vmatprep.subr.mxu0 0.0
  %1455 = vmatpush1.msra.mxu0 %v331
  %1456 = vmatprep.subr.mxu0 0.0
  %1457 = vmatpush1.msra.mxu0 0.0
  %1458 = vmatprep.subr.mxu0 0.0
  %1459 = vmatpush1.msra.mxu0 0.0
  %1460 = vmatprep.subr.mxu0 0.0
  %1461 = vmatpush1.msra.mxu0 0.0
  %1462 = vmatprep.subr.mxu0 0.0
  %1463 = vmatpush1.msra.mxu0 0.0
  %1464 = vmatprep.subr.mxu0 0.0
  %1465 = vmatpush1.msra.mxu0 0.0
  %1466 = vmatprep.subr.mxu0 0.0
  %1467 = vmatpush1.msra.mxu0 0.0
  %1468 = vmatprep.subr.mxu0 0.0
  %1469 = vmatpush1.msra.mxu0 0.0
  %1470 = vmatprep.subr.mxu0 0.0
  %1471 = vmatpush1.msra.mxu0 0.0
  %1472 = vmatprep.subr.mxu0 0.0
  %1473 = vmatpush1.msra.mxu0 0.0
  %1474 = vmatprep.subr.mxu0 0.0
  %1475 = vmatpush1.msra.mxu0 0.0
  %1476 = vmatprep.subr.mxu0 0.0
  %1477 = vmatpush1.msra.mxu0 0.0
  %1478 = vmatprep.subr.mxu0 0.0
  %1479 = vmatpush1.msra.mxu0 0.0
  %1480 = vmatprep.subr.mxu0 0.0
  %1481 = vmatpush1.msra.mxu0 0.0
  %1482 = vmatprep.subr.mxu0 0.0
  %1483 = vmatpush1.msra.mxu0 0.0
  %1484 = vmatprep.subr.mxu0 0.0
  %1485 = vmatpush1.msra.mxu0 0.0
  %1486 = vmatprep.subr.mxu0 0.0
  %1487 = vmatpush1.msra.mxu0 0.0
  %1488 = vmatprep.subr.mxu0 0.0
  %1489 = vmatpush1.msra.mxu0 0.0
  %1490 = vmatprep.subr.mxu0 0.0
  %1491 = vmatpush1.msra.mxu0 0.0
  %1492 = vmatprep.subr.mxu0 0.0
  %1493 = vmatpush1.msra.mxu0 0.0
  %1494 = vmatprep.subr.mxu0 0.0
  %1495 = vmatpush1.msra.mxu0 0.0
  %1496 = vmatprep.subr.mxu0 0.0
  %1497 = vmatpush1.msra.mxu0 0.0
  %1498 = vmatprep.subr.mxu0 0.0
  %1499 = vmatpush1.msra.mxu0 0.0
  %1500 = vmatprep.subr.mxu0 0.0
  %1501 = vmatpush1.msra.mxu0 0.0
  %1502 = vmatprep.subr.mxu0 0.0
  %1503 = vmatpush1.msra.mxu0 0.0
  %1504 = vmatprep.subr.mxu0 0.0
  %1505 = vmatpush1.msra.mxu0 0.0
  %1506 = vmatprep.subr.mxu0 0.0
  %1507 = vmatpush1.msra.mxu0 0.0
  %1508 = vmatprep.subr.mxu0 0.0
  %1509 = vmatpush1.msra.mxu0 0.0
  %1510 = vmatprep.subr.mxu0 0.0
  %1511 = vmatpush1.msra.mxu0 0.0
  %1512 = vmatprep.mubr.f32.mxu0 0.0
  %1513 = vmatmul.mubr.f32.gmra.mrb[0].mxu0 %v1446
  %v1514 = vpop.f32.mrb[0].mxu0
  %v1515 = vadd.f32 %v1445, %v1514
  %v1516 = vpop.f32.mrb[0].mxu0
  %1517 = vdwg.mxu0
  %v1518 = vxor.u32 %v1441, 2147483648
  %v1519 = vmul.f32 %v1518, 1.442695
  %v1520 = vpow.pop %v1519
  %v1521 = vadd.f32 %v1520, 1.0
  %v1522 = vrcp.pop %v1521
  %v1523 = vmul.f32 1.0, %v1522
  %v1524 = vtanh.pop %v1441
  %v1525 = vmul.f32 %v1523, %v1327
  %1527 = vrot.lane.b32.xlu0 %v1524, 64
  %v1528 = vpop.permute.xlu0 %1527
  %v1530 = vmul.f32 %v1523, %v1528
  %1532 = vrot.lane.b32.xlu0 %v1530, 32
  %v1533 = vpop.permute.xlu0 %1532
  %v1535 = vadd.f32 %v1525, %v1533
  %v1536 = vtanh.pop %v1535
  %1538 = vrot.lane.b32.xlu0 %v1536, 64
  %v1539 = vpop.permute.xlu0 %1538
  %v1541 = vmul.f32 %v1523, %v1539
  %v1542 = vxor.u32 %v1515, 2147483648
  %v1543 = vmul.f32 %v1542, 1.442695
  %v1544 = vpow.pop %v1543
  %v1545 = vadd.f32 %v1544, 1.0
  %v1546 = vrcp.pop %v1545
  %v1547 = vmul.f32 1.0, %v1546
  %v1548 = vtanh.pop %v1515
  %v1549 = vmul.f32 %v1547, %v1351
  %1551 = vrot.lane.b32.xlu0 %v1548, 64
  %v1552 = vpop.permute.xlu0 %1551
  %v1554 = vmul.f32 %v1547, %v1552
  %1556 = vrot.lane.b32.xlu0 %v1554, 32
  %v1557 = vpop.permute.xlu0 %1556
  %v1559 = vadd.f32 %v1549, %v1557
  %v1560 = vtanh.pop %v1559
  %1562 = vrot.lane.b32.xlu0 %v1560, 64
  %v1563 = vpop.permute.xlu0 %1562
  %v1565 = vmul.f32 %v1547, %v1563
  %1567 = vrot.lane.b32.xlu0 %v1541, 32
  %v1568 = vpop.permute.xlu0 %1567
  %s1570 = scalar_lea.vmem [#allocation4], 40
  %1571 = vst.msk [vmem:[%s1570] sm:$0xff] %vm333, %v1568
  %1573 = vrot.lane.b32.xlu0 %v1565, 32
  %v1574 = vpop.permute.xlu0 %1573
  %s1576 = scalar_lea.vmem [#allocation5], 16
  %1577 = vst.msk [vmem:[%s1576] sm:$0xff] %vm333, %v1574
  %s1578 = scalar_lea.vmem [#allocation2], 48
  %v1579 = vld [vmem:[%s1578] sm:$0xff]
  %v1580 = vsel %vm333, %v1568, 0
  %1582 = vmatprep.subr.mxu0 0.0
  %1583 = vmatpush1.msra.mxu0 %v324
  %1584 = vmatprep.subr.mxu0 0.0
  %1585 = vmatpush1.msra.mxu0 %v325
  %1586 = vmatprep.subr.mxu0 0.0
  %1587 = vmatpush1.msra.mxu0 %v326
  %1588 = vmatprep.subr.mxu0 0.0
  %1589 = vmatpush1.msra.mxu0 %v327
  %1590 = vmatprep.subr.mxu0 0.0
  %1591 = vmatpush1.msra.mxu0 0.0
  %1592 = vmatprep.subr.mxu0 0.0
  %1593 = vmatpush1.msra.mxu0 0.0
  %1594 = vmatprep.subr.mxu0 0.0
  %1595 = vmatpush1.msra.mxu0 0.0
  %1596 = vmatprep.subr.mxu0 0.0
  %1597 = vmatpush1.msra.mxu0 0.0
  %1598 = vmatprep.subr.mxu0 0.0
  %1599 = vmatpush1.msra.mxu0 0.0
  %1600 = vmatprep.subr.mxu0 0.0
  %1601 = vmatpush1.msra.mxu0 0.0
  %1602 = vmatprep.subr.mxu0 0.0
  %1603 = vmatpush1.msra.mxu0 0.0
  %1604 = vmatprep.subr.mxu0 0.0
  %1605 = vmatpush1.msra.mxu0 0.0
  %1606 = vmatprep.subr.mxu0 0.0
  %1607 = vmatpush1.msra.mxu0 0.0
  %1608 = vmatprep.subr.mxu0 0.0
  %1609 = vmatpush1.msra.mxu0 0.0
  %1610 = vmatprep.subr.mxu0 0.0
  %1611 = vmatpush1.msra.mxu0 0.0
  %1612 = vmatprep.subr.mxu0 0.0
  %1613 = vmatpush1.msra.mxu0 0.0
  %1614 = vmatprep.subr.mxu0 0.0
  %1615 = vmatpush1.msra.mxu0 0.0
  %1616 = vmatprep.subr.mxu0 0.0
  %1617 = vmatpush1.msra.mxu0 0.0
  %1618 = vmatprep.subr.mxu0 0.0
  %1619 = vmatpush1.msra.mxu0 0.0
  %1620 = vmatprep.subr.mxu0 0.0
  %1621 = vmatpush1.msra.mxu0 0.0
  %1622 = vmatprep.subr.mxu0 0.0
  %1623 = vmatpush1.msra.mxu0 0.0
  %1624 = vmatprep.subr.mxu0 0.0
  %1625 = vmatpush1.msra.mxu0 0.0
  %1626 = vmatprep.subr.mxu0 0.0
  %1627 = vmatpush1.msra.mxu0 0.0
  %1628 = vmatprep.subr.mxu0 0.0
  %1629 = vmatpush1.msra.mxu0 0.0
  %1630 = vmatprep.subr.mxu0 0.0
  %1631 = vmatpush1.msra.mxu0 0.0
  %1632 = vmatprep.subr.mxu0 0.0
  %1633 = vmatpush1.msra.mxu0 0.0
  %1634 = vmatprep.subr.mxu0 0.0
  %1635 = vmatpush1.msra.mxu0 0.0
  %1636 = vmatprep.subr.mxu0 0.0
  %1637 = vmatpush1.msra.mxu0 0.0
  %1638 = vmatprep.subr.mxu0 0.0
  %1639 = vmatpush1.msra.mxu0 0.0
  %1640 = vmatprep.subr.mxu0 0.0
  %1641 = vmatpush1.msra.mxu0 0.0
  %1642 = vmatprep.subr.mxu0 0.0
  %1643 = vmatpush1.msra.mxu0 0.0
  %1644 = vmatprep.subr.mxu0 0.0
  %1645 = vmatpush1.msra.mxu0 0.0
  %1646 = vmatprep.mubr.f32.mxu0 0.0
  %1647 = vmatmul.mubr.f32.gmra.mrb[0].mxu0 %v1580
  %v1648 = vpop.f32.mrb[0].mxu0
  %v1649 = vadd.f32 %v1579, %v1648
  %v1650 = vpop.f32.mrb[0].mxu0
  %1651 = vdwg.mxu0
  %s1652 = scalar_lea.vmem [#allocation3], 8
  %v1653 = vld [vmem:[%s1652] sm:$0xff]
  %v1654 = vsel %vm333, %v1574, 0
  %1656 = vmatprep.subr.mxu0 0.0
  %1657 = vmatpush1.msra.mxu0 %v328
  %1658 = vmatprep.subr.mxu0 0.0
  %1659 = vmatpush1.msra.mxu0 %v329
  %1660 = vmatprep.subr.mxu0 0.0
  %1661 = vmatpush1.msra.mxu0 %v330
  %1662 = vmatprep.subr.mxu0 0.0
  %1663 = vmatpush1.msra.mxu0 %v331
  %1664 = vmatprep.subr.mxu0 0.0
  %1665 = vmatpush1.msra.mxu0 0.0
  %1666 = vmatprep.subr.mxu0 0.0
  %1667 = vmatpush1.msra.mxu0 0.0
  %1668 = vmatprep.subr.mxu0 0.0
  %1669 = vmatpush1.msra.mxu0 0.0
  %1670 = vmatprep.subr.mxu0 0.0
  %1671 = vmatpush1.msra.mxu0 0.0
  %1672 = vmatprep.subr.mxu0 0.0
  %1673 = vmatpush1.msra.mxu0 0.0
  %1674 = vmatprep.subr.mxu0 0.0
  %1675 = vmatpush1.msra.mxu0 0.0
  %1676 = vmatprep.subr.mxu0 0.0
  %1677 = vmatpush1.msra.mxu0 0.0
  %1678 = vmatprep.subr.mxu0 0.0
  %1679 = vmatpush1.msra.mxu0 0.0
  %1680 = vmatprep.subr.mxu0 0.0
  %1681 = vmatpush1.msra.mxu0 0.0
  %1682 = vmatprep.subr.mxu0 0.0
  %1683 = vmatpush1.msra.mxu0 0.0
  %1684 = vmatprep.subr.mxu0 0.0
  %1685 = vmatpush1.msra.mxu0 0.0
  %1686 = vmatprep.subr.mxu0 0.0
  %1687 = vmatpush1.msra.mxu0 0.0
  %1688 = vmatprep.subr.mxu0 0.0
  %1689 = vmatpush1.msra.mxu0 0.0
  %1690 = vmatprep.subr.mxu0 0.0
  %1691 = vmatpush1.msra.mxu0 0.0
  %1692 = vmatprep.subr.mxu0 0.0
  %1693 = vmatpush1.msra.mxu0 0.0
  %1694 = vmatprep.subr.mxu0 0.0
  %1695 = vmatpush1.msra.mxu0 0.0
  %1696 = vmatprep.subr.mxu0 0.0
  %1697 = vmatpush1.msra.mxu0 0.0
  %1698 = vmatprep.subr.mxu0 0.0
  %1699 = vmatpush1.msra.mxu0 0.0
  %1700 = vmatprep.subr.mxu0 0.0
  %1701 = vmatpush1.msra.mxu0 0.0
  %1702 = vmatprep.subr.mxu0 0.0
  %1703 = vmatpush1.msra.mxu0 0.0
  %1704 = vmatprep.subr.mxu0 0.0
  %1705 = vmatpush1.msra.mxu0 0.0
  %1706 = vmatprep.subr.mxu0 0.0
  %1707 = vmatpush1.msra.mxu0 0.0
  %1708 = vmatprep.subr.mxu0 0.0
  %1709 = vmatpush1.msra.mxu0 0.0
  %1710 = vmatprep.subr.mxu0 0.0
  %1711 = vmatpush1.msra.mxu0 0.0
  %1712 = vmatprep.subr.mxu0 0.0
  %1713 = vmatpush1.msra.mxu0 0.0
  %1714 = vmatprep.subr.mxu0 0.0
  %1715 = vmatpush1.msra.mxu0 0.0
  %1716 = vmatprep.subr.mxu0 0.0
  %1717 = vmatpush1.msra.mxu0 0.0
  %1718 = vmatprep.subr.mxu0 0.0
  %1719 = vmatpush1.msra.mxu0 0.0
  %1720 = vmatprep.mubr.f32.mxu0 0.0
  %1721 = vmatmul.mubr.f32.gmra.mrb[0].mxu0 %v1654
  %v1722 = vpop.f32.mrb[0].mxu0
  %v1723 = vadd.f32 %v1653, %v1722
  %v1724 = vpop.f32.mrb[0].mxu0
  %1725 = vdwg.mxu0
  %v1726 = vxor.u32 %v1649, 2147483648
  %v1727 = vmul.f32 %v1726, 1.442695
  %v1728 = vpow.pop %v1727
  %v1729 = vadd.f32 %v1728, 1.0
  %v1730 = vrcp.pop %v1729
  %v1731 = vmul.f32 1.0, %v1730
  %v1732 = vtanh.pop %v1649
  %v1733 = vmul.f32 %v1731, %v1535
  %1735 = vrot.lane.b32.xlu0 %v1732, 64
  %v1736 = vpop.permute.xlu0 %1735
  %v1738 = vmul.f32 %v1731, %v1736
  %1740 = vrot.lane.b32.xlu0 %v1738, 32
  %v1741 = vpop.permute.xlu0 %1740
  %v1743 = vadd.f32 %v1733, %v1741
  %v1744 = vtanh.pop %v1743
  %1746 = vrot.lane.b32.xlu0 %v1744, 64
  %v1747 = vpop.permute.xlu0 %1746
  %v1749 = vmul.f32 %v1731, %v1747
  %v1750 = vxor.u32 %v1723, 2147483648
  %v1751 = vmul.f32 %v1750, 1.442695
  %v1752 = vpow.pop %v1751
  %v1753 = vadd.f32 %v1752, 1.0
  %v1754 = vrcp.pop %v1753
  %v1755 = vmul.f32 1.0, %v1754
  %v1756 = vtanh.pop %v1723
  %v1757 = vmul.f32 %v1755, %v1559
  %1759 = vrot.lane.b32.xlu0 %v1756, 64
  %v1760 = vpop.permute.xlu0 %1759
  %v1762 = vmul.f32 %v1755, %v1760
  %1764 = vrot.lane.b32.xlu0 %v1762, 32
  %v1765 = vpop.permute.xlu0 %1764
  %v1767 = vadd.f32 %v1757, %v1765
  %v1768 = vtanh.pop %v1767
  %1770 = vrot.lane.b32.xlu0 %v1768, 64
  %v1771 = vpop.permute.xlu0 %1770
  %v1773 = vmul.f32 %v1755, %v1771
  %1775 = vrot.lane.b32.xlu0 %v1749, 32
  %v1776 = vpop.permute.xlu0 %1775
  %s1778 = scalar_lea.vmem [#allocation4], 48
  %1779 = vst.msk [vmem:[%s1778] sm:$0xff] %vm333, %v1776
  %1781 = vrot.lane.b32.xlu0 %v1773, 32
  %v1782 = vpop.permute.xlu0 %1781
  %s1784 = scalar_lea.vmem [#allocation5], 8
  %1785 = vst.msk [vmem:[%s1784] sm:$0xff] %vm333, %v1782
  %s1786 = scalar_lea.vmem [#allocation2], 56
  %v1787 = vld [vmem:[%s1786] sm:$0xff]
  %v1788 = vsel %vm333, %v1776, 0
  %1790 = vmatprep.subr.mxu0 0.0
  %1791 = vmatpush1.msra.mxu0 %v324
  %1792 = vmatprep.subr.mxu0 0.0
  %1793 = vmatpush1.msra.mxu0 %v325
  %1794 = vmatprep.subr.mxu0 0.0
  %1795 = vmatpush1.msra.mxu0 %v326
  %1796 = vmatprep.subr.mxu0 0.0
  %1797 = vmatpush1.msra.mxu0 %v327
  %1798 = vmatprep.subr.mxu0 0.0
  %1799 = vmatpush1.msra.mxu0 0.0
  %1800 = vmatprep.subr.mxu0 0.0
  %1801 = vmatpush1.msra.mxu0 0.0
  %1802 = vmatprep.subr.mxu0 0.0
  %1803 = vmatpush1.msra.mxu0 0.0
  %1804 = vmatprep.subr.mxu0 0.0
  %1805 = vmatpush1.msra.mxu0 0.0
  %1806 = vmatprep.subr.mxu0 0.0
  %1807 = vmatpush1.msra.mxu0 0.0
  %1808 = vmatprep.subr.mxu0 0.0
  %1809 = vmatpush1.msra.mxu0 0.0
  %1810 = vmatprep.subr.mxu0 0.0
  %1811 = vmatpush1.msra.mxu0 0.0
  %1812 = vmatprep.subr.mxu0 0.0
  %1813 = vmatpush1.msra.mxu0 0.0
  %1814 = vmatprep.subr.mxu0 0.0
  %1815 = vmatpush1.msra.mxu0 0.0
  %1816 = vmatprep.subr.mxu0 0.0
  %1817 = vmatpush1.msra.mxu0 0.0
  %1818 = vmatprep.subr.mxu0 0.0
  %1819 = vmatpush1.msra.mxu0 0.0
  %1820 = vmatprep.subr.mxu0 0.0
  %1821 = vmatpush1.msra.mxu0 0.0
  %1822 = vmatprep.subr.mxu0 0.0
  %1823 = vmatpush1.msra.mxu0 0.0
  %1824 = vmatprep.subr.mxu0 0.0
  %1825 = vmatpush1.msra.mxu0 0.0
  %1826 = vmatprep.subr.mxu0 0.0
  %1827 = vmatpush1.msra.mxu0 0.0
  %1828 = vmatprep.subr.mxu0 0.0
  %1829 = vmatpush1.msra.mxu0 0.0
  %1830 = vmatprep.subr.mxu0 0.0
  %1831 = vmatpush1.msra.mxu0 0.0
  %1832 = vmatprep.subr.mxu0 0.0
  %1833 = vmatpush1.msra.mxu0 0.0
  %1834 = vmatprep.subr.mxu0 0.0
  %1835 = vmatpush1.msra.mxu0 0.0
  %1836 = vmatprep.subr.mxu0 0.0
  %1837 = vmatpush1.msra.mxu0 0.0
  %1838 = vmatprep.subr.mxu0 0.0
  %1839 = vmatpush1.msra.mxu0 0.0
  %1840 = vmatprep.subr.mxu0 0.0
  %1841 = vmatpush1.msra.mxu0 0.0
  %1842 = vmatprep.subr.mxu0 0.0
  %1843 = vmatpush1.msra.mxu0 0.0
  %1844 = vmatprep.subr.mxu0 0.0
  %1845 = vmatpush1.msra.mxu0 0.0
  %1846 = vmatprep.subr.mxu0 0.0
  %1847 = vmatpush1.msra.mxu0 0.0
  %1848 = vmatprep.subr.mxu0 0.0
  %1849 = vmatpush1.msra.mxu0 0.0
  %1850 = vmatprep.subr.mxu0 0.0
  %1851 = vmatpush1.msra.mxu0 0.0
  %1852 = vmatprep.subr.mxu0 0.0
  %1853 = vmatpush1.msra.mxu0 0.0
  %1854 = vmatprep.mubr.f32.mxu0 0.0
  %1855 = vmatmul.mubr.f32.gmra.mrb[0].mxu0 %v1788
  %v1856 = vpop.f32.mrb[0].mxu0
  %v1857 = vadd.f32 %v1787, %v1856
  %v1858 = vpop.f32.mrb[0].mxu0
  %1859 = vdwg.mxu0
  %v1860 = vld [vmem:[#allocation3] sm:$0xff]
  %v1861 = vsel %vm333, %v1782, 0
  %1863 = vmatprep.subr.mxu0 0.0
  %1864 = vmatpush1.msra.mxu0 %v328
  %1865 = vmatprep.subr.mxu0 0.0
  %1866 = vmatpush1.msra.mxu0 %v329
  %1867 = vmatprep.subr.mxu0 0.0
  %1868 = vmatpush1.msra.mxu0 %v330
  %1869 = vmatprep.subr.mxu0 0.0
  %1870 = vmatpush1.msra.mxu0 %v331
  %1871 = vmatprep.subr.mxu0 0.0
  %1872 = vmatpush1.msra.mxu0 0.0
  %1873 = vmatprep.subr.mxu0 0.0
  %1874 = vmatpush1.msra.mxu0 0.0
  %1875 = vmatprep.subr.mxu0 0.0
  %1876 = vmatpush1.msra.mxu0 0.0
  %1877 = vmatprep.subr.mxu0 0.0
  %1878 = vmatpush1.msra.mxu0 0.0
  %1879 = vmatprep.subr.mxu0 0.0
  %1880 = vmatpush1.msra.mxu0 0.0
  %1881 = vmatprep.subr.mxu0 0.0
  %1882 = vmatpush1.msra.mxu0 0.0
  %1883 = vmatprep.subr.mxu0 0.0
  %1884 = vmatpush1.msra.mxu0 0.0
  %1885 = vmatprep.subr.mxu0 0.0
  %1886 = vmatpush1.msra.mxu0 0.0
  %1887 = vmatprep.subr.mxu0 0.0
  %1888 = vmatpush1.msra.mxu0 0.0
  %1889 = vmatprep.subr.mxu0 0.0
  %1890 = vmatpush1.msra.mxu0 0.0
  %1891 = vmatprep.subr.mxu0 0.0
  %1892 = vmatpush1.msra.mxu0 0.0
  %1893 = vmatprep.subr.mxu0 0.0
  %1894 = vmatpush1.msra.mxu0 0.0
  %1895 = vmatprep.subr.mxu0 0.0
  %1896 = vmatpush1.msra.mxu0 0.0
  %1897 = vmatprep.subr.mxu0 0.0
  %1898 = vmatpush1.msra.mxu0 0.0
  %1899 = vmatprep.subr.mxu0 0.0
  %1900 = vmatpush1.msra.mxu0 0.0
  %1901 = vmatprep.subr.mxu0 0.0
  %1902 = vmatpush1.msra.mxu0 0.0
  %1903 = vmatprep.subr.mxu0 0.0
  %1904 = vmatpush1.msra.mxu0 0.0
  %1905 = vmatprep.subr.mxu0 0.0
  %1906 = vmatpush1.msra.mxu0 0.0
  %1907 = vmatprep.subr.mxu0 0.0
  %1908 = vmatpush1.msra.mxu0 0.0
  %1909 = vmatprep.subr.mxu0 0.0
  %1910 = vmatpush1.msra.mxu0 0.0
  %1911 = vmatprep.subr.mxu0 0.0
  %1912 = vmatpush1.msra.mxu0 0.0
  %1913 = vmatprep.subr.mxu0 0.0
  %1914 = vmatpush1.msra.mxu0 0.0
  %1915 = vmatprep.subr.mxu0 0.0
  %1916 = vmatpush1.msra.mxu0 0.0
  %1917 = vmatprep.subr.mxu0 0.0
  %1918 = vmatpush1.msra.mxu0 0.0
  %1919 = vmatprep.subr.mxu0 0.0
  %1920 = vmatpush1.msra.mxu0 0.0
  %1921 = vmatprep.subr.mxu0 0.0
  %1922 = vmatpush1.msra.mxu0 0.0
  %1923 = vmatprep.subr.mxu0 0.0
  %1924 = vmatpush1.msra.mxu0 0.0
  %1925 = vmatprep.subr.mxu0 0.0
  %1926 = vmatpush1.msra.mxu0 0.0
  %1927 = vmatprep.mubr.f32.mxu0 0.0
  %1928 = vmatmul.mubr.f32.gmra.mrb[0].mxu0 %v1861
  %v1929 = vpop.f32.mrb[0].mxu0
  %v1930 = vadd.f32 %v1860, %v1929
  %v1931 = vpop.f32.mrb[0].mxu0
  %1932 = vdwg.mxu0
  %v1933 = vxor.u32 %v1857, 2147483648
  %v1934 = vmul.f32 %v1933, 1.442695
  %v1935 = vpow.pop %v1934
  %v1936 = vadd.f32 %v1935, 1.0
  %v1937 = vrcp.pop %v1936
  %v1938 = vmul.f32 1.0, %v1937
  %v1939 = vtanh.pop %v1857
  %v1940 = vmul.f32 %v1938, %v1743
  %1942 = vrot.lane.b32.xlu0 %v1939, 64
  %v1943 = vpop.permute.xlu0 %1942
  %v1945 = vmul.f32 %v1938, %v1943
  %1947 = vrot.lane.b32.xlu0 %v1945, 32
  %v1948 = vpop.permute.xlu0 %1947
  %v1950 = vadd.f32 %v1940, %v1948
  %v1951 = vtanh.pop %v1950
  %1953 = vrot.lane.b32.xlu0 %v1951, 64
  %v1954 = vpop.permute.xlu0 %1953
  %v1956 = vmul.f32 %v1938, %v1954
  %v1957 = vxor.u32 %v1930, 2147483648
  %v1958 = vmul.f32 %v1957, 1.442695
  %v1959 = vpow.pop %v1958
  %v1960 = vadd.f32 %v1959, 1.0
  %v1961 = vrcp.pop %v1960
  %v1962 = vmul.f32 1.0, %v1961
  %v1963 = vtanh.pop %v1930
  %v1964 = vmul.f32 %v1962, %v1767
  %1966 = vrot.lane.b32.xlu0 %v1963, 64
  %v1967 = vpop.permute.xlu0 %1966
  %v1969 = vmul.f32 %v1962, %v1967
  %1971 = vrot.lane.b32.xlu0 %v1969, 32
  %v1972 = vpop.permute.xlu0 %1971
  %v1974 = vadd.f32 %v1964, %v1972
  %v1975 = vtanh.pop %v1974
  %1977 = vrot.lane.b32.xlu0 %v1975, 64
  %v1978 = vpop.permute.xlu0 %1977
  %v1980 = vmul.f32 %v1962, %v1978
  %1982 = vrot.lane.b32.xlu0 %v1956, 32
  %v1983 = vpop.permute.xlu0 %1982
  %s1985 = scalar_lea.vmem [#allocation4], 56
  %1986 = vst.msk [vmem:[%s1985] sm:$0xff] %vm333, %v1983
  %1988 = vrot.lane.b32.xlu0 %v1980, 32
  %v1989 = vpop.permute.xlu0 %1988
  %1991 = vst.msk [vmem:[#allocation5] sm:$0xff] %vm333, %v1989
  %v1992 = vld [vmem:[%s7] sm:$0xff]
  %v1993 = vld [vmem:[%s7 + $0x8] sm:$0xff]
  %v1994 = vld [vmem:[%s7 + $0x10] sm:$0xff]
  %v1995 = vld [vmem:[%s7 + $0x18] sm:$0xff]
  %v1996 = vld [vmem:[%s7 + $0x20] sm:$0xff]
  %v1997 = vld [vmem:[%s7 + $0x28] sm:$0xff]
  %v1998 = vld [vmem:[%s7 + $0x30] sm:$0xff]
  %v1999 = vld [vmem:[%s7 + $0x38] sm:$0xff]
  %v2000 = vld [vmem:[#allocation4] sm:$0xff]
  %v2001 = vld [vmem:[#allocation4 + $0x8] sm:$0xff]
  %v2002 = vld [vmem:[#allocation4 + $0x10] sm:$0xff]
  %v2003 = vld [vmem:[#allocation4 + $0x18] sm:$0xff]
  %v2004 = vld [vmem:[#allocation4 + $0x20] sm:$0xff]
  %v2005 = vld [vmem:[#allocation4 + $0x28] sm:$0xff]
  %v2006 = vld [vmem:[#allocation4 + $0x30] sm:$0xff]
  %v2007 = vld [vmem:[#allocation4 + $0x38] sm:$0xff]
  %v2008 = vld [vmem:[#allocation5] sm:$0xff]
  %v2009 = vld [vmem:[#allocation5 + $0x8] sm:$0xff]
  %v2010 = vld [vmem:[#allocation5 + $0x10] sm:$0xff]
  %v2011 = vld [vmem:[#allocation5 + $0x18] sm:$0xff]
  %v2012 = vld [vmem:[#allocation5 + $0x20] sm:$0xff]
  %v2013 = vld [vmem:[#allocation5 + $0x28] sm:$0xff]
  %v2014 = vld [vmem:[#allocation5 + $0x30] sm:$0xff]
  %v2015 = vld [vmem:[#allocation5 + $0x38] sm:$0xff]
  %v2017 = vsel %vm333, %v2008, 0
  %v2020 = vsel %vm333, %v2009, 0
  %v2023 = vsel %vm333, %v2010, 0
  %v2026 = vsel %vm333, %v2011, 0
  %v2029 = vsel %vm333, %v2012, 0
  %v2032 = vsel %vm333, %v2013, 0
  %v2035 = vsel %vm333, %v2014, 0
  %v2038 = vsel %vm333, %v2015, 0
  %2040 = vmatprep.subr.mxu0 0.0
  %2041 = vmatpush1.msra.mxu0 %v1996
  %2042 = vmatprep.subr.mxu0 0.0
  %2043 = vmatpush1.msra.mxu0 %v1997
  %2044 = vmatprep.subr.mxu0 0.0
  %2045 = vmatpush1.msra.mxu0 %v1998
  %2046 = vmatprep.subr.mxu0 0.0
  %2047 = vmatpush1.msra.mxu0 %v1999
  %2048 = vmatprep.subr.mxu0 0.0
  %2049 = vmatpush1.msra.mxu0 0.0
  %2050 = vmatprep.subr.mxu0 0.0
  %2051 = vmatpush1.msra.mxu0 0.0
  %2052 = vmatprep.subr.mxu0 0.0
  %2053 = vmatpush1.msra.mxu0 0.0
  %2054 = vmatprep.subr.mxu0 0.0
  %2055 = vmatpush1.msra.mxu0 0.0
  %2056 = vmatprep.subr.mxu0 0.0
  %2057 = vmatpush1.msra.mxu0 0.0
  %2058 = vmatprep.subr.mxu0 0.0
  %2059 = vmatpush1.msra.mxu0 0.0
  %2060 = vmatprep.subr.mxu0 0.0
  %2061 = vmatpush1.msra.mxu0 0.0
  %2062 = vmatprep.subr.mxu0 0.0
  %2063 = vmatpush1.msra.mxu0 0.0
  %2064 = vmatprep.subr.mxu0 0.0
  %2065 = vmatpush1.msra.mxu0 0.0
  %2066 = vmatprep.subr.mxu0 0.0
  %2067 = vmatpush1.msra.mxu0 0.0
  %2068 = vmatprep.subr.mxu0 0.0
  %2069 = vmatpush1.msra.mxu0 0.0
  %2070 = vmatprep.subr.mxu0 0.0
  %2071 = vmatpush1.msra.mxu0 0.0
  %2072 = vmatprep.subr.mxu0 0.0
  %2073 = vmatpush1.msra.mxu0 0.0
  %2074 = vmatprep.subr.mxu0 0.0
  %2075 = vmatpush1.msra.mxu0 0.0
  %2076 = vmatprep.subr.mxu0 0.0
  %2077 = vmatpush1.msra.mxu0 0.0
  %2078 = vmatprep.subr.mxu0 0.0
  %2079 = vmatpush1.msra.mxu0 0.0
  %2080 = vmatprep.subr.mxu0 0.0
  %2081 = vmatpush1.msra.mxu0 0.0
  %2082 = vmatprep.subr.mxu0 0.0
  %2083 = vmatpush1.msra.mxu0 0.0
  %2084 = vmatprep.subr.mxu0 0.0
  %2085 = vmatpush1.msra.mxu0 0.0
  %2086 = vmatprep.subr.mxu0 0.0
  %2087 = vmatpush1.msra.mxu0 0.0
  %2088 = vmatprep.subr.mxu0 0.0
  %2089 = vmatpush1.msra.mxu0 0.0
  %2090 = vmatprep.subr.mxu0 0.0
  %2091 = vmatpush1.msra.mxu0 0.0
  %2092 = vmatprep.subr.mxu0 0.0
  %2093 = vmatpush1.msra.mxu0 0.0
  %2094 = vmatprep.subr.mxu0 0.0
  %2095 = vmatpush1.msra.mxu0 0.0
  %2096 = vmatprep.subr.mxu0 0.0
  %2097 = vmatpush1.msra.mxu0 0.0
  %2098 = vmatprep.subr.mxu0 0.0
  %2099 = vmatpush1.msra.mxu0 0.0
  %2100 = vmatprep.subr.mxu0 0.0
  %2101 = vmatpush1.msra.mxu0 0.0
  %2102 = vmatprep.subr.mxu0 0.0
  %2103 = vmatpush1.msra.mxu0 0.0
  %2104 = vmatprep.mubr.f32.mxu0 0.0
  %2105 = vmatmul.mubr.f32.gmra.mrb[0].mxu0 %v2017
  %v2106 = vpop.f32.mrb[0].mxu0
  %v2107 = vadd.f32 0.0, %v2106
  %v2108 = vpop.f32.mrb[0].mxu0
  %2109 = vmatprep.mubr.f32.mxu0 0.0
  %2110 = vmatmul.mubr.f32.gmra.mrb[0].mxu0 %v2020
  %v2111 = vpop.f32.mrb[0].mxu0
  %v2112 = vadd.f32 0.0, %v2111
  %v2113 = vpop.f32.mrb[0].mxu0
  %2114 = vmatprep.mubr.f32.mxu0 0.0
  %2115 = vmatmul.mubr.f32.gmra.mrb[0].mxu0 %v2023
  %v2116 = vpop.f32.mrb[0].mxu0
  %v2117 = vadd.f32 0.0, %v2116
  %v2118 = vpop.f32.mrb[0].mxu0
  %2119 = vmatprep.mubr.f32.mxu0 0.0
  %2120 = vmatmul.mubr.f32.gmra.mrb[0].mxu0 %v2026
  %v2121 = vpop.f32.mrb[0].mxu0
  %v2122 = vadd.f32 0.0, %v2121
  %v2123 = vpop.f32.mrb[0].mxu0
  %2124 = vmatprep.mubr.f32.mxu0 0.0
  %2125 = vmatmul.mubr.f32.gmra.mrb[0].mxu0 %v2029
  %v2126 = vpop.f32.mrb[0].mxu0
  %v2127 = vadd.f32 0.0, %v2126
  %v2128 = vpop.f32.mrb[0].mxu0
  %2129 = vmatprep.mubr.f32.mxu0 0.0
  %2130 = vmatmul.mubr.f32.gmra.mrb[0].mxu0 %v2032
  %v2131 = vpop.f32.mrb[0].mxu0
  %v2132 = vadd.f32 0.0, %v2131
  %v2133 = vpop.f32.mrb[0].mxu0
  %2134 = vmatprep.mubr.f32.mxu0 0.0
  %2135 = vmatmul.mubr.f32.gmra.mrb[0].mxu0 %v2035
  %v2136 = vpop.f32.mrb[0].mxu0
  %v2137 = vadd.f32 0.0, %v2136
  %v2138 = vpop.f32.mrb[0].mxu0
  %2139 = vmatprep.mubr.f32.mxu0 0.0
  %2140 = vmatmul.mubr.f32.gmra.mrb[0].mxu0 %v2038
  %v2141 = vpop.f32.mrb[0].mxu0
  %v2142 = vadd.f32 0.0, %v2141
  %v2143 = vpop.f32.mrb[0].mxu0
  %2144 = vdwg.mxu0
  %v2146 = vsel %vm333, %v2000, 0
  %v2149 = vsel %vm333, %v2001, 0
  %v2152 = vsel %vm333, %v2002, 0
  %v2155 = vsel %vm333, %v2003, 0
  %v2158 = vsel %vm333, %v2004, 0
  %v2161 = vsel %vm333, %v2005, 0
  %v2164 = vsel %vm333, %v2006, 0
  %v2167 = vsel %vm333, %v2007, 0
  %2169 = vmatprep.subr.mxu0 0.0
  %2170 = vmatpush1.msra.mxu0 %v1992
  %2171 = vmatprep.subr.mxu0 0.0
  %2172 = vmatpush1.msra.mxu0 %v1993
  %2173 = vmatprep.subr.mxu0 0.0
  %2174 = vmatpush1.msra.mxu0 %v1994
  %2175 = vmatprep.subr.mxu0 0.0
  %2176 = vmatpush1.msra.mxu0 %v1995
  %2177 = vmatprep.subr.mxu0 0.0
  %2178 = vmatpush1.msra.mxu0 0.0
  %2179 = vmatprep.subr.mxu0 0.0
  %2180 = vmatpush1.msra.mxu0 0.0
  %2181 = vmatprep.subr.mxu0 0.0
  %2182 = vmatpush1.msra.mxu0 0.0
  %2183 = vmatprep.subr.mxu0 0.0
  %2184 = vmatpush1.msra.mxu0 0.0
  %2185 = vmatprep.subr.mxu0 0.0
  %2186 = vmatpush1.msra.mxu0 0.0
  %2187 = vmatprep.subr.mxu0 0.0
  %2188 = vmatpush1.msra.mxu0 0.0
  %2189 = vmatprep.subr.mxu0 0.0
  %2190 = vmatpush1.msra.mxu0 0.0
  %2191 = vmatprep.subr.mxu0 0.0
  %2192 = vmatpush1.msra.mxu0 0.0
  %2193 = vmatprep.subr.mxu0 0.0
  %2194 = vmatpush1.msra.mxu0 0.0
  %2195 = vmatprep.subr.mxu0 0.0
  %2196 = vmatpush1.msra.mxu0 0.0
  %2197 = vmatprep.subr.mxu0 0.0
  %2198 = vmatpush1.msra.mxu0 0.0
  %2199 = vmatprep.subr.mxu0 0.0
  %2200 = vmatpush1.msra.mxu0 0.0
  %2201 = vmatprep.subr.mxu0 0.0
  %2202 = vmatpush1.msra.mxu0 0.0
  %2203 = vmatprep.subr.mxu0 0.0
  %2204 = vmatpush1.msra.mxu0 0.0
  %2205 = vmatprep.subr.mxu0 0.0
  %2206 = vmatpush1.msra.mxu0 0.0
  %2207 = vmatprep.subr.mxu0 0.0
  %2208 = vmatpush1.msra.mxu0 0.0
  %2209 = vmatprep.subr.mxu0 0.0
  %2210 = vmatpush1.msra.mxu0 0.0
  %2211 = vmatprep.subr.mxu0 0.0
  %2212 = vmatpush1.msra.mxu0 0.0
  %2213 = vmatprep.subr.mxu0 0.0
  %2214 = vmatpush1.msra.mxu0 0.0
  %2215 = vmatprep.subr.mxu0 0.0
  %2216 = vmatpush1.msra.mxu0 0.0
  %2217 = vmatprep.subr.mxu0 0.0
  %2218 = vmatpush1.msra.mxu0 0.0
  %2219 = vmatprep.subr.mxu0 0.0
  %2220 = vmatpush1.msra.mxu0 0.0
  %2221 = vmatprep.subr.mxu0 0.0
  %2222 = vmatpush1.msra.mxu0 0.0
  %2223 = vmatprep.subr.mxu0 0.0
  %2224 = vmatpush1.msra.mxu0 0.0
  %2225 = vmatprep.subr.mxu0 0.0
  %2226 = vmatpush1.msra.mxu0 0.0
  %2227 = vmatprep.subr.mxu0 0.0
  %2228 = vmatpush1.msra.mxu0 0.0
  %2229 = vmatprep.subr.mxu0 0.0
  %2230 = vmatpush1.msra.mxu0 0.0
  %2231 = vmatprep.subr.mxu0 0.0
  %2232 = vmatpush1.msra.mxu0 0.0
  %2233 = vmatprep.mubr.f32.mxu0 0.0
  %2234 = vmatmul.mubr.f32.gmra.mrb[0].mxu0 %v2146
  %v2235 = vpop.f32.mrb[0].mxu0
  %v2236 = vadd.f32 %v2107, %v2235
  %v2237 = vpop.f32.mrb[0].mxu0
  %2238 = vmatprep.mubr.f32.mxu0 0.0
  %2239 = vmatmul.mubr.f32.gmra.mrb[0].mxu0 %v2149
  %v2240 = vpop.f32.mrb[0].mxu0
  %v2241 = vadd.f32 %v2112, %v2240
  %v2242 = vpop.f32.mrb[0].mxu0
  %2243 = vmatprep.mubr.f32.mxu0 0.0
  %2244 = vmatmul.mubr.f32.gmra.mrb[0].mxu0 %v2152
  %v2245 = vpop.f32.mrb[0].mxu0
  %v2246 = vadd.f32 %v2117, %v2245
  %v2247 = vpop.f32.mrb[0].mxu0
  %2248 = vmatprep.mubr.f32.mxu0 0.0
  %2249 = vmatmul.mubr.f32.gmra.mrb[0].mxu0 %v2155
  %v2250 = vpop.f32.mrb[0].mxu0
  %v2251 = vadd.f32 %v2122, %v2250
  %v2252 = vpop.f32.mrb[0].mxu0
  %2253 = vmatprep.mubr.f32.mxu0 0.0
  %2254 = vmatmul.mubr.f32.gmra.mrb[0].mxu0 %v2158
  %v2255 = vpop.f32.mrb[0].mxu0
  %v2256 = vadd.f32 %v2127, %v2255
  %v2257 = vpop.f32.mrb[0].mxu0
  %2258 = vmatprep.mubr.f32.mxu0 0.0
  %2259 = vmatmul.mubr.f32.gmra.mrb[0].mxu0 %v2161
  %v2260 = vpop.f32.mrb[0].mxu0
  %v2261 = vadd.f32 %v2132, %v2260
  %v2262 = vpop.f32.mrb[0].mxu0
  %2263 = vmatprep.mubr.f32.mxu0 0.0
  %2264 = vmatmul.mubr.f32.gmra.mrb[0].mxu0 %v2164
  %v2265 = vpop.f32.mrb[0].mxu0
  %v2266 = vadd.f32 %v2137, %v2265
  %v2267 = vpop.f32.mrb[0].mxu0
  %2268 = vmatprep.mubr.f32.mxu0 0.0
  %2269 = vmatmul.mubr.f32.gmra.mrb[0].mxu0 %v2167
  %v2270 = vpop.f32.mrb[0].mxu0
  %v2271 = vadd.f32 %v2142, %v2270
  %v2272 = vpop.f32.mrb[0].mxu0
  %2273 = vdwg.mxu0
  %v2274 = vld [vmem:[%s9] sm:$0x1]
  %v2276 = vlaneseq
  %v2277 = vshrl.u32 %v2276, 7
  %v2278 = vsub.s32 0, %v2277
  %v2279 = vrot.slane %v2274, %v2278
  %v2281 = vadd.f32 %v2236, %v2279
  %v2282 = vadd.f32 %v2241, %v2279
  %v2283 = vadd.f32 %v2246, %v2279
  %v2284 = vadd.f32 %v2251, %v2279
  %v2285 = vadd.f32 %v2256, %v2279
  %v2286 = vadd.f32 %v2261, %v2279
  %v2287 = vadd.f32 %v2266, %v2279
  %v2288 = vadd.f32 %v2271, %v2279
  %2289 = vst [vmem:[#allocation6] sm:$0xff] %v2281
  %2290 = vst [vmem:[#allocation6 + $0x8] sm:$0xff] %v2282
  %2291 = vst [vmem:[#allocation6 + $0x10] sm:$0xff] %v2283
  %2292 = vst [vmem:[#allocation6 + $0x18] sm:$0xff] %v2284
  %2293 = vst [vmem:[#allocation6 + $0x20] sm:$0xff] %v2285
  %2294 = vst [vmem:[#allocation6 + $0x28] sm:$0xff] %v2286
  %2295 = vst [vmem:[#allocation6 + $0x30] sm:$0xff] %v2287
  %2296 = vst [vmem:[#allocation6 + $0x38] sm:$0xff] %v2288
  %v2297 = vld [vmem:[%s8] sm:$0xff]
  %v2298 = vld [vmem:[%s8 + $0x8] sm:$0xff]
  %v2299 = vld [vmem:[%s8 + $0x10] sm:$0xff]
  %v2300 = vld [vmem:[%s8 + $0x18] sm:$0xff]
  %v2301 = vld [vmem:[#allocation6] sm:$0xff]
  %2302 = vmatprep.subr.mxu0 0.0
  %2303 = vmatpush1.msra.mxu0 %v2297
  %2304 = vmatprep.subr.mxu0 0.0
  %2305 = vmatpush1.msra.mxu0 %v2298
  %2306 = vmatprep.subr.mxu0 0.0
  %2307 = vmatpush1.msra.mxu0 %v2299
  %2308 = vmatprep.subr.mxu0 0.0
  %2309 = vmatpush1.msra.mxu0 %v2300
  %2310 = vmatprep.subr.mxu0 0.0
  %2311 = vmatpush1.msra.mxu0 0.0
  %2312 = vmatprep.subr.mxu0 0.0
  %2313 = vmatpush1.msra.mxu0 0.0
  %2314 = vmatprep.subr.mxu0 0.0
  %2315 = vmatpush1.msra.mxu0 0.0
  %2316 = vmatprep.subr.mxu0 0.0
  %2317 = vmatpush1.msra.mxu0 0.0
  %2318 = vmatprep.subr.mxu0 0.0
  %2319 = vmatpush1.msra.mxu0 0.0
  %2320 = vmatprep.subr.mxu0 0.0
  %2321 = vmatpush1.msra.mxu0 0.0
  %2322 = vmatprep.subr.mxu0 0.0
  %2323 = vmatpush1.msra.mxu0 0.0
  %2324 = vmatprep.subr.mxu0 0.0
  %2325 = vmatpush1.msra.mxu0 0.0
  %2326 = vmatprep.subr.mxu0 0.0
  %2327 = vmatpush1.msra.mxu0 0.0
  %2328 = vmatprep.subr.mxu0 0.0
  %2329 = vmatpush1.msra.mxu0 0.0
  %2330 = vmatprep.subr.mxu0 0.0
  %2331 = vmatpush1.msra.mxu0 0.0
  %2332 = vmatprep.subr.mxu0 0.0
  %2333 = vmatpush1.msra.mxu0 0.0
  %2334 = vmatprep.subr.mxu0 0.0
  %2335 = vmatpush1.msra.mxu0 0.0
  %2336 = vmatprep.subr.mxu0 0.0
  %2337 = vmatpush1.msra.mxu0 0.0
  %2338 = vmatprep.subr.mxu0 0.0
  %2339 = vmatpush1.msra.mxu0 0.0
  %2340 = vmatprep.subr.mxu0 0.0
  %2341 = vmatpush1.msra.mxu0 0.0
  %2342 = vmatprep.subr.mxu0 0.0
  %2343 = vmatpush1.msra.mxu0 0.0
  %2344 = vmatprep.subr.mxu0 0.0
  %2345 = vmatpush1.msra.mxu0 0.0
  %2346 = vmatprep.subr.mxu0 0.0
  %2347 = vmatpush1.msra.mxu0 0.0
  %2348 = vmatprep.subr.mxu0 0.0
  %2349 = vmatpush1.msra.mxu0 0.0
  %2350 = vmatprep.subr.mxu0 0.0
  %2351 = vmatpush1.msra.mxu0 0.0
  %2352 = vmatprep.subr.mxu0 0.0
  %2353 = vmatpush1.msra.mxu0 0.0
  %2354 = vmatprep.subr.mxu0 0.0
  %2355 = vmatpush1.msra.mxu0 0.0
  %2356 = vmatprep.subr.mxu0 0.0
  %2357 = vmatpush1.msra.mxu0 0.0
  %2358 = vmatprep.subr.mxu0 0.0
  %2359 = vmatpush1.msra.mxu0 0.0
  %2360 = vmatprep.subr.mxu0 0.0
  %2361 = vmatpush1.msra.mxu0 0.0
  %2362 = vmatprep.subr.mxu0 0.0
  %2363 = vmatpush1.msra.mxu0 0.0
  %2364 = vmatprep.subr.mxu0 0.0
  %2365 = vmatpush1.msra.mxu0 0.0
  %2366 = vmatprep.mubr.f32.mxu0 0.0
  %2367 = vmatmul.mubr.f32.gmra.mrb[0].mxu0 %v335
  %v2368 = vpop.f32.mrb[0].mxu0
  %v2369 = vadd.f32 %v2301, %v2368
  %v2370 = vpop.f32.mrb[0].mxu0
  %2371 = vdwg.mxu0
  %v2372 = vxor.u32 %v2369, 2147483648
  %v2373 = vmul.f32 %v2372, 1.442695
  %v2374 = vpow.pop %v2373
  %v2375 = vadd.f32 %v2374, 1.0
  %v2376 = vrcp.pop %v2375
  %v2377 = vmul.f32 1.0, %v2376
  %v2378 = vtanh.pop %v2369
  %v2379 = vmul.f32 %v2377, 0.0
  %2381 = vrot.lane.b32.xlu0 %v2378, 64
  %v2382 = vpop.permute.xlu0 %2381
  %v2384 = vmul.f32 %v2377, %v2382
  %2386 = vrot.lane.b32.xlu0 %v2384, 32
  %v2387 = vpop.permute.xlu0 %2386
  %v2389 = vadd.f32 %v2379, %v2387
  %v2390 = vtanh.pop %v2389
  %2392 = vrot.lane.b32.xlu0 %v2390, 64
  %v2393 = vpop.permute.xlu0 %2392
  %v2395 = vmul.f32 %v2377, %v2393
  %s2396 = scalar_lea.vmem [#allocation6], 8
  %v2397 = vld [vmem:[%s2396] sm:$0xff]
  %2399 = vrot.lane.b32.xlu0 %v2395, 32
  %v2400 = vpop.permute.xlu0 %2399
  %v2401 = vsel %vm333, %v2400, 0
  %2403 = vmatprep.subr.mxu0 0.0
  %2404 = vmatpush1.msra.mxu0 %v2297
  %2405 = vmatprep.subr.mxu0 0.0
  %2406 = vmatpush1.msra.mxu0 %v2298
  %2407 = vmatprep.subr.mxu0 0.0
  %2408 = vmatpush1.msra.mxu0 %v2299
  %2409 = vmatprep.subr.mxu0 0.0
  %2410 = vmatpush1.msra.mxu0 %v2300
  %2411 = vmatprep.subr.mxu0 0.0
  %2412 = vmatpush1.msra.mxu0 0.0
  %2413 = vmatprep.subr.mxu0 0.0
  %2414 = vmatpush1.msra.mxu0 0.0
  %2415 = vmatprep.subr.mxu0 0.0
  %2416 = vmatpush1.msra.mxu0 0.0
  %2417 = vmatprep.subr.mxu0 0.0
  %2418 = vmatpush1.msra.mxu0 0.0
  %2419 = vmatprep.subr.mxu0 0.0
  %2420 = vmatpush1.msra.mxu0 0.0
  %2421 = vmatprep.subr.mxu0 0.0
  %2422 = vmatpush1.msra.mxu0 0.0
  %2423 = vmatprep.subr.mxu0 0.0
  %2424 = vmatpush1.msra.mxu0 0.0
  %2425 = vmatprep.subr.mxu0 0.0
  %2426 = vmatpush1.msra.mxu0 0.0
  %2427 = vmatprep.subr.mxu0 0.0
  %2428 = vmatpush1.msra.mxu0 0.0
  %2429 = vmatprep.subr.mxu0 0.0
  %2430 = vmatpush1.msra.mxu0 0.0
  %2431 = vmatprep.subr.mxu0 0.0
  %2432 = vmatpush1.msra.mxu0 0.0
  %2433 = vmatprep.subr.mxu0 0.0
  %2434 = vmatpush1.msra.mxu0 0.0
  %2435 = vmatprep.subr.mxu0 0.0
  %2436 = vmatpush1.msra.mxu0 0.0
  %2437 = vmatprep.subr.mxu0 0.0
  %2438 = vmatpush1.msra.mxu0 0.0
  %2439 = vmatprep.subr.mxu0 0.0
  %2440 = vmatpush1.msra.mxu0 0.0
  %2441 = vmatprep.subr.mxu0 0.0
  %2442 = vmatpush1.msra.mxu0 0.0
  %2443 = vmatprep.subr.mxu0 0.0
  %2444 = vmatpush1.msra.mxu0 0.0
  %2445 = vmatprep.subr.mxu0 0.0
  %2446 = vmatpush1.msra.mxu0 0.0
  %2447 = vmatprep.subr.mxu0 0.0
  %2448 = vmatpush1.msra.mxu0 0.0
  %2449 = vmatprep.subr.mxu0 0.0
  %2450 = vmatpush1.msra.mxu0 0.0
  %2451 = vmatprep.subr.mxu0 0.0
  %2452 = vmatpush1.msra.mxu0 0.0
  %2453 = vmatprep.subr.mxu0 0.0
  %2454 = vmatpush1.msra.mxu0 0.0
  %2455 = vmatprep.subr.mxu0 0.0
  %2456 = vmatpush1.msra.mxu0 0.0
  %2457 = vmatprep.subr.mxu0 0.0
  %2458 = vmatpush1.msra.mxu0 0.0
  %2459 = vmatprep.subr.mxu0 0.0
  %2460 = vmatpush1.msra.mxu0 0.0
  %2461 = vmatprep.subr.mxu0 0.0
  %2462 = vmatpush1.msra.mxu0 0.0
  %2463 = vmatprep.subr.mxu0 0.0
  %2464 = vmatpush1.msra.mxu0 0.0
  %2465 = vmatprep.subr.mxu0 0.0
  %2466 = vmatpush1.msra.mxu0 0.0
  %2467 = vmatprep.mubr.f32.mxu0 0.0
  %2468 = vmatmul.mubr.f32.gmra.mrb[0].mxu0 %v2401
  %v2469 = vpop.f32.mrb[0].mxu0
  %v2470 = vadd.f32 %v2397, %v2469
  %v2471 = vpop.f32.mrb[0].mxu0
  %2472 = vdwg.mxu0
  %v2473 = vxor.u32 %v2470, 2147483648
  %v2474 = vmul.f32 %v2473, 1.442695
  %v2475 = vpow.pop %v2474
  %v2476 = vadd.f32 %v2475, 1.0
  %v2477 = vrcp.pop %v2476
  %v2478 = vmul.f32 1.0, %v2477
  %v2479 = vtanh.pop %v2470
  %v2480 = vmul.f32 %v2478, %v2389
  %2482 = vrot.lane.b32.xlu0 %v2479, 64
  %v2483 = vpop.permute.xlu0 %2482
  %v2485 = vmul.f32 %v2478, %v2483
  %2487 = vrot.lane.b32.xlu0 %v2485, 32
  %v2488 = vpop.permute.xlu0 %2487
  %v2490 = vadd.f32 %v2480, %v2488
  %v2491 = vtanh.pop %v2490
  %2493 = vrot.lane.b32.xlu0 %v2491, 64
  %v2494 = vpop.permute.xlu0 %2493
  %v2496 = vmul.f32 %v2478, %v2494
  %s2497 = scalar_lea.vmem [#allocation6], 16
  %v2498 = vld [vmem:[%s2497] sm:$0xff]
  %2500 = vrot.lane.b32.xlu0 %v2496, 32
  %v2501 = vpop.permute.xlu0 %2500
  %v2502 = vsel %vm333, %v2501, 0
  %2504 = vmatprep.subr.mxu0 0.0
  %2505 = vmatpush1.msra.mxu0 %v2297
  %2506 = vmatprep.subr.mxu0 0.0
  %2507 = vmatpush1.msra.mxu0 %v2298
  %2508 = vmatprep.subr.mxu0 0.0
  %2509 = vmatpush1.msra.mxu0 %v2299
  %2510 = vmatprep.subr.mxu0 0.0
  %2511 = vmatpush1.msra.mxu0 %v2300
  %2512 = vmatprep.subr.mxu0 0.0
  %2513 = vmatpush1.msra.mxu0 0.0
  %2514 = vmatprep.subr.mxu0 0.0
  %2515 = vmatpush1.msra.mxu0 0.0
  %2516 = vmatprep.subr.mxu0 0.0
  %2517 = vmatpush1.msra.mxu0 0.0
  %2518 = vmatprep.subr.mxu0 0.0
  %2519 = vmatpush1.msra.mxu0 0.0
  %2520 = vmatprep.subr.mxu0 0.0
  %2521 = vmatpush1.msra.mxu0 0.0
  %2522 = vmatprep.subr.mxu0 0.0
  %2523 = vmatpush1.msra.mxu0 0.0
  %2524 = vmatprep.subr.mxu0 0.0
  %2525 = vmatpush1.msra.mxu0 0.0
  %2526 = vmatprep.subr.mxu0 0.0
  %2527 = vmatpush1.msra.mxu0 0.0
  %2528 = vmatprep.subr.mxu0 0.0
  %2529 = vmatpush1.msra.mxu0 0.0
  %2530 = vmatprep.subr.mxu0 0.0
  %2531 = vmatpush1.msra.mxu0 0.0
  %2532 = vmatprep.subr.mxu0 0.0
  %2533 = vmatpush1.msra.mxu0 0.0
  %2534 = vmatprep.subr.mxu0 0.0
  %2535 = vmatpush1.msra.mxu0 0.0
  %2536 = vmatprep.subr.mxu0 0.0
  %2537 = vmatpush1.msra.mxu0 0.0
  %2538 = vmatprep.subr.mxu0 0.0
  %2539 = vmatpush1.msra.mxu0 0.0
  %2540 = vmatprep.subr.mxu0 0.0
  %2541 = vmatpush1.msra.mxu0 0.0
  %2542 = vmatprep.subr.mxu0 0.0
  %2543 = vmatpush1.msra.mxu0 0.0
  %2544 = vmatprep.subr.mxu0 0.0
  %2545 = vmatpush1.msra.mxu0 0.0
  %2546 = vmatprep.subr.mxu0 0.0
  %2547 = vmatpush1.msra.mxu0 0.0
  %2548 = vmatprep.subr.mxu0 0.0
  %2549 = vmatpush1.msra.mxu0 0.0
  %2550 = vmatprep.subr.mxu0 0.0
  %2551 = vmatpush1.msra.mxu0 0.0
  %2552 = vmatprep.subr.mxu0 0.0
  %2553 = vmatpush1.msra.mxu0 0.0
  %2554 = vmatprep.subr.mxu0 0.0
  %2555 = vmatpush1.msra.mxu0 0.0
  %2556 = vmatprep.subr.mxu0 0.0
  %2557 = vmatpush1.msra.mxu0 0.0
  %2558 = vmatprep.subr.mxu0 0.0
  %2559 = vmatpush1.msra.mxu0 0.0
  %2560 = vmatprep.subr.mxu0 0.0
  %2561 = vmatpush1.msra.mxu0 0.0
  %2562 = vmatprep.subr.mxu0 0.0
  %2563 = vmatpush1.msra.mxu0 0.0
  %2564 = vmatprep.subr.mxu0 0.0
  %2565 = vmatpush1.msra.mxu0 0.0
  %2566 = vmatprep.subr.mxu0 0.0
  %2567 = vmatpush1.msra.mxu0 0.0
  %2568 = vmatprep.mubr.f32.mxu0 0.0
  %2569 = vmatmul.mubr.f32.gmra.mrb[0].mxu0 %v2502
  %v2570 = vpop.f32.mrb[0].mxu0
  %v2571 = vadd.f32 %v2498, %v2570
  %v2572 = vpop.f32.mrb[0].mxu0
  %2573 = vdwg.mxu0
  %v2574 = vxor.u32 %v2571, 2147483648
  %v2575 = vmul.f32 %v2574, 1.442695
  %v2576 = vpow.pop %v2575
  %v2577 = vadd.f32 %v2576, 1.0
  %v2578 = vrcp.pop %v2577
  %v2579 = vmul.f32 1.0, %v2578
  %v2580 = vtanh.pop %v2571
  %v2581 = vmul.f32 %v2579, %v2490
  %2583 = vrot.lane.b32.xlu0 %v2580, 64
  %v2584 = vpop.permute.xlu0 %2583
  %v2586 = vmul.f32 %v2579, %v2584
  %2588 = vrot.lane.b32.xlu0 %v2586, 32
  %v2589 = vpop.permute.xlu0 %2588
  %v2591 = vadd.f32 %v2581, %v2589
  %v2592 = vtanh.pop %v2591
  %2594 = vrot.lane.b32.xlu0 %v2592, 64
  %v2595 = vpop.permute.xlu0 %2594
  %v2597 = vmul.f32 %v2579, %v2595
  %s2598 = scalar_lea.vmem [#allocation6], 24
  %v2599 = vld [vmem:[%s2598] sm:$0xff]
  %2601 = vrot.lane.b32.xlu0 %v2597, 32
  %v2602 = vpop.permute.xlu0 %2601
  %v2603 = vsel %vm333, %v2602, 0
  %2605 = vmatprep.subr.mxu0 0.0
  %2606 = vmatpush1.msra.mxu0 %v2297
  %2607 = vmatprep.subr.mxu0 0.0
  %2608 = vmatpush1.msra.mxu0 %v2298
  %2609 = vmatprep.subr.mxu0 0.0
  %2610 = vmatpush1.msra.mxu0 %v2299
  %2611 = vmatprep.subr.mxu0 0.0
  %2612 = vmatpush1.msra.mxu0 %v2300
  %2613 = vmatprep.subr.mxu0 0.0
  %2614 = vmatpush1.msra.mxu0 0.0
  %2615 = vmatprep.subr.mxu0 0.0
  %2616 = vmatpush1.msra.mxu0 0.0
  %2617 = vmatprep.subr.mxu0 0.0
  %2618 = vmatpush1.msra.mxu0 0.0
  %2619 = vmatprep.subr.mxu0 0.0
  %2620 = vmatpush1.msra.mxu0 0.0
  %2621 = vmatprep.subr.mxu0 0.0
  %2622 = vmatpush1.msra.mxu0 0.0
  %2623 = vmatprep.subr.mxu0 0.0
  %2624 = vmatpush1.msra.mxu0 0.0
  %2625 = vmatprep.subr.mxu0 0.0
  %2626 = vmatpush1.msra.mxu0 0.0
  %2627 = vmatprep.subr.mxu0 0.0
  %2628 = vmatpush1.msra.mxu0 0.0
  %2629 = vmatprep.subr.mxu0 0.0
  %2630 = vmatpush1.msra.mxu0 0.0
  %2631 = vmatprep.subr.mxu0 0.0
  %2632 = vmatpush1.msra.mxu0 0.0
  %2633 = vmatprep.subr.mxu0 0.0
  %2634 = vmatpush1.msra.mxu0 0.0
  %2635 = vmatprep.subr.mxu0 0.0
  %2636 = vmatpush1.msra.mxu0 0.0
  %2637 = vmatprep.subr.mxu0 0.0
  %2638 = vmatpush1.msra.mxu0 0.0
  %2639 = vmatprep.subr.mxu0 0.0
  %2640 = vmatpush1.msra.mxu0 0.0
  %2641 = vmatprep.subr.mxu0 0.0
  %2642 = vmatpush1.msra.mxu0 0.0
  %2643 = vmatprep.subr.mxu0 0.0
  %2644 = vmatpush1.msra.mxu0 0.0
  %2645 = vmatprep.subr.mxu0 0.0
  %2646 = vmatpush1.msra.mxu0 0.0
  %2647 = vmatprep.subr.mxu0 0.0
  %2648 = vmatpush1.msra.mxu0 0.0
  %2649 = vmatprep.subr.mxu0 0.0
  %2650 = vmatpush1.msra.mxu0 0.0
  %2651 = vmatprep.subr.mxu0 0.0
  %2652 = vmatpush1.msra.mxu0 0.0
  %2653 = vmatprep.subr.mxu0 0.0
  %2654 = vmatpush1.msra.mxu0 0.0
  %2655 = vmatprep.subr.mxu0 0.0
  %2656 = vmatpush1.msra.mxu0 0.0
  %2657 = vmatprep.subr.mxu0 0.0
  %2658 = vmatpush1.msra.mxu0 0.0
  %2659 = vmatprep.subr.mxu0 0.0
  %2660 = vmatpush1.msra.mxu0 0.0
  %2661 = vmatprep.subr.mxu0 0.0
  %2662 = vmatpush1.msra.mxu0 0.0
  %2663 = vmatprep.subr.mxu0 0.0
  %2664 = vmatpush1.msra.mxu0 0.0
  %2665 = vmatprep.subr.mxu0 0.0
  %2666 = vmatpush1.msra.mxu0 0.0
  %2667 = vmatprep.subr.mxu0 0.0
  %2668 = vmatpush1.msra.mxu0 0.0
  %2669 = vmatprep.mubr.f32.mxu0 0.0
  %2670 = vmatmul.mubr.f32.gmra.mrb[0].mxu0 %v2603
  %v2671 = vpop.f32.mrb[0].mxu0
  %v2672 = vadd.f32 %v2599, %v2671
  %v2673 = vpop.f32.mrb[0].mxu0
  %2674 = vdwg.mxu0
  %v2675 = vxor.u32 %v2672, 2147483648
  %v2676 = vmul.f32 %v2675, 1.442695
  %v2677 = vpow.pop %v2676
  %v2678 = vadd.f32 %v2677, 1.0
  %v2679 = vrcp.pop %v2678
  %v2680 = vmul.f32 1.0, %v2679
  %v2681 = vtanh.pop %v2672
  %v2682 = vmul.f32 %v2680, %v2591
  %2684 = vrot.lane.b32.xlu0 %v2681, 64
  %v2685 = vpop.permute.xlu0 %2684
  %v2687 = vmul.f32 %v2680, %v2685
  %2689 = vrot.lane.b32.xlu0 %v2687, 32
  %v2690 = vpop.permute.xlu0 %2689
  %v2692 = vadd.f32 %v2682, %v2690
  %v2693 = vtanh.pop %v2692
  %2695 = vrot.lane.b32.xlu0 %v2693, 64
  %v2696 = vpop.permute.xlu0 %2695
  %v2698 = vmul.f32 %v2680, %v2696
  %s2699 = scalar_lea.vmem [#allocation6], 32
  %v2700 = vld [vmem:[%s2699] sm:$0xff]
  %2702 = vrot.lane.b32.xlu0 %v2698, 32
  %v2703 = vpop.permute.xlu0 %2702
  %v2704 = vsel %vm333, %v2703, 0
  %2706 = vmatprep.subr.mxu0 0.0
  %2707 = vmatpush1.msra.mxu0 %v2297
  %2708 = vmatprep.subr.mxu0 0.0
  %2709 = vmatpush1.msra.mxu0 %v2298
  %2710 = vmatprep.subr.mxu0 0.0
  %2711 = vmatpush1.msra.mxu0 %v2299
  %2712 = vmatprep.subr.mxu0 0.0
  %2713 = vmatpush1.msra.mxu0 %v2300
  %2714 = vmatprep.subr.mxu0 0.0
  %2715 = vmatpush1.msra.mxu0 0.0
  %2716 = vmatprep.subr.mxu0 0.0
  %2717 = vmatpush1.msra.mxu0 0.0
  %2718 = vmatprep.subr.mxu0 0.0
  %2719 = vmatpush1.msra.mxu0 0.0
  %2720 = vmatprep.subr.mxu0 0.0
  %2721 = vmatpush1.msra.mxu0 0.0
  %2722 = vmatprep.subr.mxu0 0.0
  %2723 = vmatpush1.msra.mxu0 0.0
  %2724 = vmatprep.subr.mxu0 0.0
  %2725 = vmatpush1.msra.mxu0 0.0
  %2726 = vmatprep.subr.mxu0 0.0
  %2727 = vmatpush1.msra.mxu0 0.0
  %2728 = vmatprep.subr.mxu0 0.0
  %2729 = vmatpush1.msra.mxu0 0.0
  %2730 = vmatprep.subr.mxu0 0.0
  %2731 = vmatpush1.msra.mxu0 0.0
  %2732 = vmatprep.subr.mxu0 0.0
  %2733 = vmatpush1.msra.mxu0 0.0
  %2734 = vmatprep.subr.mxu0 0.0
  %2735 = vmatpush1.msra.mxu0 0.0
  %2736 = vmatprep.subr.mxu0 0.0
  %2737 = vmatpush1.msra.mxu0 0.0
  %2738 = vmatprep.subr.mxu0 0.0
  %2739 = vmatpush1.msra.mxu0 0.0
  %2740 = vmatprep.subr.mxu0 0.0
  %2741 = vmatpush1.msra.mxu0 0.0
  %2742 = vmatprep.subr.mxu0 0.0
  %2743 = vmatpush1.msra.mxu0 0.0
  %2744 = vmatprep.subr.mxu0 0.0
  %2745 = vmatpush1.msra.mxu0 0.0
  %2746 = vmatprep.subr.mxu0 0.0
  %2747 = vmatpush1.msra.mxu0 0.0
  %2748 = vmatprep.subr.mxu0 0.0
  %2749 = vmatpush1.msra.mxu0 0.0
  %2750 = vmatprep.subr.mxu0 0.0
  %2751 = vmatpush1.msra.mxu0 0.0
  %2752 = vmatprep.subr.mxu0 0.0
  %2753 = vmatpush1.msra.mxu0 0.0
  %2754 = vmatprep.subr.mxu0 0.0
  %2755 = vmatpush1.msra.mxu0 0.0
  %2756 = vmatprep.subr.mxu0 0.0
  %2757 = vmatpush1.msra.mxu0 0.0
  %2758 = vmatprep.subr.mxu0 0.0
  %2759 = vmatpush1.msra.mxu0 0.0
  %2760 = vmatprep.subr.mxu0 0.0
  %2761 = vmatpush1.msra.mxu0 0.0
  %2762 = vmatprep.subr.mxu0 0.0
  %2763 = vmatpush1.msra.mxu0 0.0
  %2764 = vmatprep.subr.mxu0 0.0
  %2765 = vmatpush1.msra.mxu0 0.0
  %2766 = vmatprep.subr.mxu0 0.0
  %2767 = vmatpush1.msra.mxu0 0.0
  %2768 = vmatprep.subr.mxu0 0.0
  %2769 = vmatpush1.msra.mxu0 0.0
  %2770 = vmatprep.mubr.f32.mxu0 0.0
  %2771 = vmatmul.mubr.f32.gmra.mrb[0].mxu0 %v2704
  %v2772 = vpop.f32.mrb[0].mxu0
  %v2773 = vadd.f32 %v2700, %v2772
  %v2774 = vpop.f32.mrb[0].mxu0
  %2775 = vdwg.mxu0
  %v2776 = vxor.u32 %v2773, 2147483648
  %v2777 = vmul.f32 %v2776, 1.442695
  %v2778 = vpow.pop %v2777
  %v2779 = vadd.f32 %v2778, 1.0
  %v2780 = vrcp.pop %v2779
  %v2781 = vmul.f32 1.0, %v2780
  %v2782 = vtanh.pop %v2773
  %v2783 = vmul.f32 %v2781, %v2692
  %2785 = vrot.lane.b32.xlu0 %v2782, 64
  %v2786 = vpop.permute.xlu0 %2785
  %v2788 = vmul.f32 %v2781, %v2786
  %2790 = vrot.lane.b32.xlu0 %v2788, 32
  %v2791 = vpop.permute.xlu0 %2790
  %v2793 = vadd.f32 %v2783, %v2791
  %v2794 = vtanh.pop %v2793
  %2796 = vrot.lane.b32.xlu0 %v2794, 64
  %v2797 = vpop.permute.xlu0 %2796
  %v2799 = vmul.f32 %v2781, %v2797
  %s2800 = scalar_lea.vmem [#allocation6], 40
  %v2801 = vld [vmem:[%s2800] sm:$0xff]
  %2803 = vrot.lane.b32.xlu0 %v2799, 32
  %v2804 = vpop.permute.xlu0 %2803
  %v2805 = vsel %vm333, %v2804, 0
  %2807 = vmatprep.subr.mxu0 0.0
  %2808 = vmatpush1.msra.mxu0 %v2297
  %2809 = vmatprep.subr.mxu0 0.0
  %2810 = vmatpush1.msra.mxu0 %v2298
  %2811 = vmatprep.subr.mxu0 0.0
  %2812 = vmatpush1.msra.mxu0 %v2299
  %2813 = vmatprep.subr.mxu0 0.0
  %2814 = vmatpush1.msra.mxu0 %v2300
  %2815 = vmatprep.subr.mxu0 0.0
  %2816 = vmatpush1.msra.mxu0 0.0
  %2817 = vmatprep.subr.mxu0 0.0
  %2818 = vmatpush1.msra.mxu0 0.0
  %2819 = vmatprep.subr.mxu0 0.0
  %2820 = vmatpush1.msra.mxu0 0.0
  %2821 = vmatprep.subr.mxu0 0.0
  %2822 = vmatpush1.msra.mxu0 0.0
  %2823 = vmatprep.subr.mxu0 0.0
  %2824 = vmatpush1.msra.mxu0 0.0
  %2825 = vmatprep.subr.mxu0 0.0
  %2826 = vmatpush1.msra.mxu0 0.0
  %2827 = vmatprep.subr.mxu0 0.0
  %2828 = vmatpush1.msra.mxu0 0.0
  %2829 = vmatprep.subr.mxu0 0.0
  %2830 = vmatpush1.msra.mxu0 0.0
  %2831 = vmatprep.subr.mxu0 0.0
  %2832 = vmatpush1.msra.mxu0 0.0
  %2833 = vmatprep.subr.mxu0 0.0
  %2834 = vmatpush1.msra.mxu0 0.0
  %2835 = vmatprep.subr.mxu0 0.0
  %2836 = vmatpush1.msra.mxu0 0.0
  %2837 = vmatprep.subr.mxu0 0.0
  %2838 = vmatpush1.msra.mxu0 0.0
  %2839 = vmatprep.subr.mxu0 0.0
  %2840 = vmatpush1.msra.mxu0 0.0
  %2841 = vmatprep.subr.mxu0 0.0
  %2842 = vmatpush1.msra.mxu0 0.0
  %2843 = vmatprep.subr.mxu0 0.0
  %2844 = vmatpush1.msra.mxu0 0.0
  %2845 = vmatprep.subr.mxu0 0.0
  %2846 = vmatpush1.msra.mxu0 0.0
  %2847 = vmatprep.subr.mxu0 0.0
  %2848 = vmatpush1.msra.mxu0 0.0
  %2849 = vmatprep.subr.mxu0 0.0
  %2850 = vmatpush1.msra.mxu0 0.0
  %2851 = vmatprep.subr.mxu0 0.0
  %2852 = vmatpush1.msra.mxu0 0.0
  %2853 = vmatprep.subr.mxu0 0.0
  %2854 = vmatpush1.msra.mxu0 0.0
  %2855 = vmatprep.subr.mxu0 0.0
  %2856 = vmatpush1.msra.mxu0 0.0
  %2857 = vmatprep.subr.mxu0 0.0
  %2858 = vmatpush1.msra.mxu0 0.0
  %2859 = vmatprep.subr.mxu0 0.0
  %2860 = vmatpush1.msra.mxu0 0.0
  %2861 = vmatprep.subr.mxu0 0.0
  %2862 = vmatpush1.msra.mxu0 0.0
  %2863 = vmatprep.subr.mxu0 0.0
  %2864 = vmatpush1.msra.mxu0 0.0
  %2865 = vmatprep.subr.mxu0 0.0
  %2866 = vmatpush1.msra.mxu0 0.0
  %2867 = vmatprep.subr.mxu0 0.0
  %2868 = vmatpush1.msra.mxu0 0.0
  %2869 = vmatprep.subr.mxu0 0.0
  %2870 = vmatpush1.msra.mxu0 0.0
  %2871 = vmatprep.mubr.f32.mxu0 0.0
  %2872 = vmatmul.mubr.f32.gmra.mrb[0].mxu0 %v2805
  %v2873 = vpop.f32.mrb[0].mxu0
  %v2874 = vadd.f32 %v2801, %v2873
  %v2875 = vpop.f32.mrb[0].mxu0
  %2876 = vdwg.mxu0
  %v2877 = vxor.u32 %v2874, 2147483648
  %v2878 = vmul.f32 %v2877, 1.442695
  %v2879 = vpow.pop %v2878
  %v2880 = vadd.f32 %v2879, 1.0
  %v2881 = vrcp.pop %v2880
  %v2882 = vmul.f32 1.0, %v2881
  %v2883 = vtanh.pop %v2874
  %v2884 = vmul.f32 %v2882, %v2793
  %2886 = vrot.lane.b32.xlu0 %v2883, 64
  %v2887 = vpop.permute.xlu0 %2886
  %v2889 = vmul.f32 %v2882, %v2887
  %2891 = vrot.lane.b32.xlu0 %v2889, 32
  %v2892 = vpop.permute.xlu0 %2891
  %v2894 = vadd.f32 %v2884, %v2892
  %v2895 = vtanh.pop %v2894
  %2897 = vrot.lane.b32.xlu0 %v2895, 64
  %v2898 = vpop.permute.xlu0 %2897
  %v2900 = vmul.f32 %v2882, %v2898
  %s2901 = scalar_lea.vmem [#allocation6], 48
  %v2902 = vld [vmem:[%s2901] sm:$0xff]
  %2904 = vrot.lane.b32.xlu0 %v2900, 32
  %v2905 = vpop.permute.xlu0 %2904
  %v2906 = vsel %vm333, %v2905, 0
  %2908 = vmatprep.subr.mxu0 0.0
  %2909 = vmatpush1.msra.mxu0 %v2297
  %2910 = vmatprep.subr.mxu0 0.0
  %2911 = vmatpush1.msra.mxu0 %v2298
  %2912 = vmatprep.subr.mxu0 0.0
  %2913 = vmatpush1.msra.mxu0 %v2299
  %2914 = vmatprep.subr.mxu0 0.0
  %2915 = vmatpush1.msra.mxu0 %v2300
  %2916 = vmatprep.subr.mxu0 0.0
  %2917 = vmatpush1.msra.mxu0 0.0
  %2918 = vmatprep.subr.mxu0 0.0
  %2919 = vmatpush1.msra.mxu0 0.0
  %2920 = vmatprep.subr.mxu0 0.0
  %2921 = vmatpush1.msra.mxu0 0.0
  %2922 = vmatprep.subr.mxu0 0.0
  %2923 = vmatpush1.msra.mxu0 0.0
  %2924 = vmatprep.subr.mxu0 0.0
  %2925 = vmatpush1.msra.mxu0 0.0
  %2926 = vmatprep.subr.mxu0 0.0
  %2927 = vmatpush1.msra.mxu0 0.0
  %2928 = vmatprep.subr.mxu0 0.0
  %2929 = vmatpush1.msra.mxu0 0.0
  %2930 = vmatprep.subr.mxu0 0.0
  %2931 = vmatpush1.msra.mxu0 0.0
  %2932 = vmatprep.subr.mxu0 0.0
  %2933 = vmatpush1.msra.mxu0 0.0
  %2934 = vmatprep.subr.mxu0 0.0
  %2935 = vmatpush1.msra.mxu0 0.0
  %2936 = vmatprep.subr.mxu0 0.0
  %2937 = vmatpush1.msra.mxu0 0.0
  %2938 = vmatprep.subr.mxu0 0.0
  %2939 = vmatpush1.msra.mxu0 0.0
  %2940 = vmatprep.subr.mxu0 0.0
  %2941 = vmatpush1.msra.mxu0 0.0
  %2942 = vmatprep.subr.mxu0 0.0
  %2943 = vmatpush1.msra.mxu0 0.0
  %2944 = vmatprep.subr.mxu0 0.0
  %2945 = vmatpush1.msra.mxu0 0.0
  %2946 = vmatprep.subr.mxu0 0.0
  %2947 = vmatpush1.msra.mxu0 0.0
  %2948 = vmatprep.subr.mxu0 0.0
  %2949 = vmatpush1.msra.mxu0 0.0
  %2950 = vmatprep.subr.mxu0 0.0
  %2951 = vmatpush1.msra.mxu0 0.0
  %2952 = vmatprep.subr.mxu0 0.0
  %2953 = vmatpush1.msra.mxu0 0.0
  %2954 = vmatprep.subr.mxu0 0.0
  %2955 = vmatpush1.msra.mxu0 0.0
  %2956 = vmatprep.subr.mxu0 0.0
  %2957 = vmatpush1.msra.mxu0 0.0
  %2958 = vmatprep.subr.mxu0 0.0
  %2959 = vmatpush1.msra.mxu0 0.0
  %2960 = vmatprep.subr.mxu0 0.0
  %2961 = vmatpush1.msra.mxu0 0.0
  %2962 = vmatprep.subr.mxu0 0.0
  %2963 = vmatpush1.msra.mxu0 0.0
  %2964 = vmatprep.subr.mxu0 0.0
  %2965 = vmatpush1.msra.mxu0 0.0
  %2966 = vmatprep.subr.mxu0 0.0
  %2967 = vmatpush1.msra.mxu0 0.0
  %2968 = vmatprep.subr.mxu0 0.0
  %2969 = vmatpush1.msra.mxu0 0.0
  %2970 = vmatprep.subr.mxu0 0.0
  %2971 = vmatpush1.msra.mxu0 0.0
  %2972 = vmatprep.mubr.f32.mxu0 0.0
  %2973 = vmatmul.mubr.f32.gmra.mrb[0].mxu0 %v2906
  %v2974 = vpop.f32.mrb[0].mxu0
  %v2975 = vadd.f32 %v2902, %v2974
  %v2976 = vpop.f32.mrb[0].mxu0
  %2977 = vdwg.mxu0
  %v2978 = vxor.u32 %v2975, 2147483648
  %v2979 = vmul.f32 %v2978, 1.442695
  %v2980 = vpow.pop %v2979
  %v2981 = vadd.f32 %v2980, 1.0
  %v2982 = vrcp.pop %v2981
  %v2983 = vmul.f32 1.0, %v2982
  %v2984 = vtanh.pop %v2975
  %v2985 = vmul.f32 %v2983, %v2894
  %2987 = vrot.lane.b32.xlu0 %v2984, 64
  %v2988 = vpop.permute.xlu0 %2987
  %v2990 = vmul.f32 %v2983, %v2988
  %2992 = vrot.lane.b32.xlu0 %v2990, 32
  %v2993 = vpop.permute.xlu0 %2992
  %v2995 = vadd.f32 %v2985, %v2993
  %v2996 = vtanh.pop %v2995
  %2998 = vrot.lane.b32.xlu0 %v2996, 64
  %v2999 = vpop.permute.xlu0 %2998
  %v3001 = vmul.f32 %v2983, %v2999
  %s3002 = scalar_lea.vmem [#allocation6], 56
  %v3003 = vld [vmem:[%s3002] sm:$0xff]
  %3005 = vrot.lane.b32.xlu0 %v3001, 32
  %v3006 = vpop.permute.xlu0 %3005
  %v3007 = vsel %vm333, %v3006, 0
  %3009 = vmatprep.subr.mxu0 0.0
  %3010 = vmatpush1.msra.mxu0 %v2297
  %3011 = vmatprep.subr.mxu0 0.0
  %3012 = vmatpush1.msra.mxu0 %v2298
  %3013 = vmatprep.subr.mxu0 0.0
  %3014 = vmatpush1.msra.mxu0 %v2299
  %3015 = vmatprep.subr.mxu0 0.0
  %3016 = vmatpush1.msra.mxu0 %v2300
  %3017 = vmatprep.subr.mxu0 0.0
  %3018 = vmatpush1.msra.mxu0 0.0
  %3019 = vmatprep.subr.mxu0 0.0
  %3020 = vmatpush1.msra.mxu0 0.0
  %3021 = vmatprep.subr.mxu0 0.0
  %3022 = vmatpush1.msra.mxu0 0.0
  %3023 = vmatprep.subr.mxu0 0.0
  %3024 = vmatpush1.msra.mxu0 0.0
  %3025 = vmatprep.subr.mxu0 0.0
  %3026 = vmatpush1.msra.mxu0 0.0
  %3027 = vmatprep.subr.mxu0 0.0
  %3028 = vmatpush1.msra.mxu0 0.0
  %3029 = vmatprep.subr.mxu0 0.0
  %3030 = vmatpush1.msra.mxu0 0.0
  %3031 = vmatprep.subr.mxu0 0.0
  %3032 = vmatpush1.msra.mxu0 0.0
  %3033 = vmatprep.subr.mxu0 0.0
  %3034 = vmatpush1.msra.mxu0 0.0
  %3035 = vmatprep.subr.mxu0 0.0
  %3036 = vmatpush1.msra.mxu0 0.0
  %3037 = vmatprep.subr.mxu0 0.0
  %3038 = vmatpush1.msra.mxu0 0.0
  %3039 = vmatprep.subr.mxu0 0.0
  %3040 = vmatpush1.msra.mxu0 0.0
  %3041 = vmatprep.subr.mxu0 0.0
  %3042 = vmatpush1.msra.mxu0 0.0
  %3043 = vmatprep.subr.mxu0 0.0
  %3044 = vmatpush1.msra.mxu0 0.0
  %3045 = vmatprep.subr.mxu0 0.0
  %3046 = vmatpush1.msra.mxu0 0.0
  %3047 = vmatprep.subr.mxu0 0.0
  %3048 = vmatpush1.msra.mxu0 0.0
  %3049 = vmatprep.subr.mxu0 0.0
  %3050 = vmatpush1.msra.mxu0 0.0
  %3051 = vmatprep.subr.mxu0 0.0
  %3052 = vmatpush1.msra.mxu0 0.0
  %3053 = vmatprep.subr.mxu0 0.0
  %3054 = vmatpush1.msra.mxu0 0.0
  %3055 = vmatprep.subr.mxu0 0.0
  %3056 = vmatpush1.msra.mxu0 0.0
  %3057 = vmatprep.subr.mxu0 0.0
  %3058 = vmatpush1.msra.mxu0 0.0
  %3059 = vmatprep.subr.mxu0 0.0
  %3060 = vmatpush1.msra.mxu0 0.0
  %3061 = vmatprep.subr.mxu0 0.0
  %3062 = vmatpush1.msra.mxu0 0.0
  %3063 = vmatprep.subr.mxu0 0.0
  %3064 = vmatpush1.msra.mxu0 0.0
  %3065 = vmatprep.subr.mxu0 0.0
  %3066 = vmatpush1.msra.mxu0 0.0
  %3067 = vmatprep.subr.mxu0 0.0
  %3068 = vmatpush1.msra.mxu0 0.0
  %3069 = vmatprep.subr.mxu0 0.0
  %3070 = vmatpush1.msra.mxu0 0.0
  %3071 = vmatprep.subr.mxu0 0.0
  %3072 = vmatpush1.msra.mxu0 0.0
  %3073 = vmatprep.mubr.f32.mxu0 0.0
  %3074 = vmatmul.mubr.f32.gmra.mrb[0].mxu0 %v3007
  %v3075 = vpop.f32.mrb[0].mxu0
  %v3076 = vadd.f32 %v3003, %v3075
  %v3077 = vpop.f32.mrb[0].mxu0
  %3078 = vdwg.mxu0
  %v3079 = vxor.u32 %v3076, 2147483648
  %v3080 = vmul.f32 %v3079, 1.442695
  %v3081 = vpow.pop %v3080
  %v3082 = vadd.f32 %v3081, 1.0
  %v3083 = vrcp.pop %v3082
  %v3084 = vmul.f32 1.0, %v3083
  %v3085 = vtanh.pop %v3076
  %v3086 = vmul.f32 %v3084, %v2995
  %3088 = vrot.lane.b32.xlu0 %v3085, 64
  %v3089 = vpop.permute.xlu0 %3088
  %v3091 = vmul.f32 %v3084, %v3089
  %3093 = vrot.lane.b32.xlu0 %v3091, 32
  %v3094 = vpop.permute.xlu0 %3093
  %v3096 = vadd.f32 %v3086, %v3094
  %v3097 = vtanh.pop %v3096
  %3099 = vrot.lane.b32.xlu0 %v3097, 64
  %v3100 = vpop.permute.xlu0 %3099
  %v3102 = vmul.f32 %v3084, %v3100
  %v3103 = vld [vmem:[%s10] sm:$0xff]
  %v3104 = vld [vmem:[%s10 + $0x8] sm:$0xff]
  %v3105 = vld [vmem:[%s10 + $0x10] sm:$0xff]
  %v3106 = vld [vmem:[%s10 + $0x18] sm:$0xff]
  %v3107 = vld [vmem:[%s10 + $0x20] sm:$0xff]
  %v3108 = vld [vmem:[%s10 + $0x28] sm:$0xff]
  %v3109 = vld [vmem:[%s10 + $0x30] sm:$0xff]
  %v3110 = vld [vmem:[%s10 + $0x38] sm:$0xff]
  %v3111 = vld [vmem:[%s536] sm:$0xff]
  %v3113 = vsel %vm333, %v3111, 0
  %3115 = vmatprep.subr.mxu0 0.0
  %3116 = vmatpush1.msra.mxu0 %v3107
  %3117 = vmatprep.subr.mxu0 0.0
  %3118 = vmatpush1.msra.mxu0 %v3108
  %3119 = vmatprep.subr.mxu0 0.0
  %3120 = vmatpush1.msra.mxu0 %v3109
  %3121 = vmatprep.subr.mxu0 0.0
  %3122 = vmatpush1.msra.mxu0 %v3110
  %3123 = vmatprep.subr.mxu0 0.0
  %3124 = vmatpush1.msra.mxu0 0.0
  %3125 = vmatprep.subr.mxu0 0.0
  %3126 = vmatpush1.msra.mxu0 0.0
  %3127 = vmatprep.subr.mxu0 0.0
  %3128 = vmatpush1.msra.mxu0 0.0
  %3129 = vmatprep.subr.mxu0 0.0
  %3130 = vmatpush1.msra.mxu0 0.0
  %3131 = vmatprep.subr.mxu0 0.0
  %3132 = vmatpush1.msra.mxu0 0.0
  %3133 = vmatprep.subr.mxu0 0.0
  %3134 = vmatpush1.msra.mxu0 0.0
  %3135 = vmatprep.subr.mxu0 0.0
  %3136 = vmatpush1.msra.mxu0 0.0
  %3137 = vmatprep.subr.mxu0 0.0
  %3138 = vmatpush1.msra.mxu0 0.0
  %3139 = vmatprep.subr.mxu0 0.0
  %3140 = vmatpush1.msra.mxu0 0.0
  %3141 = vmatprep.subr.mxu0 0.0
  %3142 = vmatpush1.msra.mxu0 0.0
  %3143 = vmatprep.subr.mxu0 0.0
  %3144 = vmatpush1.msra.mxu0 0.0
  %3145 = vmatprep.subr.mxu0 0.0
  %3146 = vmatpush1.msra.mxu0 0.0
  %3147 = vmatprep.subr.mxu0 0.0
  %3148 = vmatpush1.msra.mxu0 0.0
  %3149 = vmatprep.subr.mxu0 0.0
  %3150 = vmatpush1.msra.mxu0 0.0
  %3151 = vmatprep.subr.mxu0 0.0
  %3152 = vmatpush1.msra.mxu0 0.0
  %3153 = vmatprep.subr.mxu0 0.0
  %3154 = vmatpush1.msra.mxu0 0.0
  %3155 = vmatprep.subr.mxu0 0.0
  %3156 = vmatpush1.msra.mxu0 0.0
  %3157 = vmatprep.subr.mxu0 0.0
  %3158 = vmatpush1.msra.mxu0 0.0
  %3159 = vmatprep.subr.mxu0 0.0
  %3160 = vmatpush1.msra.mxu0 0.0
  %3161 = vmatprep.subr.mxu0 0.0
  %3162 = vmatpush1.msra.mxu0 0.0
  %3163 = vmatprep.subr.mxu0 0.0
  %3164 = vmatpush1.msra.mxu0 0.0
  %3165 = vmatprep.subr.mxu0 0.0
  %3166 = vmatpush1.msra.mxu0 0.0
  %3167 = vmatprep.subr.mxu0 0.0
  %3168 = vmatpush1.msra.mxu0 0.0
  %3169 = vmatprep.subr.mxu0 0.0
  %3170 = vmatpush1.msra.mxu0 0.0
  %3171 = vmatprep.subr.mxu0 0.0
  %3172 = vmatpush1.msra.mxu0 0.0
  %3173 = vmatprep.subr.mxu0 0.0
  %3174 = vmatpush1.msra.mxu0 0.0
  %3175 = vmatprep.subr.mxu0 0.0
  %3176 = vmatpush1.msra.mxu0 0.0
  %3177 = vmatprep.subr.mxu0 0.0
  %3178 = vmatpush1.msra.mxu0 0.0
  %3179 = vmatprep.mubr.f32.mxu0 0.0
  %3180 = vmatmul.mubr.f32.gmra.mrb[0].mxu0 %v3113
  %v3181 = vpop.f32.mrb[0].mxu0
  %v3182 = vadd.f32 0.0, %v3181
  %v3183 = vpop.f32.mrb[0].mxu0
  %3184 = vdwg.mxu0
  %v3185 = vsel %vm333, %v1983, 0
  %3187 = vmatprep.subr.mxu0 0.0
  %3188 = vmatpush1.msra.mxu0 %v3103
  %3189 = vmatprep.subr.mxu0 0.0
  %3190 = vmatpush1.msra.mxu0 %v3104
  %3191 = vmatprep.subr.mxu0 0.0
  %3192 = vmatpush1.msra.mxu0 %v3105
  %3193 = vmatprep.subr.mxu0 0.0
  %3194 = vmatpush1.msra.mxu0 %v3106
  %3195 = vmatprep.subr.mxu0 0.0
  %3196 = vmatpush1.msra.mxu0 0.0
  %3197 = vmatprep.subr.mxu0 0.0
  %3198 = vmatpush1.msra.mxu0 0.0
  %3199 = vmatprep.subr.mxu0 0.0
  %3200 = vmatpush1.msra.mxu0 0.0
  %3201 = vmatprep.subr.mxu0 0.0
  %3202 = vmatpush1.msra.mxu0 0.0
  %3203 = vmatprep.subr.mxu0 0.0
  %3204 = vmatpush1.msra.mxu0 0.0
  %3205 = vmatprep.subr.mxu0 0.0
  %3206 = vmatpush1.msra.mxu0 0.0
  %3207 = vmatprep.subr.mxu0 0.0
  %3208 = vmatpush1.msra.mxu0 0.0
  %3209 = vmatprep.subr.mxu0 0.0
  %3210 = vmatpush1.msra.mxu0 0.0
  %3211 = vmatprep.subr.mxu0 0.0
  %3212 = vmatpush1.msra.mxu0 0.0
  %3213 = vmatprep.subr.mxu0 0.0
  %3214 = vmatpush1.msra.mxu0 0.0
  %3215 = vmatprep.subr.mxu0 0.0
  %3216 = vmatpush1.msra.mxu0 0.0
  %3217 = vmatprep.subr.mxu0 0.0
  %3218 = vmatpush1.msra.mxu0 0.0
  %3219 = vmatprep.subr.mxu0 0.0
  %3220 = vmatpush1.msra.mxu0 0.0
  %3221 = vmatprep.subr.mxu0 0.0
  %3222 = vmatpush1.msra.mxu0 0.0
  %3223 = vmatprep.subr.mxu0 0.0
  %3224 = vmatpush1.msra.mxu0 0.0
  %3225 = vmatprep.subr.mxu0 0.0
  %3226 = vmatpush1.msra.mxu0 0.0
  %3227 = vmatprep.subr.mxu0 0.0
  %3228 = vmatpush1.msra.mxu0 0.0
  %3229 = vmatprep.subr.mxu0 0.0
  %3230 = vmatpush1.msra.mxu0 0.0
  %3231 = vmatprep.subr.mxu0 0.0
  %3232 = vmatpush1.msra.mxu0 0.0
  %3233 = vmatprep.subr.mxu0 0.0
  %3234 = vmatpush1.msra.mxu0 0.0
  %3235 = vmatprep.subr.mxu0 0.0
  %3236 = vmatpush1.msra.mxu0 0.0
  %3237 = vmatprep.subr.mxu0 0.0
  %3238 = vmatpush1.msra.mxu0 0.0
  %3239 = vmatprep.subr.mxu0 0.0
  %3240 = vmatpush1.msra.mxu0 0.0
  %3241 = vmatprep.subr.mxu0 0.0
  %3242 = vmatpush1.msra.mxu0 0.0
  %3243 = vmatprep.subr.mxu0 0.0
  %3244 = vmatpush1.msra.mxu0 0.0
  %3245 = vmatprep.subr.mxu0 0.0
  %3246 = vmatpush1.msra.mxu0 0.0
  %3247 = vmatprep.subr.mxu0 0.0
  %3248 = vmatpush1.msra.mxu0 0.0
  %3249 = vmatprep.subr.mxu0 0.0
  %3250 = vmatpush1.msra.mxu0 0.0
  %3251 = vmatprep.mubr.f32.mxu0 0.0
  %3252 = vmatmul.mubr.f32.gmra.mrb[0].mxu0 %v3185
  %v3253 = vpop.f32.mrb[0].mxu0
  %v3254 = vadd.f32 %v3182, %v3253
  %v3255 = vpop.f32.mrb[0].mxu0
  %3256 = vdwg.mxu0
  %v3257 = vld [vmem:[%s11] sm:$0x1]
  %v3259 = vlaneseq
  %v3260 = vshrl.u32 %v3259, 7
  %v3261 = vsub.s32 0, %v3260
  %v3262 = vrot.slane %v3257, %v3261
  %v3264 = vadd.f32 %v3254, %v3262
  %v3265 = vxor.u32 %v3264, 2147483648
  %v3266 = vmul.f32 %v3265, 1.442695
  %v3267 = vpow.pop %v3266
  %v3268 = vadd.f32 %v3267, 1.0
  %v3269 = vrcp.pop %v3268
  %v3270 = vmul.f32 1.0, %v3269
  %v3271 = vtanh.pop %v3264
  %3273 = vrot.lane.b32.xlu0 %v3271, 64
  %v3274 = vpop.permute.xlu0 %3273
  %v3276 = vmul.f32 %v3270, %v3274
  %v3277 = vtanh.pop %v3276
  %3279 = vrot.lane.b32.xlu0 %v3277, 96
  %v3280 = vpop.permute.xlu0 %3279
  %v3282 = vmul.f32 %v3270, %v3280
  %v3283 = vld [vmem:[%s12] sm:$0xff]
  %v3284 = vld [vmem:[%s12 + $0x8] sm:$0xff]
  %v3285 = vld [vmem:[%s12 + $0x10] sm:$0xff]
  %v3286 = vld [vmem:[%s12 + $0x18] sm:$0xff]
  %v3287 = vld [vmem:[%s12 + $0x20] sm:$0xff]
  %v3288 = vld [vmem:[%s12 + $0x28] sm:$0xff]
  %v3289 = vld [vmem:[%s12 + $0x30] sm:$0xff]
  %v3290 = vld [vmem:[%s12 + $0x38] sm:$0xff]
  %3292 = vrot.lane.b32.xlu0 %v3282, 32
  %v3293 = vpop.permute.xlu0 %3292
  %v3294 = vsel %vm333, %v3293, 0
  %3296 = vmatprep.subr.mxu0 0.0
  %3297 = vmatpush1.msra.mxu0 %v3287
  %3298 = vmatprep.subr.mxu0 0.0
  %3299 = vmatpush1.msra.mxu0 %v3288
  %3300 = vmatprep.subr.mxu0 0.0
  %3301 = vmatpush1.msra.mxu0 %v3289
  %3302 = vmatprep.subr.mxu0 0.0
  %3303 = vmatpush1.msra.mxu0 %v3290
  %3304 = vmatprep.subr.mxu0 0.0
  %3305 = vmatpush1.msra.mxu0 0.0
  %3306 = vmatprep.subr.mxu0 0.0
  %3307 = vmatpush1.msra.mxu0 0.0
  %3308 = vmatprep.subr.mxu0 0.0
  %3309 = vmatpush1.msra.mxu0 0.0
  %3310 = vmatprep.subr.mxu0 0.0
  %3311 = vmatpush1.msra.mxu0 0.0
  %3312 = vmatprep.subr.mxu0 0.0
  %3313 = vmatpush1.msra.mxu0 0.0
  %3314 = vmatprep.subr.mxu0 0.0
  %3315 = vmatpush1.msra.mxu0 0.0
  %3316 = vmatprep.subr.mxu0 0.0
  %3317 = vmatpush1.msra.mxu0 0.0
  %3318 = vmatprep.subr.mxu0 0.0
  %3319 = vmatpush1.msra.mxu0 0.0
  %3320 = vmatprep.subr.mxu0 0.0
  %3321 = vmatpush1.msra.mxu0 0.0
  %3322 = vmatprep.subr.mxu0 0.0
  %3323 = vmatpush1.msra.mxu0 0.0
  %3324 = vmatprep.subr.mxu0 0.0
  %3325 = vmatpush1.msra.mxu0 0.0
  %3326 = vmatprep.subr.mxu0 0.0
  %3327 = vmatpush1.msra.mxu0 0.0
  %3328 = vmatprep.subr.mxu0 0.0
  %3329 = vmatpush1.msra.mxu0 0.0
  %3330 = vmatprep.subr.mxu0 0.0
  %3331 = vmatpush1.msra.mxu0 0.0
  %3332 = vmatprep.subr.mxu0 0.0
  %3333 = vmatpush1.msra.mxu0 0.0
  %3334 = vmatprep.subr.mxu0 0.0
  %3335 = vmatpush1.msra.mxu0 0.0
  %3336 = vmatprep.subr.mxu0 0.0
  %3337 = vmatpush1.msra.mxu0 0.0
  %3338 = vmatprep.subr.mxu0 0.0
  %3339 = vmatpush1.msra.mxu0 0.0
  %3340 = vmatprep.subr.mxu0 0.0
  %3341 = vmatpush1.msra.mxu0 0.0
  %3342 = vmatprep.subr.mxu0 0.0
  %3343 = vmatpush1.msra.mxu0 0.0
  %3344 = vmatprep.subr.mxu0 0.0
  %3345 = vmatpush1.msra.mxu0 0.0
  %3346 = vmatprep.subr.mxu0 0.0
  %3347 = vmatpush1.msra.mxu0 0.0
  %3348 = vmatprep.subr.mxu0 0.0
  %3349 = vmatpush1.msra.mxu0 0.0
  %3350 = vmatprep.subr.mxu0 0.0
  %3351 = vmatpush1.msra.mxu0 0.0
  %3352 = vmatprep.subr.mxu0 0.0
  %3353 = vmatpush1.msra.mxu0 0.0
  %3354 = vmatprep.subr.mxu0 0.0
  %3355 = vmatpush1.msra.mxu0 0.0
  %3356 = vmatprep.subr.mxu0 0.0
  %3357 = vmatpush1.msra.mxu0 0.0
  %3358 = vmatprep.subr.mxu0 0.0
  %3359 = vmatpush1.msra.mxu0 0.0
  %3360 = vmatprep.mubr.f32.mxu0 0.0
  %3361 = vmatmul.mubr.f32.gmra.mrb[0].mxu0 %v3294
  %v3362 = vpop.f32.mrb[0].mxu0
  %v3363 = vadd.f32 0.0, %v3362
  %v3364 = vpop.f32.mrb[0].mxu0
  %3365 = vdwg.mxu0
  %3367 = vrot.lane.b32.xlu0 %v3102, 32
  %v3368 = vpop.permute.xlu0 %3367
  %v3369 = vsel %vm333, %v3368, 0
  %3371 = vmatprep.subr.mxu0 0.0
  %3372 = vmatpush1.msra.mxu0 %v3283
  %3373 = vmatprep.subr.mxu0 0.0
  %3374 = vmatpush1.msra.mxu0 %v3284
  %3375 = vmatprep.subr.mxu0 0.0
  %3376 = vmatpush1.msra.mxu0 %v3285
  %3377 = vmatprep.subr.mxu0 0.0
  %3378 = vmatpush1.msra.mxu0 %v3286
  %3379 = vmatprep.subr.mxu0 0.0
  %3380 = vmatpush1.msra.mxu0 0.0
  %3381 = vmatprep.subr.mxu0 0.0
  %3382 = vmatpush1.msra.mxu0 0.0
  %3383 = vmatprep.subr.mxu0 0.0
  %3384 = vmatpush1.msra.mxu0 0.0
  %3385 = vmatprep.subr.mxu0 0.0
  %3386 = vmatpush1.msra.mxu0 0.0
  %3387 = vmatprep.subr.mxu0 0.0
  %3388 = vmatpush1.msra.mxu0 0.0
  %3389 = vmatprep.subr.mxu0 0.0
  %3390 = vmatpush1.msra.mxu0 0.0
  %3391 = vmatprep.subr.mxu0 0.0
  %3392 = vmatpush1.msra.mxu0 0.0
  %3393 = vmatprep.subr.mxu0 0.0
  %3394 = vmatpush1.msra.mxu0 0.0
  %3395 = vmatprep.subr.mxu0 0.0
  %3396 = vmatpush1.msra.mxu0 0.0
  %3397 = vmatprep.subr.mxu0 0.0
  %3398 = vmatpush1.msra.mxu0 0.0
  %3399 = vmatprep.subr.mxu0 0.0
  %3400 = vmatpush1.msra.mxu0 0.0
  %3401 = vmatprep.subr.mxu0 0.0
  %3402 = vmatpush1.msra.mxu0 0.0
  %3403 = vmatprep.subr.mxu0 0.0
  %3404 = vmatpush1.msra.mxu0 0.0
  %3405 = vmatprep.subr.mxu0 0.0
  %3406 = vmatpush1.msra.mxu0 0.0
  %3407 = vmatprep.subr.mxu0 0.0
  %3408 = vmatpush1.msra.mxu0 0.0
  %3409 = vmatprep.subr.mxu0 0.0
  %3410 = vmatpush1.msra.mxu0 0.0
  %3411 = vmatprep.subr.mxu0 0.0
  %3412 = vmatpush1.msra.mxu0 0.0
  %3413 = vmatprep.subr.mxu0 0.0
  %3414 = vmatpush1.msra.mxu0 0.0
  %3415 = vmatprep.subr.mxu0 0.0
  %3416 = vmatpush1.msra.mxu0 0.0
  %3417 = vmatprep.subr.mxu0 0.0
  %3418 = vmatpush1.msra.mxu0 0.0
  %3419 = vmatprep.subr.mxu0 0.0
  %3420 = vmatpush1.msra.mxu0 0.0
  %3421 = vmatprep.subr.mxu0 0.0
  %3422 = vmatpush1.msra.mxu0 0.0
  %3423 = vmatprep.subr.mxu0 0.0
  %3424 = vmatpush1.msra.mxu0 0.0
  %3425 = vmatprep.subr.mxu0 0.0
  %3426 = vmatpush1.msra.mxu0 0.0
  %3427 = vmatprep.subr.mxu0 0.0
  %3428 = vmatpush1.msra.mxu0 0.0
  %3429 = vmatprep.subr.mxu0 0.0
  %3430 = vmatpush1.msra.mxu0 0.0
  %3431 = vmatprep.subr.mxu0 0.0
  %3432 = vmatpush1.msra.mxu0 0.0
  %3433 = vmatprep.subr.mxu0 0.0
  %3434 = vmatpush1.msra.mxu0 0.0
  %3435 = vmatprep.mubr.f32.mxu0 0.0
  %3436 = vmatmul.mubr.f32.gmra.mrb[0].mxu0 %v3369
  %v3437 = vpop.f32.mrb[0].mxu0
  %v3438 = vadd.f32 %v3363, %v3437
  %v3439 = vpop.f32.mrb[0].mxu0
  %3440 = vdwg.mxu0
  %v3441 = vld [vmem:[%s13] sm:$0x1]
  %v3443 = vlaneseq
  %v3444 = vshrl.u32 %v3443, 7
  %v3445 = vsub.s32 0, %v3444
  %v3446 = vrot.slane %v3441, %v3445
  %v3448 = vadd.f32 %v3438, %v3446
  %3449 = vst [vmem:[%s14] sm:$0xff] %v3448
  // Predicated region
  $region58: #{bilstm_forward.1} parent=0 // pred_check
    _
  $region59: #{bilstm_forward.1} parent=0 // pred_check_branch
    %3451 = sbr.rel (0) target = $region61
  $region60: #{bilstm_forward.1} parent=0 // pred_region
    _
  $region61: #{bilstm_forward.1} parent=0 // pred_fallthru
    _
  // Predicated region
  $region62: #{bilstm_forward.1} parent=0 // pred_check
    _
  $region63: #{bilstm_forward.1} parent=0 // pred_check_branch
    %3453 = sbr.rel (0) target = $region65
  $region64: #{bilstm_forward.1} parent=0 // pred_region
    _
  $region65: #{bilstm_forward.1} parent=0 // pred_fallthru
    _

</llo_original>
